<compile_context>
chip_gen: v6e
topology: v6e:2x2x1
jax: 0.10.0
libtpu: 0.0.40
codegen_flags: <defaults>
</compile_context>

<pallas_src>
import functools

import jax
import jax.numpy as jnp
from jax import lax
from jax.experimental import pallas as pl
from jax.experimental.pallas import tpu as pltpu


EMOTIONS = ["anger", "disgust", "fear", "joy", "neutrality", "sadness", "surprise"]
NUM_LABELS = len(EMOTIONS)
LANE = 128  # lane-dense padding for the classifier output


# ----------------------------------------------------------------------------- kernel

def _fused_camembert_kernel(
    emb_ref, mask_ref, emb_ln_g_ref, emb_ln_b_ref,
    qkv_w_ref, qkv_b_ref,
    ao_w_ref, ao_b_ref, a_ln_g_ref, a_ln_b_ref,
    fi_w_ref, fi_b_ref, fo_w_ref, fo_b_ref, f_ln_g_ref, f_ln_b_ref,
    pool_w_ref, pool_b_ref, cls_w_ref, cls_b_ref,
    out_ref,
    *, num_layers, num_heads, head_dim, batch, seq, eps, scale):
    hidden = num_heads * head_dim
    rows = batch * seq

    def bf16(t):
        return t.astype(jnp.bfloat16)

    def layernorm(x, g, b):
        mean = jnp.mean(x, axis=-1, keepdims=True)
        c = x - mean
        var = jnp.mean(c * c, axis=-1, keepdims=True)
        return c * lax.rsqrt(var + eps) * g + b

    # additive mask loaded once, hoisted out of all loops  [B, S, S]
    mask = mask_ref[...]

    # embedding layernorm (embeddings themselves are gathered in JAX glue)
    x = layernorm(emb_ref[...], emb_ln_g_ref[...], emb_ln_b_ref[...])   # [rows, H] f32

    for l in range(num_layers):                      # static unroll: 2 layers
        # ----- self-attention: single fused QKV matmul (bf16 MXU, f32 acc) -----
        qkv = (jnp.dot(bf16(x), qkv_w_ref[l], preferred_element_type=jnp.float32)
               + qkv_b_ref[l])                       # [rows, 3H] f32
        w_o = ao_w_ref[l]                            # [H, H] f32 (sliced per head below)

        attn = jnp.zeros((rows, hidden), jnp.float32)
        for h in range(num_heads):                   # static unroll: 4 heads
            lo = h * head_dim
            q_h = bf16(qkv[:, lo:lo + head_dim]).reshape(batch, seq, head_dim)
            k_h = bf16(qkv[:, hidden + lo:hidden + lo + head_dim]
                       ).reshape(batch, seq, head_dim)
            v_h = bf16(qkv[:, 2 * hidden + lo:2 * hidden + lo + head_dim]
                       ).reshape(batch, seq, head_dim)

            s = jnp.einsum("bqd,bkd->bqk", q_h, k_h,
                           preferred_element_type=jnp.float32) * scale + mask
            s = s - jnp.max(s, axis=-1, keepdims=True)
            p = jnp.exp(s)
            # divide -> EUP reciprocal (separate VLIW slot)
            p = p * pl.reciprocal(jnp.sum(p, axis=-1, keepdims=True), approx=True)

            ctx = jnp.einsum("bqk,bkd->bqd", bf16(p), v_h,
                             preferred_element_type=jnp.float32)     # [B, S, dh]
            # head-merge fused into the output projection: attn += ctx_h @ W_o[h]
            attn = attn + jnp.dot(bf16(ctx.reshape(rows, head_dim)),
                                  bf16(w_o[lo:lo + head_dim, :]),
                                  preferred_element_type=jnp.float32)
        attn = attn + ao_b_ref[l]
        # residual + layernorm fused behind the projection
        x = layernorm(x + attn, a_ln_g_ref[l], a_ln_b_ref[l])

        # ----- FFN: matmul + GELU + matmul + residual + LN, all fused -----
        hmid = (jnp.dot(bf16(x), fi_w_ref[l], preferred_element_type=jnp.float32)
                + fi_b_ref[l])                       # [rows, I]
        # TODO(synk): HF CamemBERT uses erf-GELU; tanh-approx kept (EUP-friendly, known to lower).
        hmid = 0.5 * hmid * (1.0 + jnp.tanh(
            0.7978845608028654 * (hmid + 0.044715 * hmid * hmid * hmid)))
        ffn = (jnp.dot(bf16(hmid), fo_w_ref[l], preferred_element_type=jnp.float32)
               + fo_b_ref[l])
        x = layernorm(x + ffn, f_ln_g_ref[l], f_ln_b_ref[l])

    # ----- pooler + classifier applied to every row (CLS rows picked in JAX) -----
    # Doing all 16 rows avoids an in-kernel row gather and keeps the single output
    # a fully lane-dense [rows, 128] slab; extra rows are negligible work.
    pooled = jnp.tanh(jnp.dot(bf16(x), pool_w_ref[...],
                              preferred_element_type=jnp.float32) + pool_b_ref[...])
    out_ref[...] = (jnp.dot(bf16(pooled), cls_w_ref[...],
                            preferred_element_type=jnp.float32) + cls_b_ref[...])


# ----------------------------------------------------------------------------- params

def make_config():
    # Small synthetic CamemBERT config (same structure as CamembertConfig, scaled down).
    return dict(
        vocab_size=64,
        hidden_size=32,
        num_hidden_layers=2,
        num_attention_heads=4,
        intermediate_size=64,
        max_position_embeddings=32,
        type_vocab_size=1,
        pad_token_id=1,
        layer_norm_eps=1e-12,
    )


def init_params(key, cfg):
    H = cfg["hidden_size"]
    I = cfg["intermediate_size"]
    L = cfg["num_hidden_layers"]
    ks = jax.random.split(key, 10)
    n = lambda k, shape: 0.02 * jax.random.normal(k, shape, jnp.float32)
    return {
        "word_emb": n(ks[0], (cfg["vocab_size"], H)),
        "pos_emb": n(ks[1], (cfg["max_position_embeddings"], H)),
        "type_emb": n(ks[2], (cfg["type_vocab_size"], H)),
        "emb_ln_g": jnp.ones((H,), jnp.float32),
        "emb_ln_b": jnp.zeros((H,), jnp.float32),
        # Q|K|V weights concatenated along the output dim (mathematically identical
        # to three separate nn.Linear layers).
        "qkv_w": n(ks[3], (L, H, 3 * H)),
        "qkv_b": jnp.zeros((L, 3 * H), jnp.float32),
        "attn_out_w": n(ks[4], (L, H, H)),
        "attn_out_b": jnp.zeros((L, H), jnp.float32),
        "attn_ln_g": jnp.ones((L, H), jnp.float32),
        "attn_ln_b": jnp.zeros((L, H), jnp.float32),
        "ffn_in_w": n(ks[5], (L, H, I)),
        "ffn_in_b": jnp.zeros((L, I), jnp.float32),
        "ffn_out_w": n(ks[6], (L, I, H)),
        "ffn_out_b": jnp.zeros((L, H), jnp.float32),
        "ffn_ln_g": jnp.ones((L, H), jnp.float32),
        "ffn_ln_b": jnp.zeros((L, H), jnp.float32),
        "pooler_w": n(ks[7], (H, H)),
        "pooler_b": jnp.zeros((H,), jnp.float32),
        "cls_w": n(ks[8], (H, NUM_LABELS)),
        "cls_b": jnp.zeros((NUM_LABELS,), jnp.float32),
    }


# ----------------------------------------------------------------------------- forward

def _bce_with_logits(x, y):
    # numerically-stable BCEWithLogits, mean-reduced; 14 elements -> plain JAX
    return jnp.mean(jnp.maximum(x, 0.0) - x * y + jnp.log1p(jnp.exp(-jnp.abs(x))))


def camembert_emotion_forward(params, cfg, input_ids, attention_mask=None, labels=None):
    B, S = input_ids.shape
    H = cfg["hidden_size"]
    I = cfg["intermediate_size"]
    L = cfg["num_hidden_layers"]
    nh = cfg["num_attention_heads"]
    dh = H // nh
    pad = cfg["pad_token_id"]
    eps = cfg["layer_norm_eps"]
    M = B * S

    if attention_mask is None:
        attention_mask = jnp.ones((B, S), jnp.float32)
    attention_mask = attention_mask.astype(jnp.float32)

    # --- embeddings (gathers are JAX glue) ---
    not_pad = (input_ids != pad).astype(jnp.int32)
    position_ids = jnp.cumsum(not_pad, axis=1) * not_pad + pad    # RoBERTa-style positions
    token_type_ids = jnp.zeros((B, S), jnp.int32)
    emb = (jnp.take(params["word_emb"], input_ids, axis=0)
           + jnp.take(params["pos_emb"], position_ids, axis=0)
           + jnp.take(params["type_emb"], token_type_ids, axis=0)).reshape(M, H)

    # additive attention mask, pre-broadcast once to [B, S, S]
    add_mask = (1.0 - attention_mask) * -1e9
    mask3 = jnp.broadcast_to(add_mask[:, None, :], (B, S, S))

    # classifier padded to a lane-dense 128-wide output (extra columns are zero)
    cls_w = jnp.zeros((H, LANE), jnp.float32).at[:, :NUM_LABELS].set(params["cls_w"])
    cls_b = jnp.zeros((1, LANE), jnp.float32).at[0, :NUM_LABELS].set(params["cls_b"])

    bf = lambda t: t.astype(jnp.bfloat16)   # bf16 MXU operands, f32 accumulation

    operands = (
        emb, mask3,
        params["emb_ln_g"].reshape(1, H), params["emb_ln_b"].reshape(1, H),
        bf(params["qkv_w"]), params["qkv_b"].reshape(L, 1, 3 * H),
        params["attn_out_w"], params["attn_out_b"].reshape(L, 1, H),
        params["attn_ln_g"].reshape(L, 1, H), params["attn_ln_b"].reshape(L, 1, H),
        bf(params["ffn_in_w"]), params["ffn_in_b"].reshape(L, 1, I),
        bf(params["ffn_out_w"]), params["ffn_out_b"].reshape(L, 1, H),
        params["ffn_ln_g"].reshape(L, 1, H), params["ffn_ln_b"].reshape(L, 1, H),
        bf(params["pooler_w"]), params["pooler_b"].reshape(1, H),
        bf(cls_w), cls_b,
    )

    def full_spec(shape):
        return pl.BlockSpec(shape, lambda i, _n=len(shape): (0,) * _n)

    kernel = functools.partial(
        _fused_camembert_kernel,
        num_layers=L, num_heads=nh, head_dim=dh, batch=B, seq=S,
        eps=eps, scale=1.0 / (dh ** 0.5))

    logits_all = pl.pallas_call(
        kernel,
        out_shape=jax.ShapeDtypeStruct((M, LANE), jnp.float32),
        grid=(1,),
        in_specs=[full_spec(op.shape) for op in operands],
        out_specs=pl.BlockSpec((M, LANE), lambda i: (0, 0)),
        compiler_params=pltpu.CompilerParams(dimension_semantics=("arbitrary",)),
    )(*operands)

    # CLS-row and label-column selection stays outside the kernel (sub-128-lane slice)
    logits = logits_all.reshape(B, S, LANE)[:, 0, :NUM_LABELS]    # [B, NUM_LABELS]

    # nn.Dropout in eval mode is identity (hidden_dropout_prob only applies in training)
    outputs = (logits,)
    if labels is not None:
        loss = _bce_with_logits(logits, labels.astype(jnp.float32))
        outputs = (loss,) + outputs
    return outputs


# ----------------------------------------------------------------------------- main

if __name__ == "__main__":
    cfg = make_config()
    root = jax.random.PRNGKey(0)
    k_params, k_ids, k_labels = jax.random.split(root, 3)

    params = init_params(k_params, cfg)

    B, S = 2, 8
    input_ids = jax.random.randint(k_ids, (B, S), 5, cfg["vocab_size"], dtype=jnp.int32)
    attention_mask = jnp.ones((B, S), jnp.float32)
    labels = (jax.random.uniform(k_labels, (B, NUM_LABELS)) > 0.5).astype(jnp.float32)

    # prediction path (no labels): returns (logits,)
    (logits,) = camembert_emotion_forward(params, cfg, input_ids, attention_mask)
    logits = jax.block_until_ready(logits)
    assert logits.shape == (B, NUM_LABELS)
    assert bool(jnp.all(jnp.isfinite(logits)))

    # training path (with labels): returns (loss, logits)
    loss, logits2 = camembert_emotion_forward(params, cfg, input_ids, attention_mask, labels)
    loss = jax.block_until_ready(loss)
    assert bool(jnp.isfinite(loss))

    print("KERNEL_OK")
</pallas_src>

<mosaic_0001>
module attributes {stable_mosaic.version = 11 : i64} {
  func.func @_fused_camembert_kernel(%arg0: i32, %arg1: memref<16x32xf32, #tpu.memory_space<vmem>>, %arg2: memref<2x8x8xf32, #tpu.memory_space<vmem>>, %arg3: memref<1x32xf32, #tpu.memory_space<vmem>>, %arg4: memref<1x32xf32, #tpu.memory_space<vmem>>, %arg5: memref<2x32x96xbf16, #tpu.memory_space<vmem>>, %arg6: memref<2x1x96xf32, #tpu.memory_space<vmem>>, %arg7: memref<2x32x32xf32, #tpu.memory_space<vmem>>, %arg8: memref<2x1x32xf32, #tpu.memory_space<vmem>>, %arg9: memref<2x1x32xf32, #tpu.memory_space<vmem>>, %arg10: memref<2x1x32xf32, #tpu.memory_space<vmem>>, %arg11: memref<2x32x64xbf16, #tpu.memory_space<vmem>>, %arg12: memref<2x1x64xf32, #tpu.memory_space<vmem>>, %arg13: memref<2x64x32xbf16, #tpu.memory_space<vmem>>, %arg14: memref<2x1x32xf32, #tpu.memory_space<vmem>>, %arg15: memref<2x1x32xf32, #tpu.memory_space<vmem>>, %arg16: memref<2x1x32xf32, #tpu.memory_space<vmem>>, %arg17: memref<32x32xbf16, #tpu.memory_space<vmem>>, %arg18: memref<1x32xf32, #tpu.memory_space<vmem>>, %arg19: memref<32x128xbf16, #tpu.memory_space<vmem>>, %arg20: memref<1x128xf32, #tpu.memory_space<vmem>>, %arg21: memref<16x128xf32, #tpu.memory_space<vmem>>) attributes {dimension_semantics = [#tpu.dimension_semantics<arbitrary>], iteration_bounds = array<i64: 1>, scalar_prefetch = 0 : i64, scratch_operands = 0 : i64, tpu.core_type = #tpu.core_type<tc>, window_params = [{pipeline_mode = #tpu.pipeline_mode<synchronous>, transform_indices = @transform_0, window_bounds = array<i64: 16, 32>}, {pipeline_mode = #tpu.pipeline_mode<synchronous>, transform_indices = @transform_1, window_bounds = array<i64: 2, 8, 8>}, {pipeline_mode = #tpu.pipeline_mode<synchronous>, transform_indices = @transform_2, window_bounds = array<i64: 1, 32>}, {pipeline_mode = #tpu.pipeline_mode<synchronous>, transform_indices = @transform_3, window_bounds = array<i64: 1, 32>}, {pipeline_mode = #tpu.pipeline_mode<synchronous>, transform_indices = @transform_4, window_bounds = array<i64: 2, 32, 96>}, {pipeline_mode = #tpu.pipeline_mode<synchronous>, transform_indices = @transform_5, window_bounds = array<i64: 2, 1, 96>}, {pipeline_mode = #tpu.pipeline_mode<synchronous>, transform_indices = @transform_6, window_bounds = array<i64: 2, 32, 32>}, {pipeline_mode = #tpu.pipeline_mode<synchronous>, transform_indices = @transform_7, window_bounds = array<i64: 2, 1, 32>}, {pipeline_mode = #tpu.pipeline_mode<synchronous>, transform_indices = @transform_8, window_bounds = array<i64: 2, 1, 32>}, {pipeline_mode = #tpu.pipeline_mode<synchronous>, transform_indices = @transform_9, window_bounds = array<i64: 2, 1, 32>}, {pipeline_mode = #tpu.pipeline_mode<synchronous>, transform_indices = @transform_10, window_bounds = array<i64: 2, 32, 64>}, {pipeline_mode = #tpu.pipeline_mode<synchronous>, transform_indices = @transform_11, window_bounds = array<i64: 2, 1, 64>}, {pipeline_mode = #tpu.pipeline_mode<synchronous>, transform_indices = @transform_12, window_bounds = array<i64: 2, 64, 32>}, {pipeline_mode = #tpu.pipeline_mode<synchronous>, transform_indices = @transform_13, window_bounds = array<i64: 2, 1, 32>}, {pipeline_mode = #tpu.pipeline_mode<synchronous>, transform_indices = @transform_14, window_bounds = array<i64: 2, 1, 32>}, {pipeline_mode = #tpu.pipeline_mode<synchronous>, transform_indices = @transform_15, window_bounds = array<i64: 2, 1, 32>}, {pipeline_mode = #tpu.pipeline_mode<synchronous>, transform_indices = @transform_16, window_bounds = array<i64: 32, 32>}, {pipeline_mode = #tpu.pipeline_mode<synchronous>, transform_indices = @transform_17, window_bounds = array<i64: 1, 32>}, {pipeline_mode = #tpu.pipeline_mode<synchronous>, transform_indices = @transform_18, window_bounds = array<i64: 32, 128>}, {pipeline_mode = #tpu.pipeline_mode<synchronous>, transform_indices = @transform_19, window_bounds = array<i64: 1, 128>}, {pipeline_mode = #tpu.pipeline_mode<synchronous>, transform_indices = @transform_20, window_bounds = array<i64: 16, 128>}]} {
    %c0 = arith.constant 0 : index
    %c0_0 = arith.constant 0 : index
    %c0_1 = arith.constant 0 : index
    %0 = vector.load %arg2[%c0, %c0_0, %c0_1] : memref<2x8x8xf32, #tpu.memory_space<vmem>>, vector<2x8x8xf32>
    %c0_2 = arith.constant 0 : index
    %c0_3 = arith.constant 0 : index
    %1 = vector.load %arg1[%c0_2, %c0_3] : memref<16x32xf32, #tpu.memory_space<vmem>>, vector<16x32xf32>
    %c0_4 = arith.constant 0 : index
    %c0_5 = arith.constant 0 : index
    %2 = vector.load %arg3[%c0_4, %c0_5] : memref<1x32xf32, #tpu.memory_space<vmem>>, vector<1x32xf32>
    %c0_6 = arith.constant 0 : index
    %c0_7 = arith.constant 0 : index
    %3 = vector.load %arg4[%c0_6, %c0_7] : memref<1x32xf32, #tpu.memory_space<vmem>>, vector<1x32xf32>
    %cst = arith.constant dense<0.000000e+00> : vector<16xf32>
    %4 = vector.multi_reduction <add>, %1, %cst [1] : vector<16x32xf32> to vector<16xf32>
    %5 = vector.shape_cast %4 : vector<16xf32> to vector<16x1xf32>
    %cst_8 = arith.constant 3.200000e+01 : f32
    %6 = vector.broadcast %cst_8 : f32 to vector<16x1xf32>
    %7 = arith.divf %5, %6 : vector<16x1xf32>
    %8 = vector.broadcast %7 : vector<16x1xf32> to vector<16x32xf32>
    %9 = arith.subf %1, %8 : vector<16x32xf32>
    %10 = arith.mulf %9, %9 : vector<16x32xf32>
    %cst_9 = arith.constant dense<0.000000e+00> : vector<16xf32>
    %11 = vector.multi_reduction <add>, %10, %cst_9 [1] : vector<16x32xf32> to vector<16xf32>
    %12 = vector.shape_cast %11 : vector<16xf32> to vector<16x1xf32>
    %cst_10 = arith.constant 3.200000e+01 : f32
    %13 = vector.broadcast %cst_10 : f32 to vector<16x1xf32>
    %14 = arith.divf %12, %13 : vector<16x1xf32>
    %cst_11 = arith.constant 9.99999996E-13 : f32
    %15 = vector.broadcast %cst_11 : f32 to vector<16x1xf32>
    %16 = arith.addf %14, %15 : vector<16x1xf32>
    %17 = math.rsqrt %16 : vector<16x1xf32>
    %18 = vector.broadcast %17 : vector<16x1xf32> to vector<16x32xf32>
    %19 = arith.mulf %9, %18 : vector<16x32xf32>
    %20 = vector.broadcast %2 : vector<1x32xf32> to vector<16x32xf32>
    %21 = arith.mulf %19, %20 : vector<16x32xf32>
    %22 = vector.broadcast %3 : vector<1x32xf32> to vector<16x32xf32>
    %23 = arith.addf %21, %22 : vector<16x32xf32>
    %24 = arith.truncf %23 : vector<16x32xf32> to vector<16x32xbf16>
    %c0_12 = arith.constant 0 : index
    %c0_13 = arith.constant 0 : index
    %c0_14 = arith.constant 0 : index
    %25 = vector.load %arg5[%c0_12, %c0_13, %c0_14] : memref<2x32x96xbf16, #tpu.memory_space<vmem>>, vector<1x32x96xbf16>
    %26 = vector.shape_cast %25 : vector<1x32x96xbf16> to vector<32x96xbf16>
    %cst_15 = arith.constant dense<0.000000e+00> : vector<16x96xf32>
    %27 = tpu.matmul %24, %26, %cst_15 {dimension_numbers = #tpu.dot_dimension_numbers<[1], [0], [0], [1], [0, 0, 1, 1], [], []>} : vector<16x32xbf16>, vector<32x96xbf16>, vector<16x96xf32> -> vector<16x96xf32>
    %c0_16 = arith.constant 0 : index
    %c0_17 = arith.constant 0 : index
    %c0_18 = arith.constant 0 : index
    %28 = vector.load %arg6[%c0_16, %c0_17, %c0_18] : memref<2x1x96xf32, #tpu.memory_space<vmem>>, vector<1x1x96xf32>
    %29 = vector.shape_cast %28 : vector<1x1x96xf32> to vector<1x96xf32>
    %30 = vector.broadcast %29 : vector<1x96xf32> to vector<16x96xf32>
    %31 = arith.addf %27, %30 : vector<16x96xf32>
    %c0_19 = arith.constant 0 : index
    %c0_20 = arith.constant 0 : index
    %c0_21 = arith.constant 0 : index
    %32 = vector.load %arg7[%c0_19, %c0_20, %c0_21] : memref<2x32x32xf32, #tpu.memory_space<vmem>>, vector<1x32x32xf32>
    %33 = vector.shape_cast %32 : vector<1x32x32xf32> to vector<32x32xf32>
    %cst_22 = arith.constant 0.000000e+00 : f32
    %34 = vector.broadcast %cst_22 : f32 to vector<16x32xf32>
    %35 = vector.extract_strided_slice %31 {offsets = [0, 0], sizes = [16, 8], strides = [1, 1]} : vector<16x96xf32> to vector<16x8xf32>
    %36 = arith.truncf %35 : vector<16x8xf32> to vector<16x8xbf16>
    %37 = vector.shape_cast %36 : vector<16x8xbf16> to vector<2x8x8xbf16>
    %38 = vector.extract_strided_slice %31 {offsets = [0, 32], sizes = [16, 8], strides = [1, 1]} : vector<16x96xf32> to vector<16x8xf32>
    %39 = arith.truncf %38 : vector<16x8xf32> to vector<16x8xbf16>
    %40 = vector.shape_cast %39 : vector<16x8xbf16> to vector<2x8x8xbf16>
    %41 = vector.extract_strided_slice %31 {offsets = [0, 64], sizes = [16, 8], strides = [1, 1]} : vector<16x96xf32> to vector<16x8xf32>
    %42 = arith.truncf %41 : vector<16x8xf32> to vector<16x8xbf16>
    %43 = vector.shape_cast %42 : vector<16x8xbf16> to vector<2x8x8xbf16>
    "tpu.trace_start"() <{level = 10 : i32, message = "bqd,bkd->bqk"}> : () -> ()
    %cst_23 = arith.constant dense<0.000000e+00> : vector<2x8x8xf32>
    %44 = tpu.matmul %37, %40, %cst_23 {dimension_numbers = #tpu.dot_dimension_numbers<[2], [2], [1], [1], [0, 0, 0, 1, 1, 1], [0], [0]>} : vector<2x8x8xbf16>, vector<2x8x8xbf16>, vector<2x8x8xf32> -> vector<2x8x8xf32>
    "tpu.trace_stop"() : () -> ()
    %cst_24 = arith.constant 0.353553385 : f32
    %45 = vector.broadcast %cst_24 : f32 to vector<2x8x8xf32>
    %46 = arith.mulf %44, %45 : vector<2x8x8xf32>
    %47 = arith.addf %46, %0 : vector<2x8x8xf32>
    %cst_25 = arith.constant dense<0xFF800000> : vector<2x8xf32>
    %48 = vector.multi_reduction <maximumf>, %47, %cst_25 [2] : vector<2x8x8xf32> to vector<2x8xf32>
    %49 = vector.shape_cast %48 : vector<2x8xf32> to vector<2x8x1xf32>
    %50 = vector.broadcast %49 : vector<2x8x1xf32> to vector<2x8x8xf32>
    %51 = arith.subf %47, %50 : vector<2x8x8xf32>
    %52 = math.exp %51 : vector<2x8x8xf32>
    %cst_26 = arith.constant dense<0.000000e+00> : vector<2x8xf32>
    %53 = vector.multi_reduction <add>, %52, %cst_26 [2] : vector<2x8x8xf32> to vector<2x8xf32>
    %54 = vector.shape_cast %53 : vector<2x8xf32> to vector<2x8x1xf32>
    %55 = tpu.reciprocal %54 {approx = true} : vector<2x8x1xf32> -> vector<2x8x1xf32>
    %56 = vector.broadcast %55 : vector<2x8x1xf32> to vector<2x8x8xf32>
    %57 = arith.mulf %52, %56 : vector<2x8x8xf32>
    %58 = arith.truncf %57 : vector<2x8x8xf32> to vector<2x8x8xbf16>
    "tpu.trace_start"() <{level = 10 : i32, message = "bqk,bkd->bqd"}> : () -> ()
    %cst_27 = arith.constant dense<0.000000e+00> : vector<2x8x8xf32>
    %59 = tpu.matmul %58, %43, %cst_27 {dimension_numbers = #tpu.dot_dimension_numbers<[2], [1], [1], [2], [0, 0, 0, 1, 1, 2], [0], [0]>} : vector<2x8x8xbf16>, vector<2x8x8xbf16>, vector<2x8x8xf32> -> vector<2x8x8xf32>
    "tpu.trace_stop"() : () -> ()
    %60 = vector.shape_cast %59 : vector<2x8x8xf32> to vector<16x8xf32>
    %61 = arith.truncf %60 : vector<16x8xf32> to vector<16x8xbf16>
    %62 = vector.extract_strided_slice %33 {offsets = [0, 0], sizes = [8, 32], strides = [1, 1]} : vector<32x32xf32> to vector<8x32xf32>
    %63 = arith.truncf %62 : vector<8x32xf32> to vector<8x32xbf16>
    %cst_28 = arith.constant dense<0.000000e+00> : vector<16x32xf32>
    %64 = tpu.matmul %61, %63, %cst_28 {dimension_numbers = #tpu.dot_dimension_numbers<[1], [0], [0], [1], [0, 0, 1, 1], [], []>} : vector<16x8xbf16>, vector<8x32xbf16>, vector<16x32xf32> -> vector<16x32xf32>
    %65 = arith.addf %34, %64 : vector<16x32xf32>
    %66 = vector.extract_strided_slice %31 {offsets = [0, 8], sizes = [16, 8], strides = [1, 1]} : vector<16x96xf32> to vector<16x8xf32>
    %67 = arith.truncf %66 : vector<16x8xf32> to vector<16x8xbf16>
    %68 = vector.shape_cast %67 : vector<16x8xbf16> to vector<2x8x8xbf16>
    %69 = vector.extract_strided_slice %31 {offsets = [0, 40], sizes = [16, 8], strides = [1, 1]} : vector<16x96xf32> to vector<16x8xf32>
    %70 = arith.truncf %69 : vector<16x8xf32> to vector<16x8xbf16>
    %71 = vector.shape_cast %70 : vector<16x8xbf16> to vector<2x8x8xbf16>
    %72 = vector.extract_strided_slice %31 {offsets = [0, 72], sizes = [16, 8], strides = [1, 1]} : vector<16x96xf32> to vector<16x8xf32>
    %73 = arith.truncf %72 : vector<16x8xf32> to vector<16x8xbf16>
    %74 = vector.shape_cast %73 : vector<16x8xbf16> to vector<2x8x8xbf16>
    "tpu.trace_start"() <{level = 10 : i32, message = "bqd,bkd->bqk"}> : () -> ()
    %cst_29 = arith.constant dense<0.000000e+00> : vector<2x8x8xf32>
    %75 = tpu.matmul %68, %71, %cst_29 {dimension_numbers = #tpu.dot_dimension_numbers<[2], [2], [1], [1], [0, 0, 0, 1, 1, 1], [0], [0]>} : vector<2x8x8xbf16>, vector<2x8x8xbf16>, vector<2x8x8xf32> -> vector<2x8x8xf32>
    "tpu.trace_stop"() : () -> ()
    %cst_30 = arith.constant 0.353553385 : f32
    %76 = vector.broadcast %cst_30 : f32 to vector<2x8x8xf32>
    %77 = arith.mulf %75, %76 : vector<2x8x8xf32>
    %78 = arith.addf %77, %0 : vector<2x8x8xf32>
    %cst_31 = arith.constant dense<0xFF800000> : vector<2x8xf32>
    %79 = vector.multi_reduction <maximumf>, %78, %cst_31 [2] : vector<2x8x8xf32> to vector<2x8xf32>
    %80 = vector.shape_cast %79 : vector<2x8xf32> to vector<2x8x1xf32>
    %81 = vector.broadcast %80 : vector<2x8x1xf32> to vector<2x8x8xf32>
    %82 = arith.subf %78, %81 : vector<2x8x8xf32>
    %83 = math.exp %82 : vector<2x8x8xf32>
    %cst_32 = arith.constant dense<0.000000e+00> : vector<2x8xf32>
    %84 = vector.multi_reduction <add>, %83, %cst_32 [2] : vector<2x8x8xf32> to vector<2x8xf32>
    %85 = vector.shape_cast %84 : vector<2x8xf32> to vector<2x8x1xf32>
    %86 = tpu.reciprocal %85 {approx = true} : vector<2x8x1xf32> -> vector<2x8x1xf32>
    %87 = vector.broadcast %86 : vector<2x8x1xf32> to vector<2x8x8xf32>
    %88 = arith.mulf %83, %87 : vector<2x8x8xf32>
    %89 = arith.truncf %88 : vector<2x8x8xf32> to vector<2x8x8xbf16>
    "tpu.trace_start"() <{level = 10 : i32, message = "bqk,bkd->bqd"}> : () -> ()
    %cst_33 = arith.constant dense<0.000000e+00> : vector<2x8x8xf32>
    %90 = tpu.matmul %89, %74, %cst_33 {dimension_numbers = #tpu.dot_dimension_numbers<[2], [1], [1], [2], [0, 0, 0, 1, 1, 2], [0], [0]>} : vector<2x8x8xbf16>, vector<2x8x8xbf16>, vector<2x8x8xf32> -> vector<2x8x8xf32>
    "tpu.trace_stop"() : () -> ()
    %91 = vector.shape_cast %90 : vector<2x8x8xf32> to vector<16x8xf32>
    %92 = arith.truncf %91 : vector<16x8xf32> to vector<16x8xbf16>
    %93 = vector.extract_strided_slice %33 {offsets = [8, 0], sizes = [8, 32], strides = [1, 1]} : vector<32x32xf32> to vector<8x32xf32>
    %94 = arith.truncf %93 : vector<8x32xf32> to vector<8x32xbf16>
    %cst_34 = arith.constant dense<0.000000e+00> : vector<16x32xf32>
    %95 = tpu.matmul %92, %94, %cst_34 {dimension_numbers = #tpu.dot_dimension_numbers<[1], [0], [0], [1], [0, 0, 1, 1], [], []>} : vector<16x8xbf16>, vector<8x32xbf16>, vector<16x32xf32> -> vector<16x32xf32>
    %96 = arith.addf %65, %95 : vector<16x32xf32>
    %97 = vector.extract_strided_slice %31 {offsets = [0, 16], sizes = [16, 8], strides = [1, 1]} : vector<16x96xf32> to vector<16x8xf32>
    %98 = arith.truncf %97 : vector<16x8xf32> to vector<16x8xbf16>
    %99 = vector.shape_cast %98 : vector<16x8xbf16> to vector<2x8x8xbf16>
    %100 = vector.extract_strided_slice %31 {offsets = [0, 48], sizes = [16, 8], strides = [1, 1]} : vector<16x96xf32> to vector<16x8xf32>
    %101 = arith.truncf %100 : vector<16x8xf32> to vector<16x8xbf16>
    %102 = vector.shape_cast %101 : vector<16x8xbf16> to vector<2x8x8xbf16>
    %103 = vector.extract_strided_slice %31 {offsets = [0, 80], sizes = [16, 8], strides = [1, 1]} : vector<16x96xf32> to vector<16x8xf32>
    %104 = arith.truncf %103 : vector<16x8xf32> to vector<16x8xbf16>
    %105 = vector.shape_cast %104 : vector<16x8xbf16> to vector<2x8x8xbf16>
    "tpu.trace_start"() <{level = 10 : i32, message = "bqd,bkd->bqk"}> : () -> ()
    %cst_35 = arith.constant dense<0.000000e+00> : vector<2x8x8xf32>
    %106 = tpu.matmul %99, %102, %cst_35 {dimension_numbers = #tpu.dot_dimension_numbers<[2], [2], [1], [1], [0, 0, 0, 1, 1, 1], [0], [0]>} : vector<2x8x8xbf16>, vector<2x8x8xbf16>, vector<2x8x8xf32> -> vector<2x8x8xf32>
    "tpu.trace_stop"() : () -> ()
    %cst_36 = arith.constant 0.353553385 : f32
    %107 = vector.broadcast %cst_36 : f32 to vector<2x8x8xf32>
    %108 = arith.mulf %106, %107 : vector<2x8x8xf32>
    %109 = arith.addf %108, %0 : vector<2x8x8xf32>
    %cst_37 = arith.constant dense<0xFF800000> : vector<2x8xf32>
    %110 = vector.multi_reduction <maximumf>, %109, %cst_37 [2] : vector<2x8x8xf32> to vector<2x8xf32>
    %111 = vector.shape_cast %110 : vector<2x8xf32> to vector<2x8x1xf32>
    %112 = vector.broadcast %111 : vector<2x8x1xf32> to vector<2x8x8xf32>
    %113 = arith.subf %109, %112 : vector<2x8x8xf32>
    %114 = math.exp %113 : vector<2x8x8xf32>
    %cst_38 = arith.constant dense<0.000000e+00> : vector<2x8xf32>
    %115 = vector.multi_reduction <add>, %114, %cst_38 [2] : vector<2x8x8xf32> to vector<2x8xf32>
    %116 = vector.shape_cast %115 : vector<2x8xf32> to vector<2x8x1xf32>
    %117 = tpu.reciprocal %116 {approx = true} : vector<2x8x1xf32> -> vector<2x8x1xf32>
    %118 = vector.broadcast %117 : vector<2x8x1xf32> to vector<2x8x8xf32>
    %119 = arith.mulf %114, %118 : vector<2x8x8xf32>
    %120 = arith.truncf %119 : vector<2x8x8xf32> to vector<2x8x8xbf16>
    "tpu.trace_start"() <{level = 10 : i32, message = "bqk,bkd->bqd"}> : () -> ()
    %cst_39 = arith.constant dense<0.000000e+00> : vector<2x8x8xf32>
    %121 = tpu.matmul %120, %105, %cst_39 {dimension_numbers = #tpu.dot_dimension_numbers<[2], [1], [1], [2], [0, 0, 0, 1, 1, 2], [0], [0]>} : vector<2x8x8xbf16>, vector<2x8x8xbf16>, vector<2x8x8xf32> -> vector<2x8x8xf32>
    "tpu.trace_stop"() : () -> ()
    %122 = vector.shape_cast %121 : vector<2x8x8xf32> to vector<16x8xf32>
    %123 = arith.truncf %122 : vector<16x8xf32> to vector<16x8xbf16>
    %124 = vector.extract_strided_slice %33 {offsets = [16, 0], sizes = [8, 32], strides = [1, 1]} : vector<32x32xf32> to vector<8x32xf32>
    %125 = arith.truncf %124 : vector<8x32xf32> to vector<8x32xbf16>
    %cst_40 = arith.constant dense<0.000000e+00> : vector<16x32xf32>
    %126 = tpu.matmul %123, %125, %cst_40 {dimension_numbers = #tpu.dot_dimension_numbers<[1], [0], [0], [1], [0, 0, 1, 1], [], []>} : vector<16x8xbf16>, vector<8x32xbf16>, vector<16x32xf32> -> vector<16x32xf32>
    %127 = arith.addf %96, %126 : vector<16x32xf32>
    %128 = vector.extract_strided_slice %31 {offsets = [0, 24], sizes = [16, 8], strides = [1, 1]} : vector<16x96xf32> to vector<16x8xf32>
    %129 = arith.truncf %128 : vector<16x8xf32> to vector<16x8xbf16>
    %130 = vector.shape_cast %129 : vector<16x8xbf16> to vector<2x8x8xbf16>
    %131 = vector.extract_strided_slice %31 {offsets = [0, 56], sizes = [16, 8], strides = [1, 1]} : vector<16x96xf32> to vector<16x8xf32>
    %132 = arith.truncf %131 : vector<16x8xf32> to vector<16x8xbf16>
    %133 = vector.shape_cast %132 : vector<16x8xbf16> to vector<2x8x8xbf16>
    %134 = vector.extract_strided_slice %31 {offsets = [0, 88], sizes = [16, 8], strides = [1, 1]} : vector<16x96xf32> to vector<16x8xf32>
    %135 = arith.truncf %134 : vector<16x8xf32> to vector<16x8xbf16>
    %136 = vector.shape_cast %135 : vector<16x8xbf16> to vector<2x8x8xbf16>
    "tpu.trace_start"() <{level = 10 : i32, message = "bqd,bkd->bqk"}> : () -> ()
    %cst_41 = arith.constant dense<0.000000e+00> : vector<2x8x8xf32>
    %137 = tpu.matmul %130, %133, %cst_41 {dimension_numbers = #tpu.dot_dimension_numbers<[2], [2], [1], [1], [0, 0, 0, 1, 1, 1], [0], [0]>} : vector<2x8x8xbf16>, vector<2x8x8xbf16>, vector<2x8x8xf32> -> vector<2x8x8xf32>
    "tpu.trace_stop"() : () -> ()
    %cst_42 = arith.constant 0.353553385 : f32
    %138 = vector.broadcast %cst_42 : f32 to vector<2x8x8xf32>
    %139 = arith.mulf %137, %138 : vector<2x8x8xf32>
    %140 = arith.addf %139, %0 : vector<2x8x8xf32>
    %cst_43 = arith.constant dense<0xFF800000> : vector<2x8xf32>
    %141 = vector.multi_reduction <maximumf>, %140, %cst_43 [2] : vector<2x8x8xf32> to vector<2x8xf32>
    %142 = vector.shape_cast %141 : vector<2x8xf32> to vector<2x8x1xf32>
    %143 = vector.broadcast %142 : vector<2x8x1xf32> to vector<2x8x8xf32>
    %144 = arith.subf %140, %143 : vector<2x8x8xf32>
    %145 = math.exp %144 : vector<2x8x8xf32>
    %cst_44 = arith.constant dense<0.000000e+00> : vector<2x8xf32>
    %146 = vector.multi_reduction <add>, %145, %cst_44 [2] : vector<2x8x8xf32> to vector<2x8xf32>
    %147 = vector.shape_cast %146 : vector<2x8xf32> to vector<2x8x1xf32>
    %148 = tpu.reciprocal %147 {approx = true} : vector<2x8x1xf32> -> vector<2x8x1xf32>
    %149 = vector.broadcast %148 : vector<2x8x1xf32> to vector<2x8x8xf32>
    %150 = arith.mulf %145, %149 : vector<2x8x8xf32>
    %151 = arith.truncf %150 : vector<2x8x8xf32> to vector<2x8x8xbf16>
    "tpu.trace_start"() <{level = 10 : i32, message = "bqk,bkd->bqd"}> : () -> ()
    %cst_45 = arith.constant dense<0.000000e+00> : vector<2x8x8xf32>
    %152 = tpu.matmul %151, %136, %cst_45 {dimension_numbers = #tpu.dot_dimension_numbers<[2], [1], [1], [2], [0, 0, 0, 1, 1, 2], [0], [0]>} : vector<2x8x8xbf16>, vector<2x8x8xbf16>, vector<2x8x8xf32> -> vector<2x8x8xf32>
    "tpu.trace_stop"() : () -> ()
    %153 = vector.shape_cast %152 : vector<2x8x8xf32> to vector<16x8xf32>
    %154 = arith.truncf %153 : vector<16x8xf32> to vector<16x8xbf16>
    %155 = vector.extract_strided_slice %33 {offsets = [24, 0], sizes = [8, 32], strides = [1, 1]} : vector<32x32xf32> to vector<8x32xf32>
    %156 = arith.truncf %155 : vector<8x32xf32> to vector<8x32xbf16>
    %cst_46 = arith.constant dense<0.000000e+00> : vector<16x32xf32>
    %157 = tpu.matmul %154, %156, %cst_46 {dimension_numbers = #tpu.dot_dimension_numbers<[1], [0], [0], [1], [0, 0, 1, 1], [], []>} : vector<16x8xbf16>, vector<8x32xbf16>, vector<16x32xf32> -> vector<16x32xf32>
    %158 = arith.addf %127, %157 : vector<16x32xf32>
    %c0_47 = arith.constant 0 : index
    %c0_48 = arith.constant 0 : index
    %c0_49 = arith.constant 0 : index
    %159 = vector.load %arg8[%c0_47, %c0_48, %c0_49] : memref<2x1x32xf32, #tpu.memory_space<vmem>>, vector<1x1x32xf32>
    %160 = vector.shape_cast %159 : vector<1x1x32xf32> to vector<1x32xf32>
    %161 = vector.broadcast %160 : vector<1x32xf32> to vector<16x32xf32>
    %162 = arith.addf %158, %161 : vector<16x32xf32>
    %163 = arith.addf %23, %162 : vector<16x32xf32>
    %c0_50 = arith.constant 0 : index
    %c0_51 = arith.constant 0 : index
    %c0_52 = arith.constant 0 : index
    %164 = vector.load %arg9[%c0_50, %c0_51, %c0_52] : memref<2x1x32xf32, #tpu.memory_space<vmem>>, vector<1x1x32xf32>
    %165 = vector.shape_cast %164 : vector<1x1x32xf32> to vector<1x32xf32>
    %c0_53 = arith.constant 0 : index
    %c0_54 = arith.constant 0 : index
    %c0_55 = arith.constant 0 : index
    %166 = vector.load %arg10[%c0_53, %c0_54, %c0_55] : memref<2x1x32xf32, #tpu.memory_space<vmem>>, vector<1x1x32xf32>
    %167 = vector.shape_cast %166 : vector<1x1x32xf32> to vector<1x32xf32>
    %cst_56 = arith.constant dense<0.000000e+00> : vector<16xf32>
    %168 = vector.multi_reduction <add>, %163, %cst_56 [1] : vector<16x32xf32> to vector<16xf32>
    %169 = vector.shape_cast %168 : vector<16xf32> to vector<16x1xf32>
    %cst_57 = arith.constant 3.200000e+01 : f32
    %170 = vector.broadcast %cst_57 : f32 to vector<16x1xf32>
    %171 = arith.divf %169, %170 : vector<16x1xf32>
    %172 = vector.broadcast %171 : vector<16x1xf32> to vector<16x32xf32>
    %173 = arith.subf %163, %172 : vector<16x32xf32>
    %174 = arith.mulf %173, %173 : vector<16x32xf32>
    %cst_58 = arith.constant dense<0.000000e+00> : vector<16xf32>
    %175 = vector.multi_reduction <add>, %174, %cst_58 [1] : vector<16x32xf32> to vector<16xf32>
    %176 = vector.shape_cast %175 : vector<16xf32> to vector<16x1xf32>
    %cst_59 = arith.constant 3.200000e+01 : f32
    %177 = vector.broadcast %cst_59 : f32 to vector<16x1xf32>
    %178 = arith.divf %176, %177 : vector<16x1xf32>
    %cst_60 = arith.constant 9.99999996E-13 : f32
    %179 = vector.broadcast %cst_60 : f32 to vector<16x1xf32>
    %180 = arith.addf %178, %179 : vector<16x1xf32>
    %181 = math.rsqrt %180 : vector<16x1xf32>
    %182 = vector.broadcast %181 : vector<16x1xf32> to vector<16x32xf32>
    %183 = arith.mulf %173, %182 : vector<16x32xf32>
    %184 = vector.broadcast %165 : vector<1x32xf32> to vector<16x32xf32>
    %185 = arith.mulf %183, %184 : vector<16x32xf32>
    %186 = vector.broadcast %167 : vector<1x32xf32> to vector<16x32xf32>
    %187 = arith.addf %185, %186 : vector<16x32xf32>
    %188 = arith.truncf %187 : vector<16x32xf32> to vector<16x32xbf16>
    %c0_61 = arith.constant 0 : index
    %c0_62 = arith.constant 0 : index
    %c0_63 = arith.constant 0 : index
    %189 = vector.load %arg11[%c0_61, %c0_62, %c0_63] : memref<2x32x64xbf16, #tpu.memory_space<vmem>>, vector<1x32x64xbf16>
    %190 = vector.shape_cast %189 : vector<1x32x64xbf16> to vector<32x64xbf16>
    %cst_64 = arith.constant dense<0.000000e+00> : vector<16x64xf32>
    %191 = tpu.matmul %188, %190, %cst_64 {dimension_numbers = #tpu.dot_dimension_numbers<[1], [0], [0], [1], [0, 0, 1, 1], [], []>} : vector<16x32xbf16>, vector<32x64xbf16>, vector<16x64xf32> -> vector<16x64xf32>
    %c0_65 = arith.constant 0 : index
    %c0_66 = arith.constant 0 : index
    %c0_67 = arith.constant 0 : index
    %192 = vector.load %arg12[%c0_65, %c0_66, %c0_67] : memref<2x1x64xf32, #tpu.memory_space<vmem>>, vector<1x1x64xf32>
    %193 = vector.shape_cast %192 : vector<1x1x64xf32> to vector<1x64xf32>
    %194 = vector.broadcast %193 : vector<1x64xf32> to vector<16x64xf32>
    %195 = arith.addf %191, %194 : vector<16x64xf32>
    %cst_68 = arith.constant 5.000000e-01 : f32
    %196 = vector.broadcast %cst_68 : f32 to vector<16x64xf32>
    %197 = arith.mulf %196, %195 : vector<16x64xf32>
    %cst_69 = arith.constant 4.471500e-02 : f32
    %198 = vector.broadcast %cst_69 : f32 to vector<16x64xf32>
    %199 = arith.mulf %198, %195 : vector<16x64xf32>
    %200 = arith.mulf %199, %195 : vector<16x64xf32>
    %201 = arith.mulf %200, %195 : vector<16x64xf32>
    %202 = arith.addf %195, %201 : vector<16x64xf32>
    %cst_70 = arith.constant 0.797884583 : f32
    %203 = vector.broadcast %cst_70 : f32 to vector<16x64xf32>
    %204 = arith.mulf %203, %202 : vector<16x64xf32>
    %205 = math.tanh %204 : vector<16x64xf32>
    %cst_71 = arith.constant 1.000000e+00 : f32
    %206 = vector.broadcast %cst_71 : f32 to vector<16x64xf32>
    %207 = arith.addf %206, %205 : vector<16x64xf32>
    %208 = arith.mulf %197, %207 : vector<16x64xf32>
    %209 = arith.truncf %208 : vector<16x64xf32> to vector<16x64xbf16>
    %c0_72 = arith.constant 0 : index
    %c0_73 = arith.constant 0 : index
    %c0_74 = arith.constant 0 : index
    %210 = vector.load %arg13[%c0_72, %c0_73, %c0_74] : memref<2x64x32xbf16, #tpu.memory_space<vmem>>, vector<1x64x32xbf16>
    %211 = vector.shape_cast %210 : vector<1x64x32xbf16> to vector<64x32xbf16>
    %cst_75 = arith.constant dense<0.000000e+00> : vector<16x32xf32>
    %212 = tpu.matmul %209, %211, %cst_75 {dimension_numbers = #tpu.dot_dimension_numbers<[1], [0], [0], [1], [0, 0, 1, 1], [], []>} : vector<16x64xbf16>, vector<64x32xbf16>, vector<16x32xf32> -> vector<16x32xf32>
    %c0_76 = arith.constant 0 : index
    %c0_77 = arith.constant 0 : index
    %c0_78 = arith.constant 0 : index
    %213 = vector.load %arg14[%c0_76, %c0_77, %c0_78] : memref<2x1x32xf32, #tpu.memory_space<vmem>>, vector<1x1x32xf32>
    %214 = vector.shape_cast %213 : vector<1x1x32xf32> to vector<1x32xf32>
    %215 = vector.broadcast %214 : vector<1x32xf32> to vector<16x32xf32>
    %216 = arith.addf %212, %215 : vector<16x32xf32>
    %217 = arith.addf %187, %216 : vector<16x32xf32>
    %c0_79 = arith.constant 0 : index
    %c0_80 = arith.constant 0 : index
    %c0_81 = arith.constant 0 : index
    %218 = vector.load %arg15[%c0_79, %c0_80, %c0_81] : memref<2x1x32xf32, #tpu.memory_space<vmem>>, vector<1x1x32xf32>
    %219 = vector.shape_cast %218 : vector<1x1x32xf32> to vector<1x32xf32>
    %c0_82 = arith.constant 0 : index
    %c0_83 = arith.constant 0 : index
    %c0_84 = arith.constant 0 : index
    %220 = vector.load %arg16[%c0_82, %c0_83, %c0_84] : memref<2x1x32xf32, #tpu.memory_space<vmem>>, vector<1x1x32xf32>
    %221 = vector.shape_cast %220 : vector<1x1x32xf32> to vector<1x32xf32>
    %cst_85 = arith.constant dense<0.000000e+00> : vector<16xf32>
    %222 = vector.multi_reduction <add>, %217, %cst_85 [1] : vector<16x32xf32> to vector<16xf32>
    %223 = vector.shape_cast %222 : vector<16xf32> to vector<16x1xf32>
    %cst_86 = arith.constant 3.200000e+01 : f32
    %224 = vector.broadcast %cst_86 : f32 to vector<16x1xf32>
    %225 = arith.divf %223, %224 : vector<16x1xf32>
    %226 = vector.broadcast %225 : vector<16x1xf32> to vector<16x32xf32>
    %227 = arith.subf %217, %226 : vector<16x32xf32>
    %228 = arith.mulf %227, %227 : vector<16x32xf32>
    %cst_87 = arith.constant dense<0.000000e+00> : vector<16xf32>
    %229 = vector.multi_reduction <add>, %228, %cst_87 [1] : vector<16x32xf32> to vector<16xf32>
    %230 = vector.shape_cast %229 : vector<16xf32> to vector<16x1xf32>
    %cst_88 = arith.constant 3.200000e+01 : f32
    %231 = vector.broadcast %cst_88 : f32 to vector<16x1xf32>
    %232 = arith.divf %230, %231 : vector<16x1xf32>
    %cst_89 = arith.constant 9.99999996E-13 : f32
    %233 = vector.broadcast %cst_89 : f32 to vector<16x1xf32>
    %234 = arith.addf %232, %233 : vector<16x1xf32>
    %235 = math.rsqrt %234 : vector<16x1xf32>
    %236 = vector.broadcast %235 : vector<16x1xf32> to vector<16x32xf32>
    %237 = arith.mulf %227, %236 : vector<16x32xf32>
    %238 = vector.broadcast %219 : vector<1x32xf32> to vector<16x32xf32>
    %239 = arith.mulf %237, %238 : vector<16x32xf32>
    %240 = vector.broadcast %221 : vector<1x32xf32> to vector<16x32xf32>
    %241 = arith.addf %239, %240 : vector<16x32xf32>
    %242 = arith.truncf %241 : vector<16x32xf32> to vector<16x32xbf16>
    %c1 = arith.constant 1 : index
    %c0_90 = arith.constant 0 : index
    %c0_91 = arith.constant 0 : index
    %243 = vector.load %arg5[%c1, %c0_90, %c0_91] : memref<2x32x96xbf16, #tpu.memory_space<vmem>>, vector<1x32x96xbf16>
    %244 = vector.shape_cast %243 : vector<1x32x96xbf16> to vector<32x96xbf16>
    %cst_92 = arith.constant dense<0.000000e+00> : vector<16x96xf32>
    %245 = tpu.matmul %242, %244, %cst_92 {dimension_numbers = #tpu.dot_dimension_numbers<[1], [0], [0], [1], [0, 0, 1, 1], [], []>} : vector<16x32xbf16>, vector<32x96xbf16>, vector<16x96xf32> -> vector<16x96xf32>
    %c1_93 = arith.constant 1 : index
    %c0_94 = arith.constant 0 : index
    %c0_95 = arith.constant 0 : index
    %246 = vector.load %arg6[%c1_93, %c0_94, %c0_95] : memref<2x1x96xf32, #tpu.memory_space<vmem>>, vector<1x1x96xf32>
    %247 = vector.shape_cast %246 : vector<1x1x96xf32> to vector<1x96xf32>
    %248 = vector.broadcast %247 : vector<1x96xf32> to vector<16x96xf32>
    %249 = arith.addf %245, %248 : vector<16x96xf32>
    %c1_96 = arith.constant 1 : index
    %c0_97 = arith.constant 0 : index
    %c0_98 = arith.constant 0 : index
    %250 = vector.load %arg7[%c1_96, %c0_97, %c0_98] : memref<2x32x32xf32, #tpu.memory_space<vmem>>, vector<1x32x32xf32>
    %251 = vector.shape_cast %250 : vector<1x32x32xf32> to vector<32x32xf32>
    %cst_99 = arith.constant 0.000000e+00 : f32
    %252 = vector.broadcast %cst_99 : f32 to vector<16x32xf32>
    %253 = vector.extract_strided_slice %249 {offsets = [0, 0], sizes = [16, 8], strides = [1, 1]} : vector<16x96xf32> to vector<16x8xf32>
    %254 = arith.truncf %253 : vector<16x8xf32> to vector<16x8xbf16>
    %255 = vector.shape_cast %254 : vector<16x8xbf16> to vector<2x8x8xbf16>
    %256 = vector.extract_strided_slice %249 {offsets = [0, 32], sizes = [16, 8], strides = [1, 1]} : vector<16x96xf32> to vector<16x8xf32>
    %257 = arith.truncf %256 : vector<16x8xf32> to vector<16x8xbf16>
    %258 = vector.shape_cast %257 : vector<16x8xbf16> to vector<2x8x8xbf16>
    %259 = vector.extract_strided_slice %249 {offsets = [0, 64], sizes = [16, 8], strides = [1, 1]} : vector<16x96xf32> to vector<16x8xf32>
    %260 = arith.truncf %259 : vector<16x8xf32> to vector<16x8xbf16>
    %261 = vector.shape_cast %260 : vector<16x8xbf16> to vector<2x8x8xbf16>
    "tpu.trace_start"() <{level = 10 : i32, message = "bqd,bkd->bqk"}> : () -> ()
    %cst_100 = arith.constant dense<0.000000e+00> : vector<2x8x8xf32>
    %262 = tpu.matmul %255, %258, %cst_100 {dimension_numbers = #tpu.dot_dimension_numbers<[2], [2], [1], [1], [0, 0, 0, 1, 1, 1], [0], [0]>} : vector<2x8x8xbf16>, vector<2x8x8xbf16>, vector<2x8x8xf32> -> vector<2x8x8xf32>
    "tpu.trace_stop"() : () -> ()
    %cst_101 = arith.constant 0.353553385 : f32
    %263 = vector.broadcast %cst_101 : f32 to vector<2x8x8xf32>
    %264 = arith.mulf %262, %263 : vector<2x8x8xf32>
    %265 = arith.addf %264, %0 : vector<2x8x8xf32>
    %cst_102 = arith.constant dense<0xFF800000> : vector<2x8xf32>
    %266 = vector.multi_reduction <maximumf>, %265, %cst_102 [2] : vector<2x8x8xf32> to vector<2x8xf32>
    %267 = vector.shape_cast %266 : vector<2x8xf32> to vector<2x8x1xf32>
    %268 = vector.broadcast %267 : vector<2x8x1xf32> to vector<2x8x8xf32>
    %269 = arith.subf %265, %268 : vector<2x8x8xf32>
    %270 = math.exp %269 : vector<2x8x8xf32>
    %cst_103 = arith.constant dense<0.000000e+00> : vector<2x8xf32>
    %271 = vector.multi_reduction <add>, %270, %cst_103 [2] : vector<2x8x8xf32> to vector<2x8xf32>
    %272 = vector.shape_cast %271 : vector<2x8xf32> to vector<2x8x1xf32>
    %273 = tpu.reciprocal %272 {approx = true} : vector<2x8x1xf32> -> vector<2x8x1xf32>
    %274 = vector.broadcast %273 : vector<2x8x1xf32> to vector<2x8x8xf32>
    %275 = arith.mulf %270, %274 : vector<2x8x8xf32>
    %276 = arith.truncf %275 : vector<2x8x8xf32> to vector<2x8x8xbf16>
    "tpu.trace_start"() <{level = 10 : i32, message = "bqk,bkd->bqd"}> : () -> ()
    %cst_104 = arith.constant dense<0.000000e+00> : vector<2x8x8xf32>
    %277 = tpu.matmul %276, %261, %cst_104 {dimension_numbers = #tpu.dot_dimension_numbers<[2], [1], [1], [2], [0, 0, 0, 1, 1, 2], [0], [0]>} : vector<2x8x8xbf16>, vector<2x8x8xbf16>, vector<2x8x8xf32> -> vector<2x8x8xf32>
    "tpu.trace_stop"() : () -> ()
    %278 = vector.shape_cast %277 : vector<2x8x8xf32> to vector<16x8xf32>
    %279 = arith.truncf %278 : vector<16x8xf32> to vector<16x8xbf16>
    %280 = vector.extract_strided_slice %251 {offsets = [0, 0], sizes = [8, 32], strides = [1, 1]} : vector<32x32xf32> to vector<8x32xf32>
    %281 = arith.truncf %280 : vector<8x32xf32> to vector<8x32xbf16>
    %cst_105 = arith.constant dense<0.000000e+00> : vector<16x32xf32>
    %282 = tpu.matmul %279, %281, %cst_105 {dimension_numbers = #tpu.dot_dimension_numbers<[1], [0], [0], [1], [0, 0, 1, 1], [], []>} : vector<16x8xbf16>, vector<8x32xbf16>, vector<16x32xf32> -> vector<16x32xf32>
    %283 = arith.addf %252, %282 : vector<16x32xf32>
    %284 = vector.extract_strided_slice %249 {offsets = [0, 8], sizes = [16, 8], strides = [1, 1]} : vector<16x96xf32> to vector<16x8xf32>
    %285 = arith.truncf %284 : vector<16x8xf32> to vector<16x8xbf16>
    %286 = vector.shape_cast %285 : vector<16x8xbf16> to vector<2x8x8xbf16>
    %287 = vector.extract_strided_slice %249 {offsets = [0, 40], sizes = [16, 8], strides = [1, 1]} : vector<16x96xf32> to vector<16x8xf32>
    %288 = arith.truncf %287 : vector<16x8xf32> to vector<16x8xbf16>
    %289 = vector.shape_cast %288 : vector<16x8xbf16> to vector<2x8x8xbf16>
    %290 = vector.extract_strided_slice %249 {offsets = [0, 72], sizes = [16, 8], strides = [1, 1]} : vector<16x96xf32> to vector<16x8xf32>
    %291 = arith.truncf %290 : vector<16x8xf32> to vector<16x8xbf16>
    %292 = vector.shape_cast %291 : vector<16x8xbf16> to vector<2x8x8xbf16>
    "tpu.trace_start"() <{level = 10 : i32, message = "bqd,bkd->bqk"}> : () -> ()
    %cst_106 = arith.constant dense<0.000000e+00> : vector<2x8x8xf32>
    %293 = tpu.matmul %286, %289, %cst_106 {dimension_numbers = #tpu.dot_dimension_numbers<[2], [2], [1], [1], [0, 0, 0, 1, 1, 1], [0], [0]>} : vector<2x8x8xbf16>, vector<2x8x8xbf16>, vector<2x8x8xf32> -> vector<2x8x8xf32>
    "tpu.trace_stop"() : () -> ()
    %cst_107 = arith.constant 0.353553385 : f32
    %294 = vector.broadcast %cst_107 : f32 to vector<2x8x8xf32>
    %295 = arith.mulf %293, %294 : vector<2x8x8xf32>
    %296 = arith.addf %295, %0 : vector<2x8x8xf32>
    %cst_108 = arith.constant dense<0xFF800000> : vector<2x8xf32>
    %297 = vector.multi_reduction <maximumf>, %296, %cst_108 [2] : vector<2x8x8xf32> to vector<2x8xf32>
    %298 = vector.shape_cast %297 : vector<2x8xf32> to vector<2x8x1xf32>
    %299 = vector.broadcast %298 : vector<2x8x1xf32> to vector<2x8x8xf32>
    %300 = arith.subf %296, %299 : vector<2x8x8xf32>
    %301 = math.exp %300 : vector<2x8x8xf32>
    %cst_109 = arith.constant dense<0.000000e+00> : vector<2x8xf32>
    %302 = vector.multi_reduction <add>, %301, %cst_109 [2] : vector<2x8x8xf32> to vector<2x8xf32>
    %303 = vector.shape_cast %302 : vector<2x8xf32> to vector<2x8x1xf32>
    %304 = tpu.reciprocal %303 {approx = true} : vector<2x8x1xf32> -> vector<2x8x1xf32>
    %305 = vector.broadcast %304 : vector<2x8x1xf32> to vector<2x8x8xf32>
    %306 = arith.mulf %301, %305 : vector<2x8x8xf32>
    %307 = arith.truncf %306 : vector<2x8x8xf32> to vector<2x8x8xbf16>
    "tpu.trace_start"() <{level = 10 : i32, message = "bqk,bkd->bqd"}> : () -> ()
    %cst_110 = arith.constant dense<0.000000e+00> : vector<2x8x8xf32>
    %308 = tpu.matmul %307, %292, %cst_110 {dimension_numbers = #tpu.dot_dimension_numbers<[2], [1], [1], [2], [0, 0, 0, 1, 1, 2], [0], [0]>} : vector<2x8x8xbf16>, vector<2x8x8xbf16>, vector<2x8x8xf32> -> vector<2x8x8xf32>
    "tpu.trace_stop"() : () -> ()
    %309 = vector.shape_cast %308 : vector<2x8x8xf32> to vector<16x8xf32>
    %310 = arith.truncf %309 : vector<16x8xf32> to vector<16x8xbf16>
    %311 = vector.extract_strided_slice %251 {offsets = [8, 0], sizes = [8, 32], strides = [1, 1]} : vector<32x32xf32> to vector<8x32xf32>
    %312 = arith.truncf %311 : vector<8x32xf32> to vector<8x32xbf16>
    %cst_111 = arith.constant dense<0.000000e+00> : vector<16x32xf32>
    %313 = tpu.matmul %310, %312, %cst_111 {dimension_numbers = #tpu.dot_dimension_numbers<[1], [0], [0], [1], [0, 0, 1, 1], [], []>} : vector<16x8xbf16>, vector<8x32xbf16>, vector<16x32xf32> -> vector<16x32xf32>
    %314 = arith.addf %283, %313 : vector<16x32xf32>
    %315 = vector.extract_strided_slice %249 {offsets = [0, 16], sizes = [16, 8], strides = [1, 1]} : vector<16x96xf32> to vector<16x8xf32>
    %316 = arith.truncf %315 : vector<16x8xf32> to vector<16x8xbf16>
    %317 = vector.shape_cast %316 : vector<16x8xbf16> to vector<2x8x8xbf16>
    %318 = vector.extract_strided_slice %249 {offsets = [0, 48], sizes = [16, 8], strides = [1, 1]} : vector<16x96xf32> to vector<16x8xf32>
    %319 = arith.truncf %318 : vector<16x8xf32> to vector<16x8xbf16>
    %320 = vector.shape_cast %319 : vector<16x8xbf16> to vector<2x8x8xbf16>
    %321 = vector.extract_strided_slice %249 {offsets = [0, 80], sizes = [16, 8], strides = [1, 1]} : vector<16x96xf32> to vector<16x8xf32>
    %322 = arith.truncf %321 : vector<16x8xf32> to vector<16x8xbf16>
    %323 = vector.shape_cast %322 : vector<16x8xbf16> to vector<2x8x8xbf16>
    "tpu.trace_start"() <{level = 10 : i32, message = "bqd,bkd->bqk"}> : () -> ()
    %cst_112 = arith.constant dense<0.000000e+00> : vector<2x8x8xf32>
    %324 = tpu.matmul %317, %320, %cst_112 {dimension_numbers = #tpu.dot_dimension_numbers<[2], [2], [1], [1], [0, 0, 0, 1, 1, 1], [0], [0]>} : vector<2x8x8xbf16>, vector<2x8x8xbf16>, vector<2x8x8xf32> -> vector<2x8x8xf32>
    "tpu.trace_stop"() : () -> ()
    %cst_113 = arith.constant 0.353553385 : f32
    %325 = vector.broadcast %cst_113 : f32 to vector<2x8x8xf32>
    %326 = arith.mulf %324, %325 : vector<2x8x8xf32>
    %327 = arith.addf %326, %0 : vector<2x8x8xf32>
    %cst_114 = arith.constant dense<0xFF800000> : vector<2x8xf32>
    %328 = vector.multi_reduction <maximumf>, %327, %cst_114 [2] : vector<2x8x8xf32> to vector<2x8xf32>
    %329 = vector.shape_cast %328 : vector<2x8xf32> to vector<2x8x1xf32>
    %330 = vector.broadcast %329 : vector<2x8x1xf32> to vector<2x8x8xf32>
    %331 = arith.subf %327, %330 : vector<2x8x8xf32>
    %332 = math.exp %331 : vector<2x8x8xf32>
    %cst_115 = arith.constant dense<0.000000e+00> : vector<2x8xf32>
    %333 = vector.multi_reduction <add>, %332, %cst_115 [2] : vector<2x8x8xf32> to vector<2x8xf32>
    %334 = vector.shape_cast %333 : vector<2x8xf32> to vector<2x8x1xf32>
    %335 = tpu.reciprocal %334 {approx = true} : vector<2x8x1xf32> -> vector<2x8x1xf32>
    %336 = vector.broadcast %335 : vector<2x8x1xf32> to vector<2x8x8xf32>
    %337 = arith.mulf %332, %336 : vector<2x8x8xf32>
    %338 = arith.truncf %337 : vector<2x8x8xf32> to vector<2x8x8xbf16>
    "tpu.trace_start"() <{level = 10 : i32, message = "bqk,bkd->bqd"}> : () -> ()
    %cst_116 = arith.constant dense<0.000000e+00> : vector<2x8x8xf32>
    %339 = tpu.matmul %338, %323, %cst_116 {dimension_numbers = #tpu.dot_dimension_numbers<[2], [1], [1], [2], [0, 0, 0, 1, 1, 2], [0], [0]>} : vector<2x8x8xbf16>, vector<2x8x8xbf16>, vector<2x8x8xf32> -> vector<2x8x8xf32>
    "tpu.trace_stop"() : () -> ()
    %340 = vector.shape_cast %339 : vector<2x8x8xf32> to vector<16x8xf32>
    %341 = arith.truncf %340 : vector<16x8xf32> to vector<16x8xbf16>
    %342 = vector.extract_strided_slice %251 {offsets = [16, 0], sizes = [8, 32], strides = [1, 1]} : vector<32x32xf32> to vector<8x32xf32>
    %343 = arith.truncf %342 : vector<8x32xf32> to vector<8x32xbf16>
    %cst_117 = arith.constant dense<0.000000e+00> : vector<16x32xf32>
    %344 = tpu.matmul %341, %343, %cst_117 {dimension_numbers = #tpu.dot_dimension_numbers<[1], [0], [0], [1], [0, 0, 1, 1], [], []>} : vector<16x8xbf16>, vector<8x32xbf16>, vector<16x32xf32> -> vector<16x32xf32>
    %345 = arith.addf %314, %344 : vector<16x32xf32>
    %346 = vector.extract_strided_slice %249 {offsets = [0, 24], sizes = [16, 8], strides = [1, 1]} : vector<16x96xf32> to vector<16x8xf32>
    %347 = arith.truncf %346 : vector<16x8xf32> to vector<16x8xbf16>
    %348 = vector.shape_cast %347 : vector<16x8xbf16> to vector<2x8x8xbf16>
    %349 = vector.extract_strided_slice %249 {offsets = [0, 56], sizes = [16, 8], strides = [1, 1]} : vector<16x96xf32> to vector<16x8xf32>
    %350 = arith.truncf %349 : vector<16x8xf32> to vector<16x8xbf16>
    %351 = vector.shape_cast %350 : vector<16x8xbf16> to vector<2x8x8xbf16>
    %352 = vector.extract_strided_slice %249 {offsets = [0, 88], sizes = [16, 8], strides = [1, 1]} : vector<16x96xf32> to vector<16x8xf32>
    %353 = arith.truncf %352 : vector<16x8xf32> to vector<16x8xbf16>
    %354 = vector.shape_cast %353 : vector<16x8xbf16> to vector<2x8x8xbf16>
    "tpu.trace_start"() <{level = 10 : i32, message = "bqd,bkd->bqk"}> : () -> ()
    %cst_118 = arith.constant dense<0.000000e+00> : vector<2x8x8xf32>
    %355 = tpu.matmul %348, %351, %cst_118 {dimension_numbers = #tpu.dot_dimension_numbers<[2], [2], [1], [1], [0, 0, 0, 1, 1, 1], [0], [0]>} : vector<2x8x8xbf16>, vector<2x8x8xbf16>, vector<2x8x8xf32> -> vector<2x8x8xf32>
    "tpu.trace_stop"() : () -> ()
    %cst_119 = arith.constant 0.353553385 : f32
    %356 = vector.broadcast %cst_119 : f32 to vector<2x8x8xf32>
    %357 = arith.mulf %355, %356 : vector<2x8x8xf32>
    %358 = arith.addf %357, %0 : vector<2x8x8xf32>
    %cst_120 = arith.constant dense<0xFF800000> : vector<2x8xf32>
    %359 = vector.multi_reduction <maximumf>, %358, %cst_120 [2] : vector<2x8x8xf32> to vector<2x8xf32>
    %360 = vector.shape_cast %359 : vector<2x8xf32> to vector<2x8x1xf32>
    %361 = vector.broadcast %360 : vector<2x8x1xf32> to vector<2x8x8xf32>
    %362 = arith.subf %358, %361 : vector<2x8x8xf32>
    %363 = math.exp %362 : vector<2x8x8xf32>
    %cst_121 = arith.constant dense<0.000000e+00> : vector<2x8xf32>
    %364 = vector.multi_reduction <add>, %363, %cst_121 [2] : vector<2x8x8xf32> to vector<2x8xf32>
    %365 = vector.shape_cast %364 : vector<2x8xf32> to vector<2x8x1xf32>
    %366 = tpu.reciprocal %365 {approx = true} : vector<2x8x1xf32> -> vector<2x8x1xf32>
    %367 = vector.broadcast %366 : vector<2x8x1xf32> to vector<2x8x8xf32>
    %368 = arith.mulf %363, %367 : vector<2x8x8xf32>
    %369 = arith.truncf %368 : vector<2x8x8xf32> to vector<2x8x8xbf16>
    "tpu.trace_start"() <{level = 10 : i32, message = "bqk,bkd->bqd"}> : () -> ()
    %cst_122 = arith.constant dense<0.000000e+00> : vector<2x8x8xf32>
    %370 = tpu.matmul %369, %354, %cst_122 {dimension_numbers = #tpu.dot_dimension_numbers<[2], [1], [1], [2], [0, 0, 0, 1, 1, 2], [0], [0]>} : vector<2x8x8xbf16>, vector<2x8x8xbf16>, vector<2x8x8xf32> -> vector<2x8x8xf32>
    "tpu.trace_stop"() : () -> ()
    %371 = vector.shape_cast %370 : vector<2x8x8xf32> to vector<16x8xf32>
    %372 = arith.truncf %371 : vector<16x8xf32> to vector<16x8xbf16>
    %373 = vector.extract_strided_slice %251 {offsets = [24, 0], sizes = [8, 32], strides = [1, 1]} : vector<32x32xf32> to vector<8x32xf32>
    %374 = arith.truncf %373 : vector<8x32xf32> to vector<8x32xbf16>
    %cst_123 = arith.constant dense<0.000000e+00> : vector<16x32xf32>
    %375 = tpu.matmul %372, %374, %cst_123 {dimension_numbers = #tpu.dot_dimension_numbers<[1], [0], [0], [1], [0, 0, 1, 1], [], []>} : vector<16x8xbf16>, vector<8x32xbf16>, vector<16x32xf32> -> vector<16x32xf32>
    %376 = arith.addf %345, %375 : vector<16x32xf32>
    %c1_124 = arith.constant 1 : index
    %c0_125 = arith.constant 0 : index
    %c0_126 = arith.constant 0 : index
    %377 = vector.load %arg8[%c1_124, %c0_125, %c0_126] : memref<2x1x32xf32, #tpu.memory_space<vmem>>, vector<1x1x32xf32>
    %378 = vector.shape_cast %377 : vector<1x1x32xf32> to vector<1x32xf32>
    %379 = vector.broadcast %378 : vector<1x32xf32> to vector<16x32xf32>
    %380 = arith.addf %376, %379 : vector<16x32xf32>
    %381 = arith.addf %241, %380 : vector<16x32xf32>
    %c1_127 = arith.constant 1 : index
    %c0_128 = arith.constant 0 : index
    %c0_129 = arith.constant 0 : index
    %382 = vector.load %arg9[%c1_127, %c0_128, %c0_129] : memref<2x1x32xf32, #tpu.memory_space<vmem>>, vector<1x1x32xf32>
    %383 = vector.shape_cast %382 : vector<1x1x32xf32> to vector<1x32xf32>
    %c1_130 = arith.constant 1 : index
    %c0_131 = arith.constant 0 : index
    %c0_132 = arith.constant 0 : index
    %384 = vector.load %arg10[%c1_130, %c0_131, %c0_132] : memref<2x1x32xf32, #tpu.memory_space<vmem>>, vector<1x1x32xf32>
    %385 = vector.shape_cast %384 : vector<1x1x32xf32> to vector<1x32xf32>
    %cst_133 = arith.constant dense<0.000000e+00> : vector<16xf32>
    %386 = vector.multi_reduction <add>, %381, %cst_133 [1] : vector<16x32xf32> to vector<16xf32>
    %387 = vector.shape_cast %386 : vector<16xf32> to vector<16x1xf32>
    %cst_134 = arith.constant 3.200000e+01 : f32
    %388 = vector.broadcast %cst_134 : f32 to vector<16x1xf32>
    %389 = arith.divf %387, %388 : vector<16x1xf32>
    %390 = vector.broadcast %389 : vector<16x1xf32> to vector<16x32xf32>
    %391 = arith.subf %381, %390 : vector<16x32xf32>
    %392 = arith.mulf %391, %391 : vector<16x32xf32>
    %cst_135 = arith.constant dense<0.000000e+00> : vector<16xf32>
    %393 = vector.multi_reduction <add>, %392, %cst_135 [1] : vector<16x32xf32> to vector<16xf32>
    %394 = vector.shape_cast %393 : vector<16xf32> to vector<16x1xf32>
    %cst_136 = arith.constant 3.200000e+01 : f32
    %395 = vector.broadcast %cst_136 : f32 to vector<16x1xf32>
    %396 = arith.divf %394, %395 : vector<16x1xf32>
    %cst_137 = arith.constant 9.99999996E-13 : f32
    %397 = vector.broadcast %cst_137 : f32 to vector<16x1xf32>
    %398 = arith.addf %396, %397 : vector<16x1xf32>
    %399 = math.rsqrt %398 : vector<16x1xf32>
    %400 = vector.broadcast %399 : vector<16x1xf32> to vector<16x32xf32>
    %401 = arith.mulf %391, %400 : vector<16x32xf32>
    %402 = vector.broadcast %383 : vector<1x32xf32> to vector<16x32xf32>
    %403 = arith.mulf %401, %402 : vector<16x32xf32>
    %404 = vector.broadcast %385 : vector<1x32xf32> to vector<16x32xf32>
    %405 = arith.addf %403, %404 : vector<16x32xf32>
    %406 = arith.truncf %405 : vector<16x32xf32> to vector<16x32xbf16>
    %c1_138 = arith.constant 1 : index
    %c0_139 = arith.constant 0 : index
    %c0_140 = arith.constant 0 : index
    %407 = vector.load %arg11[%c1_138, %c0_139, %c0_140] : memref<2x32x64xbf16, #tpu.memory_space<vmem>>, vector<1x32x64xbf16>
    %408 = vector.shape_cast %407 : vector<1x32x64xbf16> to vector<32x64xbf16>
    %cst_141 = arith.constant dense<0.000000e+00> : vector<16x64xf32>
    %409 = tpu.matmul %406, %408, %cst_141 {dimension_numbers = #tpu.dot_dimension_numbers<[1], [0], [0], [1], [0, 0, 1, 1], [], []>} : vector<16x32xbf16>, vector<32x64xbf16>, vector<16x64xf32> -> vector<16x64xf32>
    %c1_142 = arith.constant 1 : index
    %c0_143 = arith.constant 0 : index
    %c0_144 = arith.constant 0 : index
    %410 = vector.load %arg12[%c1_142, %c0_143, %c0_144] : memref<2x1x64xf32, #tpu.memory_space<vmem>>, vector<1x1x64xf32>
    %411 = vector.shape_cast %410 : vector<1x1x64xf32> to vector<1x64xf32>
    %412 = vector.broadcast %411 : vector<1x64xf32> to vector<16x64xf32>
    %413 = arith.addf %409, %412 : vector<16x64xf32>
    %cst_145 = arith.constant 5.000000e-01 : f32
    %414 = vector.broadcast %cst_145 : f32 to vector<16x64xf32>
    %415 = arith.mulf %414, %413 : vector<16x64xf32>
    %cst_146 = arith.constant 4.471500e-02 : f32
    %416 = vector.broadcast %cst_146 : f32 to vector<16x64xf32>
    %417 = arith.mulf %416, %413 : vector<16x64xf32>
    %418 = arith.mulf %417, %413 : vector<16x64xf32>
    %419 = arith.mulf %418, %413 : vector<16x64xf32>
    %420 = arith.addf %413, %419 : vector<16x64xf32>
    %cst_147 = arith.constant 0.797884583 : f32
    %421 = vector.broadcast %cst_147 : f32 to vector<16x64xf32>
    %422 = arith.mulf %421, %420 : vector<16x64xf32>
    %423 = math.tanh %422 : vector<16x64xf32>
    %cst_148 = arith.constant 1.000000e+00 : f32
    %424 = vector.broadcast %cst_148 : f32 to vector<16x64xf32>
    %425 = arith.addf %424, %423 : vector<16x64xf32>
    %426 = arith.mulf %415, %425 : vector<16x64xf32>
    %427 = arith.truncf %426 : vector<16x64xf32> to vector<16x64xbf16>
    %c1_149 = arith.constant 1 : index
    %c0_150 = arith.constant 0 : index
    %c0_151 = arith.constant 0 : index
    %428 = vector.load %arg13[%c1_149, %c0_150, %c0_151] : memref<2x64x32xbf16, #tpu.memory_space<vmem>>, vector<1x64x32xbf16>
    %429 = vector.shape_cast %428 : vector<1x64x32xbf16> to vector<64x32xbf16>
    %cst_152 = arith.constant dense<0.000000e+00> : vector<16x32xf32>
    %430 = tpu.matmul %427, %429, %cst_152 {dimension_numbers = #tpu.dot_dimension_numbers<[1], [0], [0], [1], [0, 0, 1, 1], [], []>} : vector<16x64xbf16>, vector<64x32xbf16>, vector<16x32xf32> -> vector<16x32xf32>
    %c1_153 = arith.constant 1 : index
    %c0_154 = arith.constant 0 : index
    %c0_155 = arith.constant 0 : index
    %431 = vector.load %arg14[%c1_153, %c0_154, %c0_155] : memref<2x1x32xf32, #tpu.memory_space<vmem>>, vector<1x1x32xf32>
    %432 = vector.shape_cast %431 : vector<1x1x32xf32> to vector<1x32xf32>
    %433 = vector.broadcast %432 : vector<1x32xf32> to vector<16x32xf32>
    %434 = arith.addf %430, %433 : vector<16x32xf32>
    %435 = arith.addf %405, %434 : vector<16x32xf32>
    %c1_156 = arith.constant 1 : index
    %c0_157 = arith.constant 0 : index
    %c0_158 = arith.constant 0 : index
    %436 = vector.load %arg15[%c1_156, %c0_157, %c0_158] : memref<2x1x32xf32, #tpu.memory_space<vmem>>, vector<1x1x32xf32>
    %437 = vector.shape_cast %436 : vector<1x1x32xf32> to vector<1x32xf32>
    %c1_159 = arith.constant 1 : index
    %c0_160 = arith.constant 0 : index
    %c0_161 = arith.constant 0 : index
    %438 = vector.load %arg16[%c1_159, %c0_160, %c0_161] : memref<2x1x32xf32, #tpu.memory_space<vmem>>, vector<1x1x32xf32>
    %439 = vector.shape_cast %438 : vector<1x1x32xf32> to vector<1x32xf32>
    %cst_162 = arith.constant dense<0.000000e+00> : vector<16xf32>
    %440 = vector.multi_reduction <add>, %435, %cst_162 [1] : vector<16x32xf32> to vector<16xf32>
    %441 = vector.shape_cast %440 : vector<16xf32> to vector<16x1xf32>
    %cst_163 = arith.constant 3.200000e+01 : f32
    %442 = vector.broadcast %cst_163 : f32 to vector<16x1xf32>
    %443 = arith.divf %441, %442 : vector<16x1xf32>
    %444 = vector.broadcast %443 : vector<16x1xf32> to vector<16x32xf32>
    %445 = arith.subf %435, %444 : vector<16x32xf32>
    %446 = arith.mulf %445, %445 : vector<16x32xf32>
    %cst_164 = arith.constant dense<0.000000e+00> : vector<16xf32>
    %447 = vector.multi_reduction <add>, %446, %cst_164 [1] : vector<16x32xf32> to vector<16xf32>
    %448 = vector.shape_cast %447 : vector<16xf32> to vector<16x1xf32>
    %cst_165 = arith.constant 3.200000e+01 : f32
    %449 = vector.broadcast %cst_165 : f32 to vector<16x1xf32>
    %450 = arith.divf %448, %449 : vector<16x1xf32>
    %cst_166 = arith.constant 9.99999996E-13 : f32
    %451 = vector.broadcast %cst_166 : f32 to vector<16x1xf32>
    %452 = arith.addf %450, %451 : vector<16x1xf32>
    %453 = math.rsqrt %452 : vector<16x1xf32>
    %454 = vector.broadcast %453 : vector<16x1xf32> to vector<16x32xf32>
    %455 = arith.mulf %445, %454 : vector<16x32xf32>
    %456 = vector.broadcast %437 : vector<1x32xf32> to vector<16x32xf32>
    %457 = arith.mulf %455, %456 : vector<16x32xf32>
    %458 = vector.broadcast %439 : vector<1x32xf32> to vector<16x32xf32>
    %459 = arith.addf %457, %458 : vector<16x32xf32>
    %460 = arith.truncf %459 : vector<16x32xf32> to vector<16x32xbf16>
    %c0_167 = arith.constant 0 : index
    %c0_168 = arith.constant 0 : index
    %461 = vector.load %arg17[%c0_167, %c0_168] : memref<32x32xbf16, #tpu.memory_space<vmem>>, vector<32x32xbf16>
    %cst_169 = arith.constant dense<0.000000e+00> : vector<16x32xf32>
    %462 = tpu.matmul %460, %461, %cst_169 {dimension_numbers = #tpu.dot_dimension_numbers<[1], [0], [0], [1], [0, 0, 1, 1], [], []>} : vector<16x32xbf16>, vector<32x32xbf16>, vector<16x32xf32> -> vector<16x32xf32>
    %c0_170 = arith.constant 0 : index
    %c0_171 = arith.constant 0 : index
    %463 = vector.load %arg18[%c0_170, %c0_171] : memref<1x32xf32, #tpu.memory_space<vmem>>, vector<1x32xf32>
    %464 = vector.broadcast %463 : vector<1x32xf32> to vector<16x32xf32>
    %465 = arith.addf %462, %464 : vector<16x32xf32>
    %466 = math.tanh %465 : vector<16x32xf32>
    %467 = arith.truncf %466 : vector<16x32xf32> to vector<16x32xbf16>
    %c0_172 = arith.constant 0 : index
    %c0_173 = arith.constant 0 : index
    %468 = vector.load %arg19[%c0_172, %c0_173] : memref<32x128xbf16, #tpu.memory_space<vmem>>, vector<32x128xbf16>
    %cst_174 = arith.constant dense<0.000000e+00> : vector<16x128xf32>
    %469 = tpu.matmul %467, %468, %cst_174 {dimension_numbers = #tpu.dot_dimension_numbers<[1], [0], [0], [1], [0, 0, 1, 1], [], []>} : vector<16x32xbf16>, vector<32x128xbf16>, vector<16x128xf32> -> vector<16x128xf32>
    %c0_175 = arith.constant 0 : index
    %c0_176 = arith.constant 0 : index
    %470 = vector.load %arg20[%c0_175, %c0_176] : memref<1x128xf32, #tpu.memory_space<vmem>>, vector<1x128xf32>
    %471 = vector.broadcast %470 : vector<1x128xf32> to vector<16x128xf32>
    %472 = arith.addf %469, %471 : vector<16x128xf32>
    %c0_177 = arith.constant 0 : index
    %c0_178 = arith.constant 0 : index
    %473 = vector.load %arg21[%c0_177, %c0_178] : memref<16x128xf32, #tpu.memory_space<vmem>>, vector<16x128xf32>
    tpu.vector_store %arg21[%c0_177, %c0_178], %472 {strides = array<i32>} : memref<16x128xf32, #tpu.memory_space<vmem>>, vector<16x128xf32>,
    return
  }
  func.func @transform_0(%arg0: i32) -> (i32, i32) {
    %c0_i32 = arith.constant 0 : i32
    %c0_i32_0 = arith.constant 0 : i32
    %c0_i32_1 = arith.constant 0 : i32
    return %c0_i32, %c0_i32_0 : i32, i32
  }
  func.func @transform_1(%arg0: i32) -> (i32, i32, i32) {
    %c0_i32 = arith.constant 0 : i32
    %c0_i32_0 = arith.constant 0 : i32
    %c0_i32_1 = arith.constant 0 : i32
    %c0_i32_2 = arith.constant 0 : i32
    return %c0_i32, %c0_i32_0, %c0_i32_1 : i32, i32, i32
  }
  func.func @transform_2(%arg0: i32) -> (i32, i32) {
    %c0_i32 = arith.constant 0 : i32
    %c0_i32_0 = arith.constant 0 : i32
    %c0_i32_1 = arith.constant 0 : i32
    return %c0_i32, %c0_i32_0 : i32, i32
  }
  func.func @transform_3(%arg0: i32) -> (i32, i32) {
    %c0_i32 = arith.constant 0 : i32
    %c0_i32_0 = arith.constant 0 : i32
    %c0_i32_1 = arith.constant 0 : i32
    return %c0_i32, %c0_i32_0 : i32, i32
  }
  func.func @transform_4(%arg0: i32) -> (i32, i32, i32) {
    %c0_i32 = arith.constant 0 : i32
    %c0_i32_0 = arith.constant 0 : i32
    %c0_i32_1 = arith.constant 0 : i32
    %c0_i32_2 = arith.constant 0 : i32
    return %c0_i32, %c0_i32_0, %c0_i32_1 : i32, i32, i32
  }
  func.func @transform_5(%arg0: i32) -> (i32, i32, i32) {
    %c0_i32 = arith.constant 0 : i32
    %c0_i32_0 = arith.constant 0 : i32
    %c0_i32_1 = arith.constant 0 : i32
    %c0_i32_2 = arith.constant 0 : i32
    return %c0_i32, %c0_i32_0, %c0_i32_1 : i32, i32, i32
  }
  func.func @transform_6(%arg0: i32) -> (i32, i32, i32) {
    %c0_i32 = arith.constant 0 : i32
    %c0_i32_0 = arith.constant 0 : i32
    %c0_i32_1 = arith.constant 0 : i32
    %c0_i32_2 = arith.constant 0 : i32
    return %c0_i32, %c0_i32_0, %c0_i32_1 : i32, i32, i32
  }
  func.func @transform_7(%arg0: i32) -> (i32, i32, i32) {
    %c0_i32 = arith.constant 0 : i32
    %c0_i32_0 = arith.constant 0 : i32
    %c0_i32_1 = arith.constant 0 : i32
    %c0_i32_2 = arith.constant 0 : i32
    return %c0_i32, %c0_i32_0, %c0_i32_1 : i32, i32, i32
  }
  func.func @transform_8(%arg0: i32) -> (i32, i32, i32) {
    %c0_i32 = arith.constant 0 : i32
    %c0_i32_0 = arith.constant 0 : i32
    %c0_i32_1 = arith.constant 0 : i32
    %c0_i32_2 = arith.constant 0 : i32
    return %c0_i32, %c0_i32_0, %c0_i32_1 : i32, i32, i32
  }
  func.func @transform_9(%arg0: i32) -> (i32, i32, i32) {
    %c0_i32 = arith.constant 0 : i32
    %c0_i32_0 = arith.constant 0 : i32
    %c0_i32_1 = arith.constant 0 : i32
    %c0_i32_2 = arith.constant 0 : i32
    return %c0_i32, %c0_i32_0, %c0_i32_1 : i32, i32, i32
  }
  func.func @transform_10(%arg0: i32) -> (i32, i32, i32) {
    %c0_i32 = arith.constant 0 : i32
    %c0_i32_0 = arith.constant 0 : i32
    %c0_i32_1 = arith.constant 0 : i32
    %c0_i32_2 = arith.constant 0 : i32
    return %c0_i32, %c0_i32_0, %c0_i32_1 : i32, i32, i32
  }
  func.func @transform_11(%arg0: i32) -> (i32, i32, i32) {
    %c0_i32 = arith.constant 0 : i32
    %c0_i32_0 = arith.constant 0 : i32
    %c0_i32_1 = arith.constant 0 : i32
    %c0_i32_2 = arith.constant 0 : i32
    return %c0_i32, %c0_i32_0, %c0_i32_1 : i32, i32, i32
  }
  func.func @transform_12(%arg0: i32) -> (i32, i32, i32) {
    %c0_i32 = arith.constant 0 : i32
    %c0_i32_0 = arith.constant 0 : i32
    %c0_i32_1 = arith.constant 0 : i32
    %c0_i32_2 = arith.constant 0 : i32
    return %c0_i32, %c0_i32_0, %c0_i32_1 : i32, i32, i32
  }
  func.func @transform_13(%arg0: i32) -> (i32, i32, i32) {
    %c0_i32 = arith.constant 0 : i32
    %c0_i32_0 = arith.constant 0 : i32
    %c0_i32_1 = arith.constant 0 : i32
    %c0_i32_2 = arith.constant 0 : i32
    return %c0_i32, %c0_i32_0, %c0_i32_1 : i32, i32, i32
  }
  func.func @transform_14(%arg0: i32) -> (i32, i32, i32) {
    %c0_i32 = arith.constant 0 : i32
    %c0_i32_0 = arith.constant 0 : i32
    %c0_i32_1 = arith.constant 0 : i32
    %c0_i32_2 = arith.constant 0 : i32
    return %c0_i32, %c0_i32_0, %c0_i32_1 : i32, i32, i32
  }
  func.func @transform_15(%arg0: i32) -> (i32, i32, i32) {
    %c0_i32 = arith.constant 0 : i32
    %c0_i32_0 = arith.constant 0 : i32
    %c0_i32_1 = arith.constant 0 : i32
    %c0_i32_2 = arith.constant 0 : i32
    return %c0_i32, %c0_i32_0, %c0_i32_1 : i32, i32, i32
  }
  func.func @transform_16(%arg0: i32) -> (i32, i32) {
    %c0_i32 = arith.constant 0 : i32
    %c0_i32_0 = arith.constant 0 : i32
    %c0_i32_1 = arith.constant 0 : i32
    return %c0_i32, %c0_i32_0 : i32, i32
  }
  func.func @transform_17(%arg0: i32) -> (i32, i32) {
    %c0_i32 = arith.constant 0 : i32
    %c0_i32_0 = arith.constant 0 : i32
    %c0_i32_1 = arith.constant 0 : i32
    return %c0_i32, %c0_i32_0 : i32, i32
  }
  func.func @transform_18(%arg0: i32) -> (i32, i32) {
    %c0_i32 = arith.constant 0 : i32
    %c0_i32_0 = arith.constant 0 : i32
    %c0_i32_1 = arith.constant 0 : i32
    return %c0_i32, %c0_i32_0 : i32, i32
  }
  func.func @transform_19(%arg0: i32) -> (i32, i32) {
    %c0_i32 = arith.constant 0 : i32
    %c0_i32_0 = arith.constant 0 : i32
    %c0_i32_1 = arith.constant 0 : i32
    return %c0_i32, %c0_i32_0 : i32, i32
  }
  func.func @transform_20(%arg0: i32) -> (i32, i32) {
    %c0_i32 = arith.constant 0 : i32
    %c0_i32_0 = arith.constant 0 : i32
    %c0_i32_1 = arith.constant 0 : i32
    return %c0_i32, %c0_i32_0 : i32, i32
  }
}

</mosaic_0001>

<llo_original>
// kernel: tpu_custom_call.1
$region0: #{tpu_custom_call.1}
  #allocation0 [shape = 'u32[]', space=smem, size = 0x4, offset = 0x4, fixed_abs, tag = 'smem constant byte address 0x4 - core index']
  #allocation1 [shape = 'u32[144,128]{1,0:T(1,128)}', space=vmem, size = 0x12000, scoped, tag = 'internal scratch']
  %s0 = inlined_call_operand.hbm [shape: f32[16,32], index: 0, kind: input, shape index: {}]
  %s1 = inlined_call_operand.hbm [shape: f32[2,8,8], index: 1, kind: input, shape index: {}]
  %s2 = inlined_call_operand.hbm [shape: f32[1,32], index: 2, kind: input, shape index: {}]
  %s3 = inlined_call_operand.hbm [shape: f32[1,32], index: 3, kind: input, shape index: {}]
  %s4 = inlined_call_operand.vmem [shape: bf16[2,32,96], index: 4, kind: input, shape index: {}]
  %s5 = inlined_call_operand.hbm [shape: f32[2,1,96], index: 5, kind: input, shape index: {}]
  %s6 = inlined_call_operand.vmem [shape: f32[2,32,32], index: 6, kind: input, shape index: {}]
  %s7 = inlined_call_operand.hbm [shape: f32[2,1,32], index: 7, kind: input, shape index: {}]
  %s8 = inlined_call_operand.hbm [shape: f32[2,1,32], index: 8, kind: input, shape index: {}]
  %s9 = inlined_call_operand.hbm [shape: f32[2,1,32], index: 9, kind: input, shape index: {}]
  %s10 = inlined_call_operand.hbm [shape: bf16[2,32,64], index: 10, kind: input, shape index: {}]
  %s11 = inlined_call_operand.hbm [shape: f32[2,1,64], index: 11, kind: input, shape index: {}]
  %s12 = inlined_call_operand.vmem [shape: bf16[2,64,32], index: 12, kind: input, shape index: {}]
  %s13 = inlined_call_operand.hbm [shape: f32[2,1,32], index: 13, kind: input, shape index: {}]
  %s14 = inlined_call_operand.hbm [shape: f32[2,1,32], index: 14, kind: input, shape index: {}]
  %s15 = inlined_call_operand.hbm [shape: f32[2,1,32], index: 15, kind: input, shape index: {}]
  %s16 = inlined_call_operand.vmem [shape: bf16[32,32], index: 16, kind: input, shape index: {}]
  %s17 = inlined_call_operand.hbm [shape: f32[1,32], index: 17, kind: input, shape index: {}]
  %s18 = inlined_call_operand.vmem [shape: bf16[32,128], index: 18, kind: input, shape index: {}]
  %s19 = inlined_call_operand.vmem [shape: f32[1,128], index: 19, kind: input, shape index: {}]
  %s20 = inlined_call_operand.hbm [shape: f32[16,128], index: 20, kind: output, shape index: {}]
  %s21 = sld [smem:[#allocation0]]
  $region146: #{tpu_custom_call.1} parent=0
    _
  %s23 = ssub.s32 1, %s21
  %s24 = scalar_select 0, %s23, %s21
  $region1: #{tpu_custom_call.1} parent=0
    #allocation2 [shape = 'u8[8192]{0}', space=vmem, size = 0x2000, scoped, tag = 'input window, operand 0, single buffered']
    #allocation3 [shape = 's32[1]{0}', space=sflag, size = 0x4, scoped, tag = 'scoped memory for tpu_custom_call.1']
    #allocation4 [shape = 's32[1]{0}', space=sflag, size = 0x4, scoped, tag = 'scoped memory for tpu_custom_call.1']
    #allocation5 [shape = 'u8[8192]{0}', space=vmem, size = 0x2000, scoped, tag = 'input window, operand 1, single buffered']
    #allocation6 [shape = 's32[1]{0}', space=sflag, size = 0x4, scoped, tag = 'scoped memory for tpu_custom_call.1']
    #allocation7 [shape = 'u8[512]{0}', space=vmem, size = 0x400, scoped, tag = 'input window, operand 2, single buffered']
    #allocation8 [shape = 'u8[512]{0}', space=vmem, size = 0x400, scoped, tag = 'input window, operand 3, single buffered']
    #allocation9 [shape = 's32[1]{0}', space=sflag, size = 0x4, scoped, tag = 'scoped memory for tpu_custom_call.1']
    #allocation10 [shape = 'u8[1024]{0}', space=vmem, size = 0x400, scoped, tag = 'input window, operand 5, single buffered']
    #allocation11 [shape = 'u8[1024]{0}', space=vmem, size = 0x400, scoped, tag = 'input window, operand 7, single buffered']
    #allocation12 [shape = 's32[1]{0}', space=sflag, size = 0x4, scoped, tag = 'scoped memory for tpu_custom_call.1']
    #allocation13 [shape = 'u8[1024]{0}', space=vmem, size = 0x400, scoped, tag = 'input window, operand 8, single buffered']
    #allocation14 [shape = 'u8[1024]{0}', space=vmem, size = 0x400, scoped, tag = 'input window, operand 9, single buffered']
    #allocation15 [shape = 's32[1]{0}', space=sflag, size = 0x4, scoped, tag = 'scoped memory for tpu_custom_call.1']
    #allocation16 [shape = 'u8[16384]{0}', space=vmem, size = 0x4000, scoped, tag = 'input window, operand 10, single buffered']
    #allocation17 [shape = 'u8[1024]{0}', space=vmem, size = 0x400, scoped, tag = 'input window, operand 11, single buffered']
    #allocation18 [shape = 's32[1]{0}', space=sflag, size = 0x4, scoped, tag = 'scoped memory for tpu_custom_call.1']
    #allocation19 [shape = 'u8[1024]{0}', space=vmem, size = 0x400, scoped, tag = 'input window, operand 13, single buffered']
    #allocation20 [shape = 'u8[1024]{0}', space=vmem, size = 0x400, scoped, tag = 'input window, operand 14, single buffered']
    #allocation21 [shape = 's32[1]{0}', space=sflag, size = 0x4, scoped, tag = 'scoped memory for tpu_custom_call.1']
    #allocation22 [shape = 'u8[1024]{0}', space=vmem, size = 0x400, scoped, tag = 'input window, operand 15, single buffered']
    #allocation23 [shape = 'u8[512]{0}', space=vmem, size = 0x400, scoped, tag = 'input window, operand 17, single buffered']
    #allocation24 [shape = 's32[1]{0}', space=sflag, size = 0x4, scoped, tag = 'scoped memory for tpu_custom_call.1']
    #allocation25 [shape = 'u8[8192]{0}', space=vmem, size = 0x2000, scoped, tag = 'output window, operand 0, single buffered']
    %25 = vsyncpa [#allocation3], 0
    %26 = vsyncpa [#allocation6], 0
    %27 = vsyncpa [#allocation9], 0
    %28 = vsyncpa [#allocation12], 0
    %29 = vsyncpa [#allocation15], 0
    %30 = vsyncpa [#allocation18], 0
    %31 = vsyncpa [#allocation21], 0
    %32 = vsyncpa [#allocation24], 0
    %33 = vsyncpa [#allocation4], 0
    // Predicated region
    $region2: #{tpu_custom_call.1} parent=1 // pred_check
      _
    $region3: #{tpu_custom_call.1} parent=1 // pred_check_branch
      %35 = sbr.rel (0) target = $region5
    $region4: #{tpu_custom_call.1} parent=1 // pred_region
      %s37 = ssub.s32 256, 256
      %38 = vsyncadd [#allocation3], %s37
      %s39 = sshll.u32 [#allocation2], 4
      %s40 = int_to_ptr.vmem [resolvable:$true] %s39
      %45 = dma.hbm_to_vmem [thread:$0]  %s0, 256, %s40, [#allocation3], 128, 128, 8
    $region5: #{tpu_custom_call.1} parent=1 // pred_fallthru
      _
    // Predicated region
    $region6: #{tpu_custom_call.1} parent=1 // pred_check
      _
    $region7: #{tpu_custom_call.1} parent=1 // pred_check_branch
      %47 = sbr.rel (0) target = $region9
    $region8: #{tpu_custom_call.1} parent=1 // pred_region
      %s49 = ssub.s32 256, 256
      %50 = vsyncadd [#allocation6], %s49
      %s51 = sshll.u32 [#allocation5], 4
      %s52 = int_to_ptr.vmem [resolvable:$true] %s51
      %57 = dma.hbm_to_vmem [thread:$0]  %s1, 256, %s52, [#allocation6], 128, 128, 8
    $region9: #{tpu_custom_call.1} parent=1 // pred_fallthru
      _
    // Predicated region
    $region10: #{tpu_custom_call.1} parent=1 // pred_check
      _
    $region11: #{tpu_custom_call.1} parent=1 // pred_check_branch
      %59 = sbr.rel (0) target = $region13
    $region12: #{tpu_custom_call.1} parent=1 // pred_region
      %s61 = ssub.s32 16, 16
      %62 = vsyncadd [#allocation6], %s61
      %s64 = sshll.u32 [#allocation7], 4
      %s65 = int_to_ptr.vmem [resolvable:$true] %s64
      %67 = dma.hbm_to_vmem [thread:$0]  %s2, 16, %s65, [#allocation6]
    $region13: #{tpu_custom_call.1} parent=1 // pred_fallthru
      _
    // Predicated region
    $region14: #{tpu_custom_call.1} parent=1 // pred_check
      _
    $region15: #{tpu_custom_call.1} parent=1 // pred_check_branch
      %69 = sbr.rel (0) target = $region17
    $region16: #{tpu_custom_call.1} parent=1 // pred_region
      %s71 = ssub.s32 16, 16
      %72 = vsyncadd [#allocation9], %s71
      %s74 = sshll.u32 [#allocation8], 4
      %s75 = int_to_ptr.vmem [resolvable:$true] %s74
      %77 = dma.hbm_to_vmem [thread:$0]  %s3, 16, %s75, [#allocation9]
    $region17: #{tpu_custom_call.1} parent=1 // pred_fallthru
      _
    // Predicated region
    $region18: #{tpu_custom_call.1} parent=1 // pred_check
      _
    $region19: #{tpu_custom_call.1} parent=1 // pred_check_branch
      %79 = sbr.rel (0) target = $region21
    $region20: #{tpu_custom_call.1} parent=1 // pred_region
      _
    $region21: #{tpu_custom_call.1} parent=1 // pred_fallthru
      _
    // Predicated region
    $region22: #{tpu_custom_call.1} parent=1 // pred_check
      _
    $region23: #{tpu_custom_call.1} parent=1 // pred_check_branch
      %81 = sbr.rel (0) target = $region25
    $region24: #{tpu_custom_call.1} parent=1 // pred_region
      %s83 = ssub.s32 32, 32
      %84 = vsyncadd [#allocation9], %s83
      %s85 = sshll.u32 [#allocation10], 4
      %s86 = int_to_ptr.vmem [resolvable:$true] %s85
      %91 = dma.hbm_to_vmem [thread:$0]  %s5, 32, %s86, [#allocation9], 16, 16, 1
    $region25: #{tpu_custom_call.1} parent=1 // pred_fallthru
      _
    // Predicated region
    $region26: #{tpu_custom_call.1} parent=1 // pred_check
      _
    $region27: #{tpu_custom_call.1} parent=1 // pred_check_branch
      %93 = sbr.rel (0) target = $region29
    $region28: #{tpu_custom_call.1} parent=1 // pred_region
      _
    $region29: #{tpu_custom_call.1} parent=1 // pred_fallthru
      _
    // Predicated region
    $region30: #{tpu_custom_call.1} parent=1 // pred_check
      _
    $region31: #{tpu_custom_call.1} parent=1 // pred_check_branch
      %95 = sbr.rel (0) target = $region33
    $region32: #{tpu_custom_call.1} parent=1 // pred_region
      %s97 = ssub.s32 32, 32
      %98 = vsyncadd [#allocation12], %s97
      %s99 = sshll.u32 [#allocation11], 4
      %s100 = int_to_ptr.vmem [resolvable:$true] %s99
      %105 = dma.hbm_to_vmem [thread:$0]  %s7, 32, %s100, [#allocation12], 16, 16, 1
    $region33: #{tpu_custom_call.1} parent=1 // pred_fallthru
      _
    // Predicated region
    $region34: #{tpu_custom_call.1} parent=1 // pred_check
      _
    $region35: #{tpu_custom_call.1} parent=1 // pred_check_branch
      %107 = sbr.rel (0) target = $region37
    $region36: #{tpu_custom_call.1} parent=1 // pred_region
      %s109 = ssub.s32 32, 32
      %110 = vsyncadd [#allocation12], %s109
      %s111 = sshll.u32 [#allocation13], 4
      %s112 = int_to_ptr.vmem [resolvable:$true] %s111
      %117 = dma.hbm_to_vmem [thread:$0]  %s8, 32, %s112, [#allocation12], 16, 16, 1
    $region37: #{tpu_custom_call.1} parent=1 // pred_fallthru
      _
    // Predicated region
    $region38: #{tpu_custom_call.1} parent=1 // pred_check
      _
    $region39: #{tpu_custom_call.1} parent=1 // pred_check_branch
      %119 = sbr.rel (0) target = $region41
    $region40: #{tpu_custom_call.1} parent=1 // pred_region
      %s121 = ssub.s32 32, 32
      %122 = vsyncadd [#allocation15], %s121
      %s123 = sshll.u32 [#allocation14], 4
      %s124 = int_to_ptr.vmem [resolvable:$true] %s123
      %129 = dma.hbm_to_vmem [thread:$0]  %s9, 32, %s124, [#allocation15], 16, 16, 1
    $region41: #{tpu_custom_call.1} parent=1 // pred_fallthru
      _
    // Predicated region
    $region42: #{tpu_custom_call.1} parent=1 // pred_check
      _
    $region43: #{tpu_custom_call.1} parent=1 // pred_check_branch
      %131 = sbr.rel (0) target = $region45
    $region44: #{tpu_custom_call.1} parent=1 // pred_region
      %s133 = ssub.s32 512, 512
      %134 = vsyncadd [#allocation15], %s133
      %s135 = sshll.u32 [#allocation16], 4
      %s136 = int_to_ptr.vmem [resolvable:$true] %s135
      %141 = dma.hbm_to_vmem [thread:$0]  %s10, 512, %s136, [#allocation15], 64, 64, 4
    $region45: #{tpu_custom_call.1} parent=1 // pred_fallthru
      _
    // Predicated region
    $region46: #{tpu_custom_call.1} parent=1 // pred_check
      _
    $region47: #{tpu_custom_call.1} parent=1 // pred_check_branch
      %143 = sbr.rel (0) target = $region49
    $region48: #{tpu_custom_call.1} parent=1 // pred_region
      %s145 = ssub.s32 32, 32
      %146 = vsyncadd [#allocation18], %s145
      %s147 = sshll.u32 [#allocation17], 4
      %s148 = int_to_ptr.vmem [resolvable:$true] %s147
      %153 = dma.hbm_to_vmem [thread:$0]  %s11, 32, %s148, [#allocation18], 16, 16, 1
    $region49: #{tpu_custom_call.1} parent=1 // pred_fallthru
      _
    // Predicated region
    $region50: #{tpu_custom_call.1} parent=1 // pred_check
      _
    $region51: #{tpu_custom_call.1} parent=1 // pred_check_branch
      %155 = sbr.rel (0) target = $region53
    $region52: #{tpu_custom_call.1} parent=1 // pred_region
      _
    $region53: #{tpu_custom_call.1} parent=1 // pred_fallthru
      _
    // Predicated region
    $region54: #{tpu_custom_call.1} parent=1 // pred_check
      _
    $region55: #{tpu_custom_call.1} parent=1 // pred_check_branch
      %157 = sbr.rel (0) target = $region57
    $region56: #{tpu_custom_call.1} parent=1 // pred_region
      %s159 = ssub.s32 32, 32
      %160 = vsyncadd [#allocation18], %s159
      %s161 = sshll.u32 [#allocation19], 4
      %s162 = int_to_ptr.vmem [resolvable:$true] %s161
      %167 = dma.hbm_to_vmem [thread:$0]  %s13, 32, %s162, [#allocation18], 16, 16, 1
    $region57: #{tpu_custom_call.1} parent=1 // pred_fallthru
      _
    // Predicated region
    $region58: #{tpu_custom_call.1} parent=1 // pred_check
      _
    $region59: #{tpu_custom_call.1} parent=1 // pred_check_branch
      %169 = sbr.rel (0) target = $region61
    $region60: #{tpu_custom_call.1} parent=1 // pred_region
      %s171 = ssub.s32 32, 32
      %172 = vsyncadd [#allocation21], %s171
      %s173 = sshll.u32 [#allocation20], 4
      %s174 = int_to_ptr.vmem [resolvable:$true] %s173
      %179 = dma.hbm_to_vmem [thread:$0]  %s14, 32, %s174, [#allocation21], 16, 16, 1
    $region61: #{tpu_custom_call.1} parent=1 // pred_fallthru
      _
    // Predicated region
    $region62: #{tpu_custom_call.1} parent=1 // pred_check
      _
    $region63: #{tpu_custom_call.1} parent=1 // pred_check_branch
      %181 = sbr.rel (0) target = $region65
    $region64: #{tpu_custom_call.1} parent=1 // pred_region
      %s183 = ssub.s32 32, 32
      %184 = vsyncadd [#allocation21], %s183
      %s185 = sshll.u32 [#allocation22], 4
      %s186 = int_to_ptr.vmem [resolvable:$true] %s185
      %191 = dma.hbm_to_vmem [thread:$0]  %s15, 32, %s186, [#allocation21], 16, 16, 1
    $region65: #{tpu_custom_call.1} parent=1 // pred_fallthru
      _
    // Predicated region
    $region66: #{tpu_custom_call.1} parent=1 // pred_check
      _
    $region67: #{tpu_custom_call.1} parent=1 // pred_check_branch
      %193 = sbr.rel (0) target = $region69
    $region68: #{tpu_custom_call.1} parent=1 // pred_region
      _
    $region69: #{tpu_custom_call.1} parent=1 // pred_fallthru
      _
    // Predicated region
    $region70: #{tpu_custom_call.1} parent=1 // pred_check
      _
    $region71: #{tpu_custom_call.1} parent=1 // pred_check_branch
      %195 = sbr.rel (0) target = $region73
    $region72: #{tpu_custom_call.1} parent=1 // pred_region
      %s197 = ssub.s32 16, 16
      %198 = vsyncadd [#allocation24], %s197
      %s200 = sshll.u32 [#allocation23], 4
      %s201 = int_to_ptr.vmem [resolvable:$true] %s200
      %203 = dma.hbm_to_vmem [thread:$0]  %s17, 16, %s201, [#allocation24]
    $region73: #{tpu_custom_call.1} parent=1 // pred_fallthru
      _
    // Predicated region
    $region74: #{tpu_custom_call.1} parent=1 // pred_check
      _
    $region75: #{tpu_custom_call.1} parent=1 // pred_check_branch
      %205 = sbr.rel (0) target = $region77
    $region76: #{tpu_custom_call.1} parent=1 // pred_region
      _
    $region77: #{tpu_custom_call.1} parent=1 // pred_fallthru
      _
    // Predicated region
    $region78: #{tpu_custom_call.1} parent=1 // pred_check
      _
    $region79: #{tpu_custom_call.1} parent=1 // pred_check_branch
      %207 = sbr.rel (0) target = $region81
    $region80: #{tpu_custom_call.1} parent=1 // pred_region
      _
    $region81: #{tpu_custom_call.1} parent=1 // pred_fallthru
      _
    // Predicated region
    $region82: #{tpu_custom_call.1} parent=1 // pred_check
      _
    $region83: #{tpu_custom_call.1} parent=1 // pred_check_branch
      %209 = sbr.rel (0) target = $region85
    $region84: #{tpu_custom_call.1} parent=1 // pred_region
      %210 = dma.done [#allocation3], 256
    $region85: #{tpu_custom_call.1} parent=1 // pred_fallthru
      _
    // Predicated region
    $region86: #{tpu_custom_call.1} parent=1 // pred_check
      _
    $region87: #{tpu_custom_call.1} parent=1 // pred_check_branch
      %212 = sbr.rel (0) target = $region89
    $region88: #{tpu_custom_call.1} parent=1 // pred_region
      %213 = dma.done [#allocation6], 256
    $region89: #{tpu_custom_call.1} parent=1 // pred_fallthru
      _
    // Predicated region
    $region90: #{tpu_custom_call.1} parent=1 // pred_check
      _
    $region91: #{tpu_custom_call.1} parent=1 // pred_check_branch
      %215 = sbr.rel (0) target = $region93
    $region92: #{tpu_custom_call.1} parent=1 // pred_region
      %216 = dma.done [#allocation6], 16
    $region93: #{tpu_custom_call.1} parent=1 // pred_fallthru
      _
    // Predicated region
    $region94: #{tpu_custom_call.1} parent=1 // pred_check
      _
    $region95: #{tpu_custom_call.1} parent=1 // pred_check_branch
      %218 = sbr.rel (0) target = $region97
    $region96: #{tpu_custom_call.1} parent=1 // pred_region
      %219 = dma.done [#allocation9], 16
    $region97: #{tpu_custom_call.1} parent=1 // pred_fallthru
      _
    // Predicated region
    $region98: #{tpu_custom_call.1} parent=1 // pred_check
      _
    $region99: #{tpu_custom_call.1} parent=1 // pred_check_branch
      %221 = sbr.rel (0) target = $region101
    $region100: #{tpu_custom_call.1} parent=1 // pred_region
      %222 = dma.done [#allocation9], 32
    $region101: #{tpu_custom_call.1} parent=1 // pred_fallthru
      _
    // Predicated region
    $region102: #{tpu_custom_call.1} parent=1 // pred_check
      _
    $region103: #{tpu_custom_call.1} parent=1 // pred_check_branch
      %224 = sbr.rel (0) target = $region105
    $region104: #{tpu_custom_call.1} parent=1 // pred_region
      %225 = dma.done [#allocation12], 32
    $region105: #{tpu_custom_call.1} parent=1 // pred_fallthru
      _
    // Predicated region
    $region106: #{tpu_custom_call.1} parent=1 // pred_check
      _
    $region107: #{tpu_custom_call.1} parent=1 // pred_check_branch
      %227 = sbr.rel (0) target = $region109
    $region108: #{tpu_custom_call.1} parent=1 // pred_region
      %228 = dma.done [#allocation12], 32
    $region109: #{tpu_custom_call.1} parent=1 // pred_fallthru
      _
    // Predicated region
    $region110: #{tpu_custom_call.1} parent=1 // pred_check
      _
    $region111: #{tpu_custom_call.1} parent=1 // pred_check_branch
      %230 = sbr.rel (0) target = $region113
    $region112: #{tpu_custom_call.1} parent=1 // pred_region
      %231 = dma.done [#allocation15], 32
    $region113: #{tpu_custom_call.1} parent=1 // pred_fallthru
      _
    // Predicated region
    $region114: #{tpu_custom_call.1} parent=1 // pred_check
      _
    $region115: #{tpu_custom_call.1} parent=1 // pred_check_branch
      %233 = sbr.rel (0) target = $region117
    $region116: #{tpu_custom_call.1} parent=1 // pred_region
      %234 = dma.done [#allocation15], 512
    $region117: #{tpu_custom_call.1} parent=1 // pred_fallthru
      _
    // Predicated region
    $region118: #{tpu_custom_call.1} parent=1 // pred_check
      _
    $region119: #{tpu_custom_call.1} parent=1 // pred_check_branch
      %236 = sbr.rel (0) target = $region121
    $region120: #{tpu_custom_call.1} parent=1 // pred_region
      %237 = dma.done [#allocation18], 32
    $region121: #{tpu_custom_call.1} parent=1 // pred_fallthru
      _
    // Predicated region
    $region122: #{tpu_custom_call.1} parent=1 // pred_check
      _
    $region123: #{tpu_custom_call.1} parent=1 // pred_check_branch
      %239 = sbr.rel (0) target = $region125
    $region124: #{tpu_custom_call.1} parent=1 // pred_region
      %240 = dma.done [#allocation18], 32
    $region125: #{tpu_custom_call.1} parent=1 // pred_fallthru
      _
    // Predicated region
    $region126: #{tpu_custom_call.1} parent=1 // pred_check
      _
    $region127: #{tpu_custom_call.1} parent=1 // pred_check_branch
      %242 = sbr.rel (0) target = $region129
    $region128: #{tpu_custom_call.1} parent=1 // pred_region
      %243 = dma.done [#allocation21], 32
    $region129: #{tpu_custom_call.1} parent=1 // pred_fallthru
      _
    // Predicated region
    $region130: #{tpu_custom_call.1} parent=1 // pred_check
      _
    $region131: #{tpu_custom_call.1} parent=1 // pred_check_branch
      %245 = sbr.rel (0) target = $region133
    $region132: #{tpu_custom_call.1} parent=1 // pred_region
      %246 = dma.done [#allocation21], 32
    $region133: #{tpu_custom_call.1} parent=1 // pred_fallthru
      _
    // Predicated region
    $region134: #{tpu_custom_call.1} parent=1 // pred_check
      _
    $region135: #{tpu_custom_call.1} parent=1 // pred_check_branch
      %248 = sbr.rel (0) target = $region137
    $region136: #{tpu_custom_call.1} parent=1 // pred_region
      %249 = dma.done [#allocation24], 16
    $region137: #{tpu_custom_call.1} parent=1 // pred_fallthru
      _
    %v251 = vld [vmem:[#allocation5] sm:$0xff]
    %v252 = vld [vmem:[#allocation5 + $0x8] sm:$0xff]
    %v253 = vld [vmem:[#allocation2] sm:$0xff]
    %v254 = vld [vmem:[#allocation2 + $0x8] sm:$0xff]
    %v255 = vld [vmem:[#allocation7] sm:$0x1]
    %v256 = vld [vmem:[#allocation8] sm:$0x1]
    %vm257 = vcmask 261120
    %v258 = vsel %vm257, %v253, 0.0
    %259 = vadd.xlane.f32.xlu0 %v258
    %v260 = vpop.xlane.xlu0 %259
    %v261 = vsel %vm257, %v254, 0.0
    %262 = vadd.xlane.f32.xlu0 %v261
    %v263 = vpop.xlane.xlu0 %262
    %v264 = vrcp.pop 32.0
    %v265 = vmul.f32 %v260, %v264
    %v266 = vmul.f32 %v263, %v264
    %v267 = vsub.f32 %v253, %v265
    %v268 = vsub.f32 %v254, %v266
    %v269 = vmul.f32 %v267, %v267
    %v270 = vmul.f32 %v268, %v268
    %v271 = vsel %vm257, %v269, 0.0
    %272 = vadd.xlane.f32.xlu0 %v271
    %v273 = vpop.xlane.xlu0 %272
    %v274 = vsel %vm257, %v270, 0.0
    %275 = vadd.xlane.f32.xlu0 %v274
    %v276 = vpop.xlane.xlu0 %275
    %v277 = vmul.f32 %v273, %v264
    %v278 = vmul.f32 %v276, %v264
    %v279 = vadd.f32 %v277, 1e-12
    %v280 = vadd.f32 %v278, 1e-12
    %v281 = vrsqrt.pop %v279
    %v282 = vrsqrt.pop %v280
    %v283 = vmul.f32 %v267, %v281
    %v284 = vmul.f32 %v268, %v282
    %v286 = vlaneseq
    %v287 = vshrl.u32 %v286, 7
    %v288 = vsub.s32 0, %v287
    %v289 = vrot.slane %v255, %v288
    %v291 = vmul.f32 %v283, %v289
    %v292 = vmul.f32 %v284, %v289
    %v294 = vlaneseq
    %v295 = vshrl.u32 %v294, 7
    %v296 = vsub.s32 0, %v295
    %v297 = vrot.slane %v256, %v296
    %v299 = vadd.f32 %v291, %v297
    %v300 = vadd.f32 %v292, %v297
    %v301 = vpack.c.bf16 %v300, %v299
    %v302 = vld [vmem:[%s4] sm:$0xf]
    %v303 = vld [vmem:[%s4 + $0x4] sm:$0xf]
    %v304 = vld [vmem:[%s4 + $0x8] sm:$0xf]
    %v305 = vld [vmem:[%s4 + $0xc] sm:$0xf]
    %v306 = vld [vmem:[#allocation10] sm:$0x1]
    %v308 = vlaneseq
    %v309 = vshrl.u32 %v308, 7
    %v310 = vsub.s32 0, %v309
    %v311 = vrot.slane %v306, %v310
    %v317 = vunpack.c.l.b16 %v302
    %v318 = vunpack.c.l.b16 %v303
    %v319 = vunpack.c.l.b16 %v304
    %v320 = vunpack.c.l.b16 %v305
    %v321 = vpack.c.b16 %v318, %v317
    %v322 = vpack.c.b16 %v320, %v319
    %v326 = vsel %vm257, %v301, 0
    %328 = vmatprep.subr.bf16.mxu0 0
    %329 = vmatpush1.bf16.msra.mxu0 0
    %330 = vmatprep.subr.bf16.mxu0 0
    %331 = vmatpush1.bf16.msra.mxu0 0
    %332 = vmatprep.subr.bf16.mxu0 0
    %333 = vmatpush1.bf16.msra.mxu0 0
    %334 = vmatprep.subr.bf16.mxu0 0
    %335 = vmatpush1.bf16.msra.mxu0 0
    %336 = vmatprep.subr.bf16.mxu0 0
    %337 = vmatpush1.bf16.msra.mxu0 0
    %338 = vmatprep.subr.bf16.mxu0 0
    %339 = vmatpush1.bf16.msra.mxu0 0
    %340 = vmatprep.subr.bf16.mxu0 0
    %341 = vmatpush1.bf16.msra.mxu0 %v322
    %342 = vmatprep.subr.bf16.mxu0 0
    %343 = vmatpush1.bf16.msra.mxu0 %v321
    %344 = vmatprep.subr.bf16.mxu0 0
    %345 = vmatpush2.bf16.msra.mxu0 0
    %346 = vmatprep.subr.bf16.mxu0 0
    %347 = vmatpush2.bf16.msra.mxu0 0
    %348 = vmatprep.subr.bf16.mxu0 0
    %349 = vmatpush2.bf16.msra.mxu0 0
    %350 = vmatprep.subr.bf16.mxu0 0
    %351 = vmatpush2.bf16.msra.mxu0 0
    %352 = vmatprep.subr.bf16.mxu0 0
    %353 = vmatpush2.bf16.msra.mxu0 0
    %354 = vmatprep.subr.bf16.mxu0 0
    %355 = vmatpush2.bf16.msra.mxu0 0
    %356 = vmatprep.subr.bf16.mxu0 0
    %357 = vmatpush2.bf16.msra.mxu0 0
    %358 = vmatprep.subr.bf16.mxu0 0
    %359 = vmatpush2.bf16.msra.mxu0 0
    %360 = vmatprep.mubr.bf16.mxu0 0
    %361 = vmatmul.mubr.bf16.gmra.mxu0 %v326
    %v362 = vpop.f32.mrf.mxu0
    %v363 = vadd.f32 %v311, %v362
    %v364 = vpop.f32.mrf.mxu0
    %v365 = vpop.f32.mrf.mxu0
    %v366 = vadd.f32 %v311, %v365
    %v367 = vpop.f32.mrf.mxu0
    %368 = vdwg.mxu0
    %v369 = vld [vmem:[%s6] sm:$0xff]
    %v370 = vld [vmem:[%s6 + $0x8] sm:$0xff]
    %v371 = vld [vmem:[%s6 + $0x10] sm:$0xff]
    %v372 = vld [vmem:[%s6 + $0x18] sm:$0xff]
    %v373 = vpack.c.bf16 %v366, %v363
    %v375 = vunpack.c.l.b16 %v373
    %v376 = vunpack.c.h.b16 %v373
    %v377 = vpack.c.b16 %v375, %v375
    %v378 = vpack.c.b16 %v376, %v376
    %379 = vrot.lane.b32.xlu0 %v377, 96
    %v380 = vpop.permute.xlu0 %379
    %vm381 = vcmask 64512
    %v383 = vsel %vm381, %v377, 0
    %v386 = vsel %vm381, %v380, 0
    %388 = vmatprep.subr.bf16.mxu0 0
    %389 = vmatpush1.bf16.xpose.msra.mxu0 0
    %390 = vmatprep.subr.bf16.mxu0 0
    %391 = vmatpush1.bf16.xpose.msra.mxu0 0
    %392 = vmatprep.subr.bf16.mxu0 0
    %393 = vmatpush1.bf16.xpose.msra.mxu0 0
    %394 = vmatprep.subr.bf16.mxu0 0
    %395 = vmatpush1.bf16.xpose.msra.mxu0 0
    %396 = vmatprep.subr.bf16.mxu0 0
    %397 = vmatpush1.bf16.xpose.msra.mxu0 0
    %398 = vmatprep.subr.bf16.mxu0 0
    %399 = vmatpush1.bf16.xpose.msra.mxu0 0
    %400 = vmatprep.subr.bf16.mxu0 0
    %401 = vmatpush1.bf16.xpose.msra.mxu0 0
    %402 = vmatprep.subr.bf16.mxu0 0
    %403 = vmatpush1.bf16.xpose.msra.mxu0 %v386
    %404 = vmatprep.subr.bf16.mxu0 0
    %405 = vmatpush2.bf16.xpose.msra.mxu0 0
    %406 = vmatprep.subr.bf16.mxu0 0
    %407 = vmatpush2.bf16.xpose.msra.mxu0 0
    %408 = vmatprep.subr.bf16.mxu0 0
    %409 = vmatpush2.bf16.xpose.msra.mxu0 0
    %410 = vmatprep.subr.bf16.mxu0 0
    %411 = vmatpush2.bf16.xpose.msra.mxu0 0
    %412 = vmatprep.subr.bf16.mxu0 0
    %413 = vmatpush2.bf16.xpose.msra.mxu0 0
    %414 = vmatprep.subr.bf16.mxu0 0
    %415 = vmatpush2.bf16.xpose.msra.mxu0 0
    %416 = vmatprep.subr.bf16.mxu0 0
    %417 = vmatpush2.bf16.xpose.msra.mxu0 0
    %418 = vmatprep.subr.bf16.mxu0 0
    %419 = vmatpush2.bf16.xpose.msra.mxu0 0
    %420 = vmatprep.mubr.bf16.mxu0 0
    %421 = vmatmul.mubr.bf16.gmra.mxu0 %v383
    %v422 = vpop.f32.mrf.mxu0
    %v423 = vadd.f32 0.0, %v422
    %v424 = vpop.f32.mrf.mxu0
    %v425 = vpop.f32.mrf.mxu0
    %v426 = vpop.f32.mrf.mxu0
    %427 = vdwg.mxu0
    %428 = vrot.lane.b32.xlu0 %v378, 96
    %v429 = vpop.permute.xlu0 %428
    %v431 = vsel %vm381, %v378, 0
    %v434 = vsel %vm381, %v429, 0
    %436 = vmatprep.subr.bf16.mxu0 0
    %437 = vmatpush1.bf16.xpose.msra.mxu0 0
    %438 = vmatprep.subr.bf16.mxu0 0
    %439 = vmatpush1.bf16.xpose.msra.mxu0 0
    %440 = vmatprep.subr.bf16.mxu0 0
    %441 = vmatpush1.bf16.xpose.msra.mxu0 0
    %442 = vmatprep.subr.bf16.mxu0 0
    %443 = vmatpush1.bf16.xpose.msra.mxu0 0
    %444 = vmatprep.subr.bf16.mxu0 0
    %445 = vmatpush1.bf16.xpose.msra.mxu0 0
    %446 = vmatprep.subr.bf16.mxu0 0
    %447 = vmatpush1.bf16.xpose.msra.mxu0 0
    %448 = vmatprep.subr.bf16.mxu0 0
    %449 = vmatpush1.bf16.xpose.msra.mxu0 0
    %450 = vmatprep.subr.bf16.mxu0 0
    %451 = vmatpush1.bf16.xpose.msra.mxu0 %v434
    %452 = vmatprep.subr.bf16.mxu0 0
    %453 = vmatpush2.bf16.xpose.msra.mxu0 0
    %454 = vmatprep.subr.bf16.mxu0 0
    %455 = vmatpush2.bf16.xpose.msra.mxu0 0
    %456 = vmatprep.subr.bf16.mxu0 0
    %457 = vmatpush2.bf16.xpose.msra.mxu0 0
    %458 = vmatprep.subr.bf16.mxu0 0
    %459 = vmatpush2.bf16.xpose.msra.mxu0 0
    %460 = vmatprep.subr.bf16.mxu0 0
    %461 = vmatpush2.bf16.xpose.msra.mxu0 0
    %462 = vmatprep.subr.bf16.mxu0 0
    %463 = vmatpush2.bf16.xpose.msra.mxu0 0
    %464 = vmatprep.subr.bf16.mxu0 0
    %465 = vmatpush2.bf16.xpose.msra.mxu0 0
    %466 = vmatprep.subr.bf16.mxu0 0
    %467 = vmatpush2.bf16.xpose.msra.mxu0 0
    %468 = vmatprep.mubr.bf16.mxu0 0
    %469 = vmatmul.mubr.bf16.gmra.mxu0 %v431
    %v470 = vpop.f32.mrf.mxu0
    %v471 = vadd.f32 0.0, %v470
    %v472 = vpop.f32.mrf.mxu0
    %v473 = vpop.f32.mrf.mxu0
    %v474 = vpop.f32.mrf.mxu0
    %475 = vdwg.mxu0
    %v476 = vmul.f32 %v423, 0.35355338
    %v477 = vmul.f32 %v471, 0.35355338
    %v478 = vadd.f32 %v476, %v251
    %v479 = vadd.f32 %v477, %v252
    %v480 = vsel %vm381, %v478, -inf
    %481 = vmax.xlane.f32.xlu0 %v480
    %v482 = vpop.xlane.xlu0 %481
    %v483 = vsel %vm381, %v479, -inf
    %484 = vmax.xlane.f32.xlu0 %v483
    %v485 = vpop.xlane.xlu0 %484
    %v486 = vsub.f32 %v478, %v482
    %v487 = vsub.f32 %v479, %v485
    %v488 = vmul.f32 %v486, 1.442695
    %v489 = vpow.pop %v488
    %v490 = vmul.f32 %v487, 1.442695
    %v491 = vpow.pop %v490
    %v492 = vsel %vm381, %v489, 0.0
    %493 = vadd.xlane.f32.xlu0 %v492
    %v494 = vpop.xlane.xlu0 %493
    %v495 = vsel %vm381, %v491, 0.0
    %496 = vadd.xlane.f32.xlu0 %v495
    %v497 = vpop.xlane.xlu0 %496
    %v498 = vrcp.pop %v494
    %v499 = vrcp.pop %v497
    %v500 = vmul.f32 %v489, %v498
    %v501 = vmul.f32 %v491, %v499
    %v502 = vpack.c.bf16 %v500, %v500
    %v503 = vpack.c.bf16 %v501, %v501
    %504 = vrot.lane.b32.xlu0 %v377, 64
    %v505 = vpop.permute.xlu0 %504
    %v507 = vsel %vm381, %v502, 0
    %vm509 = vcmask 1043456
    %v511 = vsel %vm509, %v505, 0
    %513 = vmatprep.subr.bf16.mxu0 0
    %514 = vmatpush1.bf16.msra.mxu0 0
    %515 = vmatprep.subr.bf16.mxu0 0
    %516 = vmatpush1.bf16.msra.mxu0 0
    %517 = vmatprep.subr.bf16.mxu0 0
    %518 = vmatpush1.bf16.msra.mxu0 0
    %519 = vmatprep.subr.bf16.mxu0 0
    %520 = vmatpush1.bf16.msra.mxu0 0
    %521 = vmatprep.subr.bf16.mxu0 0
    %522 = vmatpush1.bf16.msra.mxu0 0
    %523 = vmatprep.subr.bf16.mxu0 0
    %524 = vmatpush1.bf16.msra.mxu0 0
    %525 = vmatprep.subr.bf16.mxu0 0
    %526 = vmatpush1.bf16.msra.mxu0 0
    %527 = vmatprep.subr.bf16.mxu0 0
    %528 = vmatpush1.bf16.msra.mxu0 %v511
    %529 = vmatprep.subr.bf16.mxu0 0
    %530 = vmatpush2.bf16.msra.mxu0 0
    %531 = vmatprep.subr.bf16.mxu0 0
    %532 = vmatpush2.bf16.msra.mxu0 0
    %533 = vmatprep.subr.bf16.mxu0 0
    %534 = vmatpush2.bf16.msra.mxu0 0
    %535 = vmatprep.subr.bf16.mxu0 0
    %536 = vmatpush2.bf16.msra.mxu0 0
    %537 = vmatprep.subr.bf16.mxu0 0
    %538 = vmatpush2.bf16.msra.mxu0 0
    %539 = vmatprep.subr.bf16.mxu0 0
    %540 = vmatpush2.bf16.msra.mxu0 0
    %541 = vmatprep.subr.bf16.mxu0 0
    %542 = vmatpush2.bf16.msra.mxu0 0
    %543 = vmatprep.subr.bf16.mxu0 0
    %544 = vmatpush2.bf16.msra.mxu0 0
    %545 = vmatprep.mubr.bf16.mxu0 0
    %546 = vmatmul.mubr.bf16.gmra.mxu0 %v507
    %v547 = vpop.f32.mrf.mxu0
    %v548 = vadd.f32 0.0, %v547
    %v549 = vpop.f32.mrf.mxu0
    %v550 = vpop.f32.mrf.mxu0
    %v551 = vpop.f32.mrf.mxu0
    %552 = vdwg.mxu0
    %553 = vrot.lane.b32.xlu0 %v378, 64
    %v554 = vpop.permute.xlu0 %553
    %v556 = vsel %vm381, %v503, 0
    %v559 = vsel %vm509, %v554, 0
    %561 = vmatprep.subr.bf16.mxu0 0
    %562 = vmatpush1.bf16.msra.mxu0 0
    %563 = vmatprep.subr.bf16.mxu0 0
    %564 = vmatpush1.bf16.msra.mxu0 0
    %565 = vmatprep.subr.bf16.mxu0 0
    %566 = vmatpush1.bf16.msra.mxu0 0
    %567 = vmatprep.subr.bf16.mxu0 0
    %568 = vmatpush1.bf16.msra.mxu0 0
    %569 = vmatprep.subr.bf16.mxu0 0
    %570 = vmatpush1.bf16.msra.mxu0 0
    %571 = vmatprep.subr.bf16.mxu0 0
    %572 = vmatpush1.bf16.msra.mxu0 0
    %573 = vmatprep.subr.bf16.mxu0 0
    %574 = vmatpush1.bf16.msra.mxu0 0
    %575 = vmatprep.subr.bf16.mxu0 0
    %576 = vmatpush1.bf16.msra.mxu0 %v559
    %577 = vmatprep.subr.bf16.mxu0 0
    %578 = vmatpush2.bf16.msra.mxu0 0
    %579 = vmatprep.subr.bf16.mxu0 0
    %580 = vmatpush2.bf16.msra.mxu0 0
    %581 = vmatprep.subr.bf16.mxu0 0
    %582 = vmatpush2.bf16.msra.mxu0 0
    %583 = vmatprep.subr.bf16.mxu0 0
    %584 = vmatpush2.bf16.msra.mxu0 0
    %585 = vmatprep.subr.bf16.mxu0 0
    %586 = vmatpush2.bf16.msra.mxu0 0
    %587 = vmatprep.subr.bf16.mxu0 0
    %588 = vmatpush2.bf16.msra.mxu0 0
    %589 = vmatprep.subr.bf16.mxu0 0
    %590 = vmatpush2.bf16.msra.mxu0 0
    %591 = vmatprep.subr.bf16.mxu0 0
    %592 = vmatpush2.bf16.msra.mxu0 0
    %593 = vmatprep.mubr.bf16.mxu0 0
    %594 = vmatmul.mubr.bf16.gmra.mxu0 %v556
    %v595 = vpop.f32.mrf.mxu0
    %v596 = vadd.f32 0.0, %v595
    %v597 = vpop.f32.mrf.mxu0
    %v598 = vpop.f32.mrf.mxu0
    %v599 = vpop.f32.mrf.mxu0
    %600 = vdwg.mxu0
    %v601 = vpack.c.bf16 %v596, %v548
    %v602 = vpack.c.bf16 %v369, %v369
    %603 = vrot.lane.b32.xlu0 %v377, 120
    %v604 = vpop.permute.xlu0 %603
    %605 = vrot.lane.b32.xlu0 %v377, 88
    %v606 = vpop.permute.xlu0 %605
    %v608 = vsel %vm381, %v604, 0
    %v611 = vsel %vm381, %v606, 0
    %613 = vmatprep.subr.bf16.mxu0 0
    %614 = vmatpush1.bf16.xpose.msra.mxu0 0
    %615 = vmatprep.subr.bf16.mxu0 0
    %616 = vmatpush1.bf16.xpose.msra.mxu0 0
    %617 = vmatprep.subr.bf16.mxu0 0
    %618 = vmatpush1.bf16.xpose.msra.mxu0 0
    %619 = vmatprep.subr.bf16.mxu0 0
    %620 = vmatpush1.bf16.xpose.msra.mxu0 0
    %621 = vmatprep.subr.bf16.mxu0 0
    %622 = vmatpush1.bf16.xpose.msra.mxu0 0
    %623 = vmatprep.subr.bf16.mxu0 0
    %624 = vmatpush1.bf16.xpose.msra.mxu0 0
    %625 = vmatprep.subr.bf16.mxu0 0
    %626 = vmatpush1.bf16.xpose.msra.mxu0 0
    %627 = vmatprep.subr.bf16.mxu0 0
    %628 = vmatpush1.bf16.xpose.msra.mxu0 %v611
    %629 = vmatprep.subr.bf16.mxu0 0
    %630 = vmatpush2.bf16.xpose.msra.mxu0 0
    %631 = vmatprep.subr.bf16.mxu0 0
    %632 = vmatpush2.bf16.xpose.msra.mxu0 0
    %633 = vmatprep.subr.bf16.mxu0 0
    %634 = vmatpush2.bf16.xpose.msra.mxu0 0
    %635 = vmatprep.subr.bf16.mxu0 0
    %636 = vmatpush2.bf16.xpose.msra.mxu0 0
    %637 = vmatprep.subr.bf16.mxu0 0
    %638 = vmatpush2.bf16.xpose.msra.mxu0 0
    %639 = vmatprep.subr.bf16.mxu0 0
    %640 = vmatpush2.bf16.xpose.msra.mxu0 0
    %641 = vmatprep.subr.bf16.mxu0 0
    %642 = vmatpush2.bf16.xpose.msra.mxu0 0
    %643 = vmatprep.subr.bf16.mxu0 0
    %644 = vmatpush2.bf16.xpose.msra.mxu0 0
    %645 = vmatprep.mubr.bf16.mxu0 0
    %646 = vmatmul.mubr.bf16.gmra.mxu0 %v608
    %v647 = vpop.f32.mrf.mxu0
    %v648 = vadd.f32 0.0, %v647
    %v649 = vpop.f32.mrf.mxu0
    %v650 = vpop.f32.mrf.mxu0
    %v651 = vpop.f32.mrf.mxu0
    %652 = vdwg.mxu0
    %653 = vrot.lane.b32.xlu0 %v378, 120
    %v654 = vpop.permute.xlu0 %653
    %655 = vrot.lane.b32.xlu0 %v378, 88
    %v656 = vpop.permute.xlu0 %655
    %v658 = vsel %vm381, %v654, 0
    %v661 = vsel %vm381, %v656, 0
    %663 = vmatprep.subr.bf16.mxu0 0
    %664 = vmatpush1.bf16.xpose.msra.mxu0 0
    %665 = vmatprep.subr.bf16.mxu0 0
    %666 = vmatpush1.bf16.xpose.msra.mxu0 0
    %667 = vmatprep.subr.bf16.mxu0 0
    %668 = vmatpush1.bf16.xpose.msra.mxu0 0
    %669 = vmatprep.subr.bf16.mxu0 0
    %670 = vmatpush1.bf16.xpose.msra.mxu0 0
    %671 = vmatprep.subr.bf16.mxu0 0
    %672 = vmatpush1.bf16.xpose.msra.mxu0 0
    %673 = vmatprep.subr.bf16.mxu0 0
    %674 = vmatpush1.bf16.xpose.msra.mxu0 0
    %675 = vmatprep.subr.bf16.mxu0 0
    %676 = vmatpush1.bf16.xpose.msra.mxu0 0
    %677 = vmatprep.subr.bf16.mxu0 0
    %678 = vmatpush1.bf16.xpose.msra.mxu0 %v661
    %679 = vmatprep.subr.bf16.mxu0 0
    %680 = vmatpush2.bf16.xpose.msra.mxu0 0
    %681 = vmatprep.subr.bf16.mxu0 0
    %682 = vmatpush2.bf16.xpose.msra.mxu0 0
    %683 = vmatprep.subr.bf16.mxu0 0
    %684 = vmatpush2.bf16.xpose.msra.mxu0 0
    %685 = vmatprep.subr.bf16.mxu0 0
    %686 = vmatpush2.bf16.xpose.msra.mxu0 0
    %687 = vmatprep.subr.bf16.mxu0 0
    %688 = vmatpush2.bf16.xpose.msra.mxu0 0
    %689 = vmatprep.subr.bf16.mxu0 0
    %690 = vmatpush2.bf16.xpose.msra.mxu0 0
    %691 = vmatprep.subr.bf16.mxu0 0
    %692 = vmatpush2.bf16.xpose.msra.mxu0 0
    %693 = vmatprep.subr.bf16.mxu0 0
    %694 = vmatpush2.bf16.xpose.msra.mxu0 0
    %695 = vmatprep.mubr.bf16.mxu0 0
    %696 = vmatmul.mubr.bf16.gmra.mxu0 %v658
    %v697 = vpop.f32.mrf.mxu0
    %v698 = vadd.f32 0.0, %v697
    %v699 = vpop.f32.mrf.mxu0
    %v700 = vpop.f32.mrf.mxu0
    %v701 = vpop.f32.mrf.mxu0
    %702 = vdwg.mxu0
    %v703 = vmul.f32 %v648, 0.35355338
    %v704 = vmul.f32 %v698, 0.35355338
    %v705 = vadd.f32 %v703, %v251
    %v706 = vadd.f32 %v704, %v252
    %v707 = vsel %vm381, %v705, -inf
    %708 = vmax.xlane.f32.xlu0 %v707
    %v709 = vpop.xlane.xlu0 %708
    %v710 = vsel %vm381, %v706, -inf
    %711 = vmax.xlane.f32.xlu0 %v710
    %v712 = vpop.xlane.xlu0 %711
    %v713 = vsub.f32 %v705, %v709
    %v714 = vsub.f32 %v706, %v712
    %v715 = vmul.f32 %v713, 1.442695
    %v716 = vpow.pop %v715
    %v717 = vmul.f32 %v714, 1.442695
    %v718 = vpow.pop %v717
    %v719 = vsel %vm381, %v716, 0.0
    %720 = vadd.xlane.f32.xlu0 %v719
    %v721 = vpop.xlane.xlu0 %720
    %v722 = vsel %vm381, %v718, 0.0
    %723 = vadd.xlane.f32.xlu0 %v722
    %v724 = vpop.xlane.xlu0 %723
    %v725 = vrcp.pop %v721
    %v726 = vrcp.pop %v724
    %v727 = vmul.f32 %v716, %v725
    %v728 = vmul.f32 %v718, %v726
    %v729 = vpack.c.bf16 %v727, %v727
    %v730 = vpack.c.bf16 %v728, %v728
    %731 = vrot.lane.b32.xlu0 %v377, 56
    %v732 = vpop.permute.xlu0 %731
    %v734 = vsel %vm381, %v729, 0
    %v737 = vsel %vm509, %v732, 0
    %739 = vmatprep.subr.bf16.mxu0 0
    %740 = vmatpush1.bf16.msra.mxu0 0
    %741 = vmatprep.subr.bf16.mxu0 0
    %742 = vmatpush1.bf16.msra.mxu0 0
    %743 = vmatprep.subr.bf16.mxu0 0
    %744 = vmatpush1.bf16.msra.mxu0 0
    %745 = vmatprep.subr.bf16.mxu0 0
    %746 = vmatpush1.bf16.msra.mxu0 0
    %747 = vmatprep.subr.bf16.mxu0 0
    %748 = vmatpush1.bf16.msra.mxu0 0
    %749 = vmatprep.subr.bf16.mxu0 0
    %750 = vmatpush1.bf16.msra.mxu0 0
    %751 = vmatprep.subr.bf16.mxu0 0
    %752 = vmatpush1.bf16.msra.mxu0 0
    %753 = vmatprep.subr.bf16.mxu0 0
    %754 = vmatpush1.bf16.msra.mxu0 %v737
    %755 = vmatprep.subr.bf16.mxu0 0
    %756 = vmatpush2.bf16.msra.mxu0 0
    %757 = vmatprep.subr.bf16.mxu0 0
    %758 = vmatpush2.bf16.msra.mxu0 0
    %759 = vmatprep.subr.bf16.mxu0 0
    %760 = vmatpush2.bf16.msra.mxu0 0
    %761 = vmatprep.subr.bf16.mxu0 0
    %762 = vmatpush2.bf16.msra.mxu0 0
    %763 = vmatprep.subr.bf16.mxu0 0
    %764 = vmatpush2.bf16.msra.mxu0 0
    %765 = vmatprep.subr.bf16.mxu0 0
    %766 = vmatpush2.bf16.msra.mxu0 0
    %767 = vmatprep.subr.bf16.mxu0 0
    %768 = vmatpush2.bf16.msra.mxu0 0
    %769 = vmatprep.subr.bf16.mxu0 0
    %770 = vmatpush2.bf16.msra.mxu0 0
    %771 = vmatprep.mubr.bf16.mxu0 0
    %772 = vmatmul.mubr.bf16.gmra.mxu0 %v734
    %v773 = vpop.f32.mrf.mxu0
    %v774 = vadd.f32 0.0, %v773
    %v775 = vpop.f32.mrf.mxu0
    %v776 = vpop.f32.mrf.mxu0
    %v777 = vpop.f32.mrf.mxu0
    %778 = vdwg.mxu0
    %779 = vrot.lane.b32.xlu0 %v378, 56
    %v780 = vpop.permute.xlu0 %779
    %v782 = vsel %vm381, %v730, 0
    %v785 = vsel %vm509, %v780, 0
    %787 = vmatprep.subr.bf16.mxu0 0
    %788 = vmatpush1.bf16.msra.mxu0 0
    %789 = vmatprep.subr.bf16.mxu0 0
    %790 = vmatpush1.bf16.msra.mxu0 0
    %791 = vmatprep.subr.bf16.mxu0 0
    %792 = vmatpush1.bf16.msra.mxu0 0
    %793 = vmatprep.subr.bf16.mxu0 0
    %794 = vmatpush1.bf16.msra.mxu0 0
    %795 = vmatprep.subr.bf16.mxu0 0
    %796 = vmatpush1.bf16.msra.mxu0 0
    %797 = vmatprep.subr.bf16.mxu0 0
    %798 = vmatpush1.bf16.msra.mxu0 0
    %799 = vmatprep.subr.bf16.mxu0 0
    %800 = vmatpush1.bf16.msra.mxu0 0
    %801 = vmatprep.subr.bf16.mxu0 0
    %802 = vmatpush1.bf16.msra.mxu0 %v785
    %803 = vmatprep.subr.bf16.mxu0 0
    %804 = vmatpush2.bf16.msra.mxu0 0
    %805 = vmatprep.subr.bf16.mxu0 0
    %806 = vmatpush2.bf16.msra.mxu0 0
    %807 = vmatprep.subr.bf16.mxu0 0
    %808 = vmatpush2.bf16.msra.mxu0 0
    %809 = vmatprep.subr.bf16.mxu0 0
    %810 = vmatpush2.bf16.msra.mxu0 0
    %811 = vmatprep.subr.bf16.mxu0 0
    %812 = vmatpush2.bf16.msra.mxu0 0
    %813 = vmatprep.subr.bf16.mxu0 0
    %814 = vmatpush2.bf16.msra.mxu0 0
    %815 = vmatprep.subr.bf16.mxu0 0
    %816 = vmatpush2.bf16.msra.mxu0 0
    %817 = vmatprep.subr.bf16.mxu0 0
    %818 = vmatpush2.bf16.msra.mxu0 0
    %819 = vmatprep.mubr.bf16.mxu0 0
    %820 = vmatmul.mubr.bf16.gmra.mxu0 %v782
    %v821 = vpop.f32.mrf.mxu0
    %v822 = vadd.f32 0.0, %v821
    %v823 = vpop.f32.mrf.mxu0
    %v824 = vpop.f32.mrf.mxu0
    %v825 = vpop.f32.mrf.mxu0
    %826 = vdwg.mxu0
    %v827 = vpack.c.bf16 %v822, %v774
    %v828 = vpack.c.bf16 %v370, %v370
    %v830 = vsel %vm381, %v827, 0
    %v833 = vsel %vm509, %v828, 0
    %835 = vmatprep.subr.bf16.mxu0 0
    %836 = vmatpush1.bf16.msra.mxu0 0
    %837 = vmatprep.subr.bf16.mxu0 0
    %838 = vmatpush1.bf16.msra.mxu0 0
    %839 = vmatprep.subr.bf16.mxu0 0
    %840 = vmatpush1.bf16.msra.mxu0 0
    %841 = vmatprep.subr.bf16.mxu0 0
    %842 = vmatpush1.bf16.msra.mxu0 0
    %843 = vmatprep.subr.bf16.mxu0 0
    %844 = vmatpush1.bf16.msra.mxu0 0
    %845 = vmatprep.subr.bf16.mxu0 0
    %846 = vmatpush1.bf16.msra.mxu0 0
    %847 = vmatprep.subr.bf16.mxu0 0
    %848 = vmatpush1.bf16.msra.mxu0 0
    %849 = vmatprep.subr.bf16.mxu0 0
    %850 = vmatpush1.bf16.msra.mxu0 %v833
    %851 = vmatprep.subr.bf16.mxu0 0
    %852 = vmatpush2.bf16.msra.mxu0 0
    %853 = vmatprep.subr.bf16.mxu0 0
    %854 = vmatpush2.bf16.msra.mxu0 0
    %855 = vmatprep.subr.bf16.mxu0 0
    %856 = vmatpush2.bf16.msra.mxu0 0
    %857 = vmatprep.subr.bf16.mxu0 0
    %858 = vmatpush2.bf16.msra.mxu0 0
    %859 = vmatprep.subr.bf16.mxu0 0
    %860 = vmatpush2.bf16.msra.mxu0 0
    %861 = vmatprep.subr.bf16.mxu0 0
    %862 = vmatpush2.bf16.msra.mxu0 0
    %863 = vmatprep.subr.bf16.mxu0 0
    %864 = vmatpush2.bf16.msra.mxu0 0
    %865 = vmatprep.subr.bf16.mxu0 0
    %866 = vmatpush2.bf16.msra.mxu0 0
    %867 = vmatprep.mubr.bf16.mxu0 0
    %868 = vmatmul.mubr.bf16.gmra.mxu0 %v830
    %v869 = vpop.f32.mrf.mxu0
    %v870 = vadd.f32 0.0, %v869
    %v871 = vpop.f32.mrf.mxu0
    %v872 = vpop.f32.mrf.mxu0
    %v873 = vadd.f32 0.0, %v872
    %v874 = vpop.f32.mrf.mxu0
    %875 = vdwg.mxu0
    %v877 = vsel %vm381, %v601, 0
    %v880 = vsel %vm509, %v602, 0
    %882 = vmatprep.subr.bf16.mxu0 0
    %883 = vmatpush1.bf16.msra.mxu0 0
    %884 = vmatprep.subr.bf16.mxu0 0
    %885 = vmatpush1.bf16.msra.mxu0 0
    %886 = vmatprep.subr.bf16.mxu0 0
    %887 = vmatpush1.bf16.msra.mxu0 0
    %888 = vmatprep.subr.bf16.mxu0 0
    %889 = vmatpush1.bf16.msra.mxu0 0
    %890 = vmatprep.subr.bf16.mxu0 0
    %891 = vmatpush1.bf16.msra.mxu0 0
    %892 = vmatprep.subr.bf16.mxu0 0
    %893 = vmatpush1.bf16.msra.mxu0 0
    %894 = vmatprep.subr.bf16.mxu0 0
    %895 = vmatpush1.bf16.msra.mxu0 0
    %896 = vmatprep.subr.bf16.mxu0 0
    %897 = vmatpush1.bf16.msra.mxu0 %v880
    %898 = vmatprep.subr.bf16.mxu0 0
    %899 = vmatpush2.bf16.msra.mxu0 0
    %900 = vmatprep.subr.bf16.mxu0 0
    %901 = vmatpush2.bf16.msra.mxu0 0
    %902 = vmatprep.subr.bf16.mxu0 0
    %903 = vmatpush2.bf16.msra.mxu0 0
    %904 = vmatprep.subr.bf16.mxu0 0
    %905 = vmatpush2.bf16.msra.mxu0 0
    %906 = vmatprep.subr.bf16.mxu0 0
    %907 = vmatpush2.bf16.msra.mxu0 0
    %908 = vmatprep.subr.bf16.mxu0 0
    %909 = vmatpush2.bf16.msra.mxu0 0
    %910 = vmatprep.subr.bf16.mxu0 0
    %911 = vmatpush2.bf16.msra.mxu0 0
    %912 = vmatprep.subr.bf16.mxu0 0
    %913 = vmatpush2.bf16.msra.mxu0 0
    %914 = vmatprep.mubr.bf16.mxu0 0
    %915 = vmatmul.mubr.bf16.gmra.mxu0 %v877
    %v916 = vpop.f32.mrf.mxu0
    %v917 = vadd.f32 %v870, %v916
    %v918 = vpop.f32.mrf.mxu0
    %v919 = vpop.f32.mrf.mxu0
    %v920 = vadd.f32 %v873, %v919
    %v921 = vpop.f32.mrf.mxu0
    %922 = vdwg.mxu0
    %923 = vrot.lane.b32.xlu0 %v377, 112
    %v924 = vpop.permute.xlu0 %923
    %925 = vrot.lane.b32.xlu0 %v377, 80
    %v926 = vpop.permute.xlu0 %925
    %v928 = vsel %vm381, %v924, 0
    %v931 = vsel %vm381, %v926, 0
    %933 = vmatprep.subr.bf16.mxu0 0
    %934 = vmatpush1.bf16.xpose.msra.mxu0 0
    %935 = vmatprep.subr.bf16.mxu0 0
    %936 = vmatpush1.bf16.xpose.msra.mxu0 0
    %937 = vmatprep.subr.bf16.mxu0 0
    %938 = vmatpush1.bf16.xpose.msra.mxu0 0
    %939 = vmatprep.subr.bf16.mxu0 0
    %940 = vmatpush1.bf16.xpose.msra.mxu0 0
    %941 = vmatprep.subr.bf16.mxu0 0
    %942 = vmatpush1.bf16.xpose.msra.mxu0 0
    %943 = vmatprep.subr.bf16.mxu0 0
    %944 = vmatpush1.bf16.xpose.msra.mxu0 0
    %945 = vmatprep.subr.bf16.mxu0 0
    %946 = vmatpush1.bf16.xpose.msra.mxu0 0
    %947 = vmatprep.subr.bf16.mxu0 0
    %948 = vmatpush1.bf16.xpose.msra.mxu0 %v931
    %949 = vmatprep.subr.bf16.mxu0 0
    %950 = vmatpush2.bf16.xpose.msra.mxu0 0
    %951 = vmatprep.subr.bf16.mxu0 0
    %952 = vmatpush2.bf16.xpose.msra.mxu0 0
    %953 = vmatprep.subr.bf16.mxu0 0
    %954 = vmatpush2.bf16.xpose.msra.mxu0 0
    %955 = vmatprep.subr.bf16.mxu0 0
    %956 = vmatpush2.bf16.xpose.msra.mxu0 0
    %957 = vmatprep.subr.bf16.mxu0 0
    %958 = vmatpush2.bf16.xpose.msra.mxu0 0
    %959 = vmatprep.subr.bf16.mxu0 0
    %960 = vmatpush2.bf16.xpose.msra.mxu0 0
    %961 = vmatprep.subr.bf16.mxu0 0
    %962 = vmatpush2.bf16.xpose.msra.mxu0 0
    %963 = vmatprep.subr.bf16.mxu0 0
    %964 = vmatpush2.bf16.xpose.msra.mxu0 0
    %965 = vmatprep.mubr.bf16.mxu0 0
    %966 = vmatmul.mubr.bf16.gmra.mxu0 %v928
    %v967 = vpop.f32.mrf.mxu0
    %v968 = vadd.f32 0.0, %v967
    %v969 = vpop.f32.mrf.mxu0
    %v970 = vpop.f32.mrf.mxu0
    %v971 = vpop.f32.mrf.mxu0
    %972 = vdwg.mxu0
    %973 = vrot.lane.b32.xlu0 %v378, 112
    %v974 = vpop.permute.xlu0 %973
    %975 = vrot.lane.b32.xlu0 %v378, 80
    %v976 = vpop.permute.xlu0 %975
    %v978 = vsel %vm381, %v974, 0
    %v981 = vsel %vm381, %v976, 0
    %983 = vmatprep.subr.bf16.mxu0 0
    %984 = vmatpush1.bf16.xpose.msra.mxu0 0
    %985 = vmatprep.subr.bf16.mxu0 0
    %986 = vmatpush1.bf16.xpose.msra.mxu0 0
    %987 = vmatprep.subr.bf16.mxu0 0
    %988 = vmatpush1.bf16.xpose.msra.mxu0 0
    %989 = vmatprep.subr.bf16.mxu0 0
    %990 = vmatpush1.bf16.xpose.msra.mxu0 0
    %991 = vmatprep.subr.bf16.mxu0 0
    %992 = vmatpush1.bf16.xpose.msra.mxu0 0
    %993 = vmatprep.subr.bf16.mxu0 0
    %994 = vmatpush1.bf16.xpose.msra.mxu0 0
    %995 = vmatprep.subr.bf16.mxu0 0
    %996 = vmatpush1.bf16.xpose.msra.mxu0 0
    %997 = vmatprep.subr.bf16.mxu0 0
    %998 = vmatpush1.bf16.xpose.msra.mxu0 %v981
    %999 = vmatprep.subr.bf16.mxu0 0
    %1000 = vmatpush2.bf16.xpose.msra.mxu0 0
    %1001 = vmatprep.subr.bf16.mxu0 0
    %1002 = vmatpush2.bf16.xpose.msra.mxu0 0
    %1003 = vmatprep.subr.bf16.mxu0 0
    %1004 = vmatpush2.bf16.xpose.msra.mxu0 0
    %1005 = vmatprep.subr.bf16.mxu0 0
    %1006 = vmatpush2.bf16.xpose.msra.mxu0 0
    %1007 = vmatprep.subr.bf16.mxu0 0
    %1008 = vmatpush2.bf16.xpose.msra.mxu0 0
    %1009 = vmatprep.subr.bf16.mxu0 0
    %1010 = vmatpush2.bf16.xpose.msra.mxu0 0
    %1011 = vmatprep.subr.bf16.mxu0 0
    %1012 = vmatpush2.bf16.xpose.msra.mxu0 0
    %1013 = vmatprep.subr.bf16.mxu0 0
    %1014 = vmatpush2.bf16.xpose.msra.mxu0 0
    %1015 = vmatprep.mubr.bf16.mxu0 0
    %1016 = vmatmul.mubr.bf16.gmra.mxu0 %v978
    %v1017 = vpop.f32.mrf.mxu0
    %v1018 = vadd.f32 0.0, %v1017
    %v1019 = vpop.f32.mrf.mxu0
    %v1020 = vpop.f32.mrf.mxu0
    %v1021 = vpop.f32.mrf.mxu0
    %1022 = vdwg.mxu0
    %v1023 = vmul.f32 %v968, 0.35355338
    %v1024 = vmul.f32 %v1018, 0.35355338
    %v1025 = vadd.f32 %v1023, %v251
    %v1026 = vadd.f32 %v1024, %v252
    %v1027 = vsel %vm381, %v1025, -inf
    %1028 = vmax.xlane.f32.xlu0 %v1027
    %v1029 = vpop.xlane.xlu0 %1028
    %v1030 = vsel %vm381, %v1026, -inf
    %1031 = vmax.xlane.f32.xlu0 %v1030
    %v1032 = vpop.xlane.xlu0 %1031
    %v1033 = vsub.f32 %v1025, %v1029
    %v1034 = vsub.f32 %v1026, %v1032
    %v1035 = vmul.f32 %v1033, 1.442695
    %v1036 = vpow.pop %v1035
    %v1037 = vmul.f32 %v1034, 1.442695
    %v1038 = vpow.pop %v1037
    %v1039 = vsel %vm381, %v1036, 0.0
    %1040 = vadd.xlane.f32.xlu0 %v1039
    %v1041 = vpop.xlane.xlu0 %1040
    %v1042 = vsel %vm381, %v1038, 0.0
    %1043 = vadd.xlane.f32.xlu0 %v1042
    %v1044 = vpop.xlane.xlu0 %1043
    %v1045 = vrcp.pop %v1041
    %v1046 = vrcp.pop %v1044
    %v1047 = vmul.f32 %v1036, %v1045
    %v1048 = vmul.f32 %v1038, %v1046
    %v1049 = vpack.c.bf16 %v1047, %v1047
    %v1050 = vpack.c.bf16 %v1048, %v1048
    %1051 = vrot.lane.b32.xlu0 %v377, 48
    %v1052 = vpop.permute.xlu0 %1051
    %v1054 = vsel %vm381, %v1049, 0
    %v1057 = vsel %vm509, %v1052, 0
    %1059 = vmatprep.subr.bf16.mxu0 0
    %1060 = vmatpush1.bf16.msra.mxu0 0
    %1061 = vmatprep.subr.bf16.mxu0 0
    %1062 = vmatpush1.bf16.msra.mxu0 0
    %1063 = vmatprep.subr.bf16.mxu0 0
    %1064 = vmatpush1.bf16.msra.mxu0 0
    %1065 = vmatprep.subr.bf16.mxu0 0
    %1066 = vmatpush1.bf16.msra.mxu0 0
    %1067 = vmatprep.subr.bf16.mxu0 0
    %1068 = vmatpush1.bf16.msra.mxu0 0
    %1069 = vmatprep.subr.bf16.mxu0 0
    %1070 = vmatpush1.bf16.msra.mxu0 0
    %1071 = vmatprep.subr.bf16.mxu0 0
    %1072 = vmatpush1.bf16.msra.mxu0 0
    %1073 = vmatprep.subr.bf16.mxu0 0
    %1074 = vmatpush1.bf16.msra.mxu0 %v1057
    %1075 = vmatprep.subr.bf16.mxu0 0
    %1076 = vmatpush2.bf16.msra.mxu0 0
    %1077 = vmatprep.subr.bf16.mxu0 0
    %1078 = vmatpush2.bf16.msra.mxu0 0
    %1079 = vmatprep.subr.bf16.mxu0 0
    %1080 = vmatpush2.bf16.msra.mxu0 0
    %1081 = vmatprep.subr.bf16.mxu0 0
    %1082 = vmatpush2.bf16.msra.mxu0 0
    %1083 = vmatprep.subr.bf16.mxu0 0
    %1084 = vmatpush2.bf16.msra.mxu0 0
    %1085 = vmatprep.subr.bf16.mxu0 0
    %1086 = vmatpush2.bf16.msra.mxu0 0
    %1087 = vmatprep.subr.bf16.mxu0 0
    %1088 = vmatpush2.bf16.msra.mxu0 0
    %1089 = vmatprep.subr.bf16.mxu0 0
    %1090 = vmatpush2.bf16.msra.mxu0 0
    %1091 = vmatprep.mubr.bf16.mxu0 0
    %1092 = vmatmul.mubr.bf16.gmra.mxu0 %v1054
    %v1093 = vpop.f32.mrf.mxu0
    %v1094 = vadd.f32 0.0, %v1093
    %v1095 = vpop.f32.mrf.mxu0
    %v1096 = vpop.f32.mrf.mxu0
    %v1097 = vpop.f32.mrf.mxu0
    %1098 = vdwg.mxu0
    %1099 = vrot.lane.b32.xlu0 %v378, 48
    %v1100 = vpop.permute.xlu0 %1099
    %v1102 = vsel %vm381, %v1050, 0
    %v1105 = vsel %vm509, %v1100, 0
    %1107 = vmatprep.subr.bf16.mxu0 0
    %1108 = vmatpush1.bf16.msra.mxu0 0
    %1109 = vmatprep.subr.bf16.mxu0 0
    %1110 = vmatpush1.bf16.msra.mxu0 0
    %1111 = vmatprep.subr.bf16.mxu0 0
    %1112 = vmatpush1.bf16.msra.mxu0 0
    %1113 = vmatprep.subr.bf16.mxu0 0
    %1114 = vmatpush1.bf16.msra.mxu0 0
    %1115 = vmatprep.subr.bf16.mxu0 0
    %1116 = vmatpush1.bf16.msra.mxu0 0
    %1117 = vmatprep.subr.bf16.mxu0 0
    %1118 = vmatpush1.bf16.msra.mxu0 0
    %1119 = vmatprep.subr.bf16.mxu0 0
    %1120 = vmatpush1.bf16.msra.mxu0 0
    %1121 = vmatprep.subr.bf16.mxu0 0
    %1122 = vmatpush1.bf16.msra.mxu0 %v1105
    %1123 = vmatprep.subr.bf16.mxu0 0
    %1124 = vmatpush2.bf16.msra.mxu0 0
    %1125 = vmatprep.subr.bf16.mxu0 0
    %1126 = vmatpush2.bf16.msra.mxu0 0
    %1127 = vmatprep.subr.bf16.mxu0 0
    %1128 = vmatpush2.bf16.msra.mxu0 0
    %1129 = vmatprep.subr.bf16.mxu0 0
    %1130 = vmatpush2.bf16.msra.mxu0 0
    %1131 = vmatprep.subr.bf16.mxu0 0
    %1132 = vmatpush2.bf16.msra.mxu0 0
    %1133 = vmatprep.subr.bf16.mxu0 0
    %1134 = vmatpush2.bf16.msra.mxu0 0
    %1135 = vmatprep.subr.bf16.mxu0 0
    %1136 = vmatpush2.bf16.msra.mxu0 0
    %1137 = vmatprep.subr.bf16.mxu0 0
    %1138 = vmatpush2.bf16.msra.mxu0 0
    %1139 = vmatprep.mubr.bf16.mxu0 0
    %1140 = vmatmul.mubr.bf16.gmra.mxu0 %v1102
    %v1141 = vpop.f32.mrf.mxu0
    %v1142 = vadd.f32 0.0, %v1141
    %v1143 = vpop.f32.mrf.mxu0
    %v1144 = vpop.f32.mrf.mxu0
    %v1145 = vpop.f32.mrf.mxu0
    %1146 = vdwg.mxu0
    %v1147 = vpack.c.bf16 %v1142, %v1094
    %v1148 = vpack.c.bf16 %v371, %v371
    %v1150 = vsel %vm381, %v1147, 0
    %v1153 = vsel %vm509, %v1148, 0
    %1155 = vmatprep.subr.bf16.mxu0 0
    %1156 = vmatpush1.bf16.msra.mxu0 0
    %1157 = vmatprep.subr.bf16.mxu0 0
    %1158 = vmatpush1.bf16.msra.mxu0 0
    %1159 = vmatprep.subr.bf16.mxu0 0
    %1160 = vmatpush1.bf16.msra.mxu0 0
    %1161 = vmatprep.subr.bf16.mxu0 0
    %1162 = vmatpush1.bf16.msra.mxu0 0
    %1163 = vmatprep.subr.bf16.mxu0 0
    %1164 = vmatpush1.bf16.msra.mxu0 0
    %1165 = vmatprep.subr.bf16.mxu0 0
    %1166 = vmatpush1.bf16.msra.mxu0 0
    %1167 = vmatprep.subr.bf16.mxu0 0
    %1168 = vmatpush1.bf16.msra.mxu0 0
    %1169 = vmatprep.subr.bf16.mxu0 0
    %1170 = vmatpush1.bf16.msra.mxu0 %v1153
    %1171 = vmatprep.subr.bf16.mxu0 0
    %1172 = vmatpush2.bf16.msra.mxu0 0
    %1173 = vmatprep.subr.bf16.mxu0 0
    %1174 = vmatpush2.bf16.msra.mxu0 0
    %1175 = vmatprep.subr.bf16.mxu0 0
    %1176 = vmatpush2.bf16.msra.mxu0 0
    %1177 = vmatprep.subr.bf16.mxu0 0
    %1178 = vmatpush2.bf16.msra.mxu0 0
    %1179 = vmatprep.subr.bf16.mxu0 0
    %1180 = vmatpush2.bf16.msra.mxu0 0
    %1181 = vmatprep.subr.bf16.mxu0 0
    %1182 = vmatpush2.bf16.msra.mxu0 0
    %1183 = vmatprep.subr.bf16.mxu0 0
    %1184 = vmatpush2.bf16.msra.mxu0 0
    %1185 = vmatprep.subr.bf16.mxu0 0
    %1186 = vmatpush2.bf16.msra.mxu0 0
    %1187 = vmatprep.mubr.bf16.mxu0 0
    %1188 = vmatmul.mubr.bf16.gmra.mxu0 %v1150
    %v1189 = vpop.f32.mrf.mxu0
    %v1190 = vadd.f32 0.0, %v1189
    %v1191 = vpop.f32.mrf.mxu0
    %v1192 = vpop.f32.mrf.mxu0
    %v1193 = vadd.f32 0.0, %v1192
    %v1194 = vpop.f32.mrf.mxu0
    %1195 = vdwg.mxu0
    %v1196 = vadd.f32 %v917, %v1190
    %v1197 = vadd.f32 %v920, %v1193
    %1198 = vrot.lane.b32.xlu0 %v377, 104
    %v1199 = vpop.permute.xlu0 %1198
    %1200 = vrot.lane.b32.xlu0 %v377, 72
    %v1201 = vpop.permute.xlu0 %1200
    %v1203 = vsel %vm381, %v1199, 0
    %v1206 = vsel %vm381, %v1201, 0
    %1208 = vmatprep.subr.bf16.mxu0 0
    %1209 = vmatpush1.bf16.xpose.msra.mxu0 0
    %1210 = vmatprep.subr.bf16.mxu0 0
    %1211 = vmatpush1.bf16.xpose.msra.mxu0 0
    %1212 = vmatprep.subr.bf16.mxu0 0
    %1213 = vmatpush1.bf16.xpose.msra.mxu0 0
    %1214 = vmatprep.subr.bf16.mxu0 0
    %1215 = vmatpush1.bf16.xpose.msra.mxu0 0
    %1216 = vmatprep.subr.bf16.mxu0 0
    %1217 = vmatpush1.bf16.xpose.msra.mxu0 0
    %1218 = vmatprep.subr.bf16.mxu0 0
    %1219 = vmatpush1.bf16.xpose.msra.mxu0 0
    %1220 = vmatprep.subr.bf16.mxu0 0
    %1221 = vmatpush1.bf16.xpose.msra.mxu0 0
    %1222 = vmatprep.subr.bf16.mxu0 0
    %1223 = vmatpush1.bf16.xpose.msra.mxu0 %v1206
    %1224 = vmatprep.subr.bf16.mxu0 0
    %1225 = vmatpush2.bf16.xpose.msra.mxu0 0
    %1226 = vmatprep.subr.bf16.mxu0 0
    %1227 = vmatpush2.bf16.xpose.msra.mxu0 0
    %1228 = vmatprep.subr.bf16.mxu0 0
    %1229 = vmatpush2.bf16.xpose.msra.mxu0 0
    %1230 = vmatprep.subr.bf16.mxu0 0
    %1231 = vmatpush2.bf16.xpose.msra.mxu0 0
    %1232 = vmatprep.subr.bf16.mxu0 0
    %1233 = vmatpush2.bf16.xpose.msra.mxu0 0
    %1234 = vmatprep.subr.bf16.mxu0 0
    %1235 = vmatpush2.bf16.xpose.msra.mxu0 0
    %1236 = vmatprep.subr.bf16.mxu0 0
    %1237 = vmatpush2.bf16.xpose.msra.mxu0 0
    %1238 = vmatprep.subr.bf16.mxu0 0
    %1239 = vmatpush2.bf16.xpose.msra.mxu0 0
    %1240 = vmatprep.mubr.bf16.mxu0 0
    %1241 = vmatmul.mubr.bf16.gmra.mxu0 %v1203
    %v1242 = vpop.f32.mrf.mxu0
    %v1243 = vadd.f32 0.0, %v1242
    %v1244 = vpop.f32.mrf.mxu0
    %v1245 = vpop.f32.mrf.mxu0
    %v1246 = vpop.f32.mrf.mxu0
    %1247 = vdwg.mxu0
    %1248 = vrot.lane.b32.xlu0 %v378, 104
    %v1249 = vpop.permute.xlu0 %1248
    %1250 = vrot.lane.b32.xlu0 %v378, 72
    %v1251 = vpop.permute.xlu0 %1250
    %v1253 = vsel %vm381, %v1249, 0
    %v1256 = vsel %vm381, %v1251, 0
    %1258 = vmatprep.subr.bf16.mxu0 0
    %1259 = vmatpush1.bf16.xpose.msra.mxu0 0
    %1260 = vmatprep.subr.bf16.mxu0 0
    %1261 = vmatpush1.bf16.xpose.msra.mxu0 0
    %1262 = vmatprep.subr.bf16.mxu0 0
    %1263 = vmatpush1.bf16.xpose.msra.mxu0 0
    %1264 = vmatprep.subr.bf16.mxu0 0
    %1265 = vmatpush1.bf16.xpose.msra.mxu0 0
    %1266 = vmatprep.subr.bf16.mxu0 0
    %1267 = vmatpush1.bf16.xpose.msra.mxu0 0
    %1268 = vmatprep.subr.bf16.mxu0 0
    %1269 = vmatpush1.bf16.xpose.msra.mxu0 0
    %1270 = vmatprep.subr.bf16.mxu0 0
    %1271 = vmatpush1.bf16.xpose.msra.mxu0 0
    %1272 = vmatprep.subr.bf16.mxu0 0
    %1273 = vmatpush1.bf16.xpose.msra.mxu0 %v1256
    %1274 = vmatprep.subr.bf16.mxu0 0
    %1275 = vmatpush2.bf16.xpose.msra.mxu0 0
    %1276 = vmatprep.subr.bf16.mxu0 0
    %1277 = vmatpush2.bf16.xpose.msra.mxu0 0
    %1278 = vmatprep.subr.bf16.mxu0 0
    %1279 = vmatpush2.bf16.xpose.msra.mxu0 0
    %1280 = vmatprep.subr.bf16.mxu0 0
    %1281 = vmatpush2.bf16.xpose.msra.mxu0 0
    %1282 = vmatprep.subr.bf16.mxu0 0
    %1283 = vmatpush2.bf16.xpose.msra.mxu0 0
    %1284 = vmatprep.subr.bf16.mxu0 0
    %1285 = vmatpush2.bf16.xpose.msra.mxu0 0
    %1286 = vmatprep.subr.bf16.mxu0 0
    %1287 = vmatpush2.bf16.xpose.msra.mxu0 0
    %1288 = vmatprep.subr.bf16.mxu0 0
    %1289 = vmatpush2.bf16.xpose.msra.mxu0 0
    %1290 = vmatprep.mubr.bf16.mxu0 0
    %1291 = vmatmul.mubr.bf16.gmra.mxu0 %v1253
    %v1292 = vpop.f32.mrf.mxu0
    %v1293 = vadd.f32 0.0, %v1292
    %v1294 = vpop.f32.mrf.mxu0
    %v1295 = vpop.f32.mrf.mxu0
    %v1296 = vpop.f32.mrf.mxu0
    %1297 = vdwg.mxu0
    %v1298 = vmul.f32 %v1243, 0.35355338
    %v1299 = vmul.f32 %v1293, 0.35355338
    %v1300 = vadd.f32 %v1298, %v251
    %v1301 = vadd.f32 %v1299, %v252
    %v1302 = vsel %vm381, %v1300, -inf
    %1303 = vmax.xlane.f32.xlu0 %v1302
    %v1304 = vpop.xlane.xlu0 %1303
    %v1305 = vsel %vm381, %v1301, -inf
    %1306 = vmax.xlane.f32.xlu0 %v1305
    %v1307 = vpop.xlane.xlu0 %1306
    %v1308 = vsub.f32 %v1300, %v1304
    %v1309 = vsub.f32 %v1301, %v1307
    %v1310 = vmul.f32 %v1308, 1.442695
    %v1311 = vpow.pop %v1310
    %v1312 = vmul.f32 %v1309, 1.442695
    %v1313 = vpow.pop %v1312
    %v1314 = vsel %vm381, %v1311, 0.0
    %1315 = vadd.xlane.f32.xlu0 %v1314
    %v1316 = vpop.xlane.xlu0 %1315
    %v1317 = vsel %vm381, %v1313, 0.0
    %1318 = vadd.xlane.f32.xlu0 %v1317
    %v1319 = vpop.xlane.xlu0 %1318
    %v1320 = vrcp.pop %v1316
    %v1321 = vrcp.pop %v1319
    %v1322 = vmul.f32 %v1311, %v1320
    %v1323 = vmul.f32 %v1313, %v1321
    %v1324 = vpack.c.bf16 %v1322, %v1322
    %v1325 = vpack.c.bf16 %v1323, %v1323
    %1326 = vrot.lane.b32.xlu0 %v377, 40
    %v1327 = vpop.permute.xlu0 %1326
    %v1329 = vsel %vm381, %v1324, 0
    %v1332 = vsel %vm509, %v1327, 0
    %1334 = vmatprep.subr.bf16.mxu0 0
    %1335 = vmatpush1.bf16.msra.mxu0 0
    %1336 = vmatprep.subr.bf16.mxu0 0
    %1337 = vmatpush1.bf16.msra.mxu0 0
    %1338 = vmatprep.subr.bf16.mxu0 0
    %1339 = vmatpush1.bf16.msra.mxu0 0
    %1340 = vmatprep.subr.bf16.mxu0 0
    %1341 = vmatpush1.bf16.msra.mxu0 0
    %1342 = vmatprep.subr.bf16.mxu0 0
    %1343 = vmatpush1.bf16.msra.mxu0 0
    %1344 = vmatprep.subr.bf16.mxu0 0
    %1345 = vmatpush1.bf16.msra.mxu0 0
    %1346 = vmatprep.subr.bf16.mxu0 0
    %1347 = vmatpush1.bf16.msra.mxu0 0
    %1348 = vmatprep.subr.bf16.mxu0 0
    %1349 = vmatpush1.bf16.msra.mxu0 %v1332
    %1350 = vmatprep.subr.bf16.mxu0 0
    %1351 = vmatpush2.bf16.msra.mxu0 0
    %1352 = vmatprep.subr.bf16.mxu0 0
    %1353 = vmatpush2.bf16.msra.mxu0 0
    %1354 = vmatprep.subr.bf16.mxu0 0
    %1355 = vmatpush2.bf16.msra.mxu0 0
    %1356 = vmatprep.subr.bf16.mxu0 0
    %1357 = vmatpush2.bf16.msra.mxu0 0
    %1358 = vmatprep.subr.bf16.mxu0 0
    %1359 = vmatpush2.bf16.msra.mxu0 0
    %1360 = vmatprep.subr.bf16.mxu0 0
    %1361 = vmatpush2.bf16.msra.mxu0 0
    %1362 = vmatprep.subr.bf16.mxu0 0
    %1363 = vmatpush2.bf16.msra.mxu0 0
    %1364 = vmatprep.subr.bf16.mxu0 0
    %1365 = vmatpush2.bf16.msra.mxu0 0
    %1366 = vmatprep.mubr.bf16.mxu0 0
    %1367 = vmatmul.mubr.bf16.gmra.mxu0 %v1329
    %v1368 = vpop.f32.mrf.mxu0
    %v1369 = vadd.f32 0.0, %v1368
    %v1370 = vpop.f32.mrf.mxu0
    %v1371 = vpop.f32.mrf.mxu0
    %v1372 = vpop.f32.mrf.mxu0
    %1373 = vdwg.mxu0
    %1374 = vrot.lane.b32.xlu0 %v378, 40
    %v1375 = vpop.permute.xlu0 %1374
    %v1377 = vsel %vm381, %v1325, 0
    %v1380 = vsel %vm509, %v1375, 0
    %1382 = vmatprep.subr.bf16.mxu0 0
    %1383 = vmatpush1.bf16.msra.mxu0 0
    %1384 = vmatprep.subr.bf16.mxu0 0
    %1385 = vmatpush1.bf16.msra.mxu0 0
    %1386 = vmatprep.subr.bf16.mxu0 0
    %1387 = vmatpush1.bf16.msra.mxu0 0
    %1388 = vmatprep.subr.bf16.mxu0 0
    %1389 = vmatpush1.bf16.msra.mxu0 0
    %1390 = vmatprep.subr.bf16.mxu0 0
    %1391 = vmatpush1.bf16.msra.mxu0 0
    %1392 = vmatprep.subr.bf16.mxu0 0
    %1393 = vmatpush1.bf16.msra.mxu0 0
    %1394 = vmatprep.subr.bf16.mxu0 0
    %1395 = vmatpush1.bf16.msra.mxu0 0
    %1396 = vmatprep.subr.bf16.mxu0 0
    %1397 = vmatpush1.bf16.msra.mxu0 %v1380
    %1398 = vmatprep.subr.bf16.mxu0 0
    %1399 = vmatpush2.bf16.msra.mxu0 0
    %1400 = vmatprep.subr.bf16.mxu0 0
    %1401 = vmatpush2.bf16.msra.mxu0 0
    %1402 = vmatprep.subr.bf16.mxu0 0
    %1403 = vmatpush2.bf16.msra.mxu0 0
    %1404 = vmatprep.subr.bf16.mxu0 0
    %1405 = vmatpush2.bf16.msra.mxu0 0
    %1406 = vmatprep.subr.bf16.mxu0 0
    %1407 = vmatpush2.bf16.msra.mxu0 0
    %1408 = vmatprep.subr.bf16.mxu0 0
    %1409 = vmatpush2.bf16.msra.mxu0 0
    %1410 = vmatprep.subr.bf16.mxu0 0
    %1411 = vmatpush2.bf16.msra.mxu0 0
    %1412 = vmatprep.subr.bf16.mxu0 0
    %1413 = vmatpush2.bf16.msra.mxu0 0
    %1414 = vmatprep.mubr.bf16.mxu0 0
    %1415 = vmatmul.mubr.bf16.gmra.mxu0 %v1377
    %v1416 = vpop.f32.mrf.mxu0
    %v1417 = vadd.f32 0.0, %v1416
    %v1418 = vpop.f32.mrf.mxu0
    %v1419 = vpop.f32.mrf.mxu0
    %v1420 = vpop.f32.mrf.mxu0
    %1421 = vdwg.mxu0
    %v1422 = vpack.c.bf16 %v1417, %v1369
    %v1423 = vpack.c.bf16 %v372, %v372
    %v1425 = vsel %vm381, %v1422, 0
    %v1428 = vsel %vm509, %v1423, 0
    %1430 = vmatprep.subr.bf16.mxu0 0
    %1431 = vmatpush1.bf16.msra.mxu0 0
    %1432 = vmatprep.subr.bf16.mxu0 0
    %1433 = vmatpush1.bf16.msra.mxu0 0
    %1434 = vmatprep.subr.bf16.mxu0 0
    %1435 = vmatpush1.bf16.msra.mxu0 0
    %1436 = vmatprep.subr.bf16.mxu0 0
    %1437 = vmatpush1.bf16.msra.mxu0 0
    %1438 = vmatprep.subr.bf16.mxu0 0
    %1439 = vmatpush1.bf16.msra.mxu0 0
    %1440 = vmatprep.subr.bf16.mxu0 0
    %1441 = vmatpush1.bf16.msra.mxu0 0
    %1442 = vmatprep.subr.bf16.mxu0 0
    %1443 = vmatpush1.bf16.msra.mxu0 0
    %1444 = vmatprep.subr.bf16.mxu0 0
    %1445 = vmatpush1.bf16.msra.mxu0 %v1428
    %1446 = vmatprep.subr.bf16.mxu0 0
    %1447 = vmatpush2.bf16.msra.mxu0 0
    %1448 = vmatprep.subr.bf16.mxu0 0
    %1449 = vmatpush2.bf16.msra.mxu0 0
    %1450 = vmatprep.subr.bf16.mxu0 0
    %1451 = vmatpush2.bf16.msra.mxu0 0
    %1452 = vmatprep.subr.bf16.mxu0 0
    %1453 = vmatpush2.bf16.msra.mxu0 0
    %1454 = vmatprep.subr.bf16.mxu0 0
    %1455 = vmatpush2.bf16.msra.mxu0 0
    %1456 = vmatprep.subr.bf16.mxu0 0
    %1457 = vmatpush2.bf16.msra.mxu0 0
    %1458 = vmatprep.subr.bf16.mxu0 0
    %1459 = vmatpush2.bf16.msra.mxu0 0
    %1460 = vmatprep.subr.bf16.mxu0 0
    %1461 = vmatpush2.bf16.msra.mxu0 0
    %1462 = vmatprep.mubr.bf16.mxu0 0
    %1463 = vmatmul.mubr.bf16.gmra.mxu0 %v1425
    %v1464 = vpop.f32.mrf.mxu0
    %v1465 = vadd.f32 0.0, %v1464
    %v1466 = vpop.f32.mrf.mxu0
    %v1467 = vpop.f32.mrf.mxu0
    %v1468 = vadd.f32 0.0, %v1467
    %v1469 = vpop.f32.mrf.mxu0
    %1470 = vdwg.mxu0
    %v1471 = vadd.f32 %v1196, %v1465
    %v1472 = vadd.f32 %v1197, %v1468
    %v1473 = vld [vmem:[#allocation11] sm:$0x1]
    %v1475 = vlaneseq
    %v1476 = vshrl.u32 %v1475, 7
    %v1477 = vsub.s32 0, %v1476
    %v1478 = vrot.slane %v1473, %v1477
    %v1480 = vadd.f32 %v1471, %v1478
    %v1481 = vadd.f32 %v1472, %v1478
    %v1482 = vadd.f32 %v299, %v1480
    %v1483 = vadd.f32 %v300, %v1481
    %v1484 = vld [vmem:[#allocation13] sm:$0x1]
    %v1485 = vld [vmem:[#allocation14] sm:$0x1]
    %v1486 = vsel %vm257, %v1482, 0.0
    %1487 = vadd.xlane.f32.xlu0 %v1486
    %v1488 = vpop.xlane.xlu0 %1487
    %v1489 = vsel %vm257, %v1483, 0.0
    %1490 = vadd.xlane.f32.xlu0 %v1489
    %v1491 = vpop.xlane.xlu0 %1490
    %v1492 = vmul.f32 %v1488, %v264
    %v1493 = vmul.f32 %v1491, %v264
    %v1494 = vsub.f32 %v1482, %v1492
    %v1495 = vsub.f32 %v1483, %v1493
    %v1496 = vmul.f32 %v1494, %v1494
    %v1497 = vmul.f32 %v1495, %v1495
    %v1498 = vsel %vm257, %v1496, 0.0
    %1499 = vadd.xlane.f32.xlu0 %v1498
    %v1500 = vpop.xlane.xlu0 %1499
    %v1501 = vsel %vm257, %v1497, 0.0
    %1502 = vadd.xlane.f32.xlu0 %v1501
    %v1503 = vpop.xlane.xlu0 %1502
    %v1504 = vmul.f32 %v1500, %v264
    %v1505 = vmul.f32 %v1503, %v264
    %v1506 = vadd.f32 %v1504, 1e-12
    %v1507 = vadd.f32 %v1505, 1e-12
    %v1508 = vrsqrt.pop %v1506
    %v1509 = vrsqrt.pop %v1507
    %v1510 = vmul.f32 %v1494, %v1508
    %v1511 = vmul.f32 %v1495, %v1509
    %v1513 = vlaneseq
    %v1514 = vshrl.u32 %v1513, 7
    %v1515 = vsub.s32 0, %v1514
    %v1516 = vrot.slane %v1484, %v1515
    %v1518 = vmul.f32 %v1510, %v1516
    %v1519 = vmul.f32 %v1511, %v1516
    %v1521 = vlaneseq
    %v1522 = vshrl.u32 %v1521, 7
    %v1523 = vsub.s32 0, %v1522
    %v1524 = vrot.slane %v1485, %v1523
    %v1526 = vadd.f32 %v1518, %v1524
    %v1527 = vadd.f32 %v1519, %v1524
    %v1528 = vpack.c.bf16 %v1527, %v1526
    %v1529 = vld [vmem:[#allocation16] sm:$0xf]
    %v1530 = vld [vmem:[#allocation16 + $0x4] sm:$0xf]
    %v1531 = vld [vmem:[#allocation16 + $0x8] sm:$0xf]
    %v1532 = vld [vmem:[#allocation16 + $0xc] sm:$0xf]
    %v1533 = vld [vmem:[#allocation17] sm:$0x1]
    %v1535 = vlaneseq
    %v1536 = vshrl.u32 %v1535, 7
    %v1537 = vsub.s32 0, %v1536
    %v1538 = vrot.slane %v1533, %v1537
    %v1544 = vunpack.c.l.b16 %v1529
    %v1545 = vunpack.c.l.b16 %v1530
    %v1546 = vunpack.c.l.b16 %v1531
    %v1547 = vunpack.c.l.b16 %v1532
    %v1548 = vpack.c.b16 %v1545, %v1544
    %v1549 = vpack.c.b16 %v1547, %v1546
    %v1553 = vsel %vm257, %v1528, 0
    %1555 = vmatprep.subr.bf16.mxu0 0
    %1556 = vmatpush1.bf16.msra.mxu0 0
    %1557 = vmatprep.subr.bf16.mxu0 0
    %1558 = vmatpush1.bf16.msra.mxu0 0
    %1559 = vmatprep.subr.bf16.mxu0 0
    %1560 = vmatpush1.bf16.msra.mxu0 0
    %1561 = vmatprep.subr.bf16.mxu0 0
    %1562 = vmatpush1.bf16.msra.mxu0 0
    %1563 = vmatprep.subr.bf16.mxu0 0
    %1564 = vmatpush1.bf16.msra.mxu0 0
    %1565 = vmatprep.subr.bf16.mxu0 0
    %1566 = vmatpush1.bf16.msra.mxu0 0
    %1567 = vmatprep.subr.bf16.mxu0 0
    %1568 = vmatpush1.bf16.msra.mxu0 %v1549
    %1569 = vmatprep.subr.bf16.mxu0 0
    %1570 = vmatpush1.bf16.msra.mxu0 %v1548
    %1571 = vmatprep.subr.bf16.mxu0 0
    %1572 = vmatpush2.bf16.msra.mxu0 0
    %1573 = vmatprep.subr.bf16.mxu0 0
    %1574 = vmatpush2.bf16.msra.mxu0 0
    %1575 = vmatprep.subr.bf16.mxu0 0
    %1576 = vmatpush2.bf16.msra.mxu0 0
    %1577 = vmatprep.subr.bf16.mxu0 0
    %1578 = vmatpush2.bf16.msra.mxu0 0
    %1579 = vmatprep.subr.bf16.mxu0 0
    %1580 = vmatpush2.bf16.msra.mxu0 0
    %1581 = vmatprep.subr.bf16.mxu0 0
    %1582 = vmatpush2.bf16.msra.mxu0 0
    %1583 = vmatprep.subr.bf16.mxu0 0
    %1584 = vmatpush2.bf16.msra.mxu0 0
    %1585 = vmatprep.subr.bf16.mxu0 0
    %1586 = vmatpush2.bf16.msra.mxu0 0
    %1587 = vmatprep.mubr.bf16.mxu0 0
    %1588 = vmatmul.mubr.bf16.gmra.mxu0 %v1553
    %v1589 = vpop.f32.mrf.mxu0
    %v1590 = vadd.f32 %v1538, %v1589
    %v1591 = vpop.f32.mrf.mxu0
    %v1592 = vpop.f32.mrf.mxu0
    %v1593 = vadd.f32 %v1538, %v1592
    %v1594 = vpop.f32.mrf.mxu0
    %1595 = vdwg.mxu0
    %v1596 = vmul.f32 %v1590, 0.5
    %v1597 = vmul.f32 %v1593, 0.5
    %v1598 = vmul.f32 %v1590, 0.044715
    %v1599 = vmul.f32 %v1593, 0.044715
    %v1600 = vmul.f32 %v1598, %v1590
    %v1601 = vmul.f32 %v1599, %v1593
    %v1602 = vmul.f32 %v1600, %v1590
    %v1603 = vmul.f32 %v1601, %v1593
    %v1604 = vadd.f32 %v1590, %v1602
    %v1605 = vadd.f32 %v1593, %v1603
    %v1606 = vmul.f32 %v1604, 0.7978846
    %v1607 = vmul.f32 %v1605, 0.7978846
    %v1608 = vtanh.pop %v1606
    %v1609 = vtanh.pop %v1607
    %v1610 = vadd.f32 %v1608, 1.0
    %v1611 = vadd.f32 %v1609, 1.0
    %v1612 = vmul.f32 %v1596, %v1610
    %v1613 = vmul.f32 %v1597, %v1611
    %v1614 = vpack.c.bf16 %v1613, %v1612
    %v1615 = vld [vmem:[%s12] sm:$0xf]
    %v1616 = vld [vmem:[%s12 + $0x4] sm:$0xf]
    %v1617 = vld [vmem:[%s12 + $0x8] sm:$0xf]
    %v1618 = vld [vmem:[%s12 + $0xc] sm:$0xf]
    %v1619 = vld [vmem:[%s12 + $0x10] sm:$0xf]
    %v1620 = vld [vmem:[%s12 + $0x14] sm:$0xf]
    %v1621 = vld [vmem:[%s12 + $0x18] sm:$0xf]
    %v1622 = vld [vmem:[%s12 + $0x1c] sm:$0xf]
    %v1623 = vld [vmem:[#allocation19] sm:$0x1]
    %v1625 = vlaneseq
    %v1626 = vshrl.u32 %v1625, 7
    %v1627 = vsub.s32 0, %v1626
    %v1628 = vrot.slane %v1623, %v1627
    %v1638 = vunpack.c.l.b16 %v1615
    %v1639 = vunpack.c.l.b16 %v1616
    %v1640 = vunpack.c.l.b16 %v1617
    %v1641 = vunpack.c.l.b16 %v1618
    %v1642 = vunpack.c.l.b16 %v1619
    %v1643 = vunpack.c.l.b16 %v1620
    %v1644 = vunpack.c.l.b16 %v1621
    %v1645 = vunpack.c.l.b16 %v1622
    %v1646 = vpack.c.b16 %v1639, %v1638
    %v1647 = vpack.c.b16 %v1641, %v1640
    %v1648 = vpack.c.b16 %v1643, %v1642
    %v1649 = vpack.c.b16 %v1645, %v1644
    %vm1654 = vcmask 523264
    %v1656 = vsel %vm1654, %v1614, 0
    %1658 = vmatprep.subr.bf16.mxu0 0
    %1659 = vmatpush1.bf16.msra.mxu0 0
    %1660 = vmatprep.subr.bf16.mxu0 0
    %1661 = vmatpush1.bf16.msra.mxu0 0
    %1662 = vmatprep.subr.bf16.mxu0 0
    %1663 = vmatpush1.bf16.msra.mxu0 0
    %1664 = vmatprep.subr.bf16.mxu0 0
    %1665 = vmatpush1.bf16.msra.mxu0 0
    %1666 = vmatprep.subr.bf16.mxu0 0
    %1667 = vmatpush1.bf16.msra.mxu0 %v1649
    %1668 = vmatprep.subr.bf16.mxu0 0
    %1669 = vmatpush1.bf16.msra.mxu0 %v1648
    %1670 = vmatprep.subr.bf16.mxu0 0
    %1671 = vmatpush1.bf16.msra.mxu0 %v1647
    %1672 = vmatprep.subr.bf16.mxu0 0
    %1673 = vmatpush1.bf16.msra.mxu0 %v1646
    %1674 = vmatprep.subr.bf16.mxu0 0
    %1675 = vmatpush2.bf16.msra.mxu0 0
    %1676 = vmatprep.subr.bf16.mxu0 0
    %1677 = vmatpush2.bf16.msra.mxu0 0
    %1678 = vmatprep.subr.bf16.mxu0 0
    %1679 = vmatpush2.bf16.msra.mxu0 0
    %1680 = vmatprep.subr.bf16.mxu0 0
    %1681 = vmatpush2.bf16.msra.mxu0 0
    %1682 = vmatprep.subr.bf16.mxu0 0
    %1683 = vmatpush2.bf16.msra.mxu0 0
    %1684 = vmatprep.subr.bf16.mxu0 0
    %1685 = vmatpush2.bf16.msra.mxu0 0
    %1686 = vmatprep.subr.bf16.mxu0 0
    %1687 = vmatpush2.bf16.msra.mxu0 0
    %1688 = vmatprep.subr.bf16.mxu0 0
    %1689 = vmatpush2.bf16.msra.mxu0 0
    %1690 = vmatprep.mubr.bf16.mxu0 0
    %1691 = vmatmul.mubr.bf16.gmra.mxu0 %v1656
    %v1692 = vpop.f32.mrf.mxu0
    %v1693 = vadd.f32 %v1628, %v1692
    %v1694 = vpop.f32.mrf.mxu0
    %v1695 = vpop.f32.mrf.mxu0
    %v1696 = vadd.f32 %v1628, %v1695
    %v1697 = vpop.f32.mrf.mxu0
    %1698 = vdwg.mxu0
    %v1699 = vadd.f32 %v1526, %v1693
    %v1700 = vadd.f32 %v1527, %v1696
    %v1701 = vld [vmem:[#allocation20] sm:$0x1]
    %v1702 = vld [vmem:[#allocation22] sm:$0x1]
    %v1703 = vsel %vm257, %v1699, 0.0
    %1704 = vadd.xlane.f32.xlu0 %v1703
    %v1705 = vpop.xlane.xlu0 %1704
    %v1706 = vsel %vm257, %v1700, 0.0
    %1707 = vadd.xlane.f32.xlu0 %v1706
    %v1708 = vpop.xlane.xlu0 %1707
    %v1709 = vmul.f32 %v1705, %v264
    %v1710 = vmul.f32 %v1708, %v264
    %v1711 = vsub.f32 %v1699, %v1709
    %v1712 = vsub.f32 %v1700, %v1710
    %v1713 = vmul.f32 %v1711, %v1711
    %v1714 = vmul.f32 %v1712, %v1712
    %v1715 = vsel %vm257, %v1713, 0.0
    %1716 = vadd.xlane.f32.xlu0 %v1715
    %v1717 = vpop.xlane.xlu0 %1716
    %v1718 = vsel %vm257, %v1714, 0.0
    %1719 = vadd.xlane.f32.xlu0 %v1718
    %v1720 = vpop.xlane.xlu0 %1719
    %v1721 = vmul.f32 %v1717, %v264
    %v1722 = vmul.f32 %v1720, %v264
    %v1723 = vadd.f32 %v1721, 1e-12
    %v1724 = vadd.f32 %v1722, 1e-12
    %v1725 = vrsqrt.pop %v1723
    %v1726 = vrsqrt.pop %v1724
    %v1727 = vmul.f32 %v1711, %v1725
    %v1728 = vmul.f32 %v1712, %v1726
    %v1730 = vlaneseq
    %v1731 = vshrl.u32 %v1730, 7
    %v1732 = vsub.s32 0, %v1731
    %v1733 = vrot.slane %v1701, %v1732
    %v1735 = vmul.f32 %v1727, %v1733
    %v1736 = vmul.f32 %v1728, %v1733
    %v1738 = vlaneseq
    %v1739 = vshrl.u32 %v1738, 7
    %v1740 = vsub.s32 0, %v1739
    %v1741 = vrot.slane %v1702, %v1740
    %v1743 = vadd.f32 %v1735, %v1741
    %v1744 = vadd.f32 %v1736, %v1741
    %v1745 = vpack.c.bf16 %v1744, %v1743
    %s1746 = scalar_lea.vmem %s4, 16
    %v1747 = vld [vmem:[%s1746] sm:$0xf]
    %v1748 = vld [vmem:[%s1746 + $0x4] sm:$0xf]
    %v1749 = vld [vmem:[%s1746 + $0x8] sm:$0xf]
    %v1750 = vld [vmem:[%s1746 + $0xc] sm:$0xf]
    %s1751 = scalar_lea.vmem [#allocation10], 1
    %v1752 = vld [vmem:[%s1751] sm:$0x1]
    %v1754 = vlaneseq
    %v1755 = vshrl.u32 %v1754, 7
    %v1756 = vsub.s32 0, %v1755
    %v1757 = vrot.slane %v1752, %v1756
    %v1763 = vunpack.c.l.b16 %v1747
    %v1764 = vunpack.c.l.b16 %v1748
    %v1765 = vunpack.c.l.b16 %v1749
    %v1766 = vunpack.c.l.b16 %v1750
    %v1767 = vpack.c.b16 %v1764, %v1763
    %v1768 = vpack.c.b16 %v1766, %v1765
    %v1772 = vsel %vm257, %v1745, 0
    %1774 = vmatprep.subr.bf16.mxu0 0
    %1775 = vmatpush1.bf16.msra.mxu0 0
    %1776 = vmatprep.subr.bf16.mxu0 0
    %1777 = vmatpush1.bf16.msra.mxu0 0
    %1778 = vmatprep.subr.bf16.mxu0 0
    %1779 = vmatpush1.bf16.msra.mxu0 0
    %1780 = vmatprep.subr.bf16.mxu0 0
    %1781 = vmatpush1.bf16.msra.mxu0 0
    %1782 = vmatprep.subr.bf16.mxu0 0
    %1783 = vmatpush1.bf16.msra.mxu0 0
    %1784 = vmatprep.subr.bf16.mxu0 0
    %1785 = vmatpush1.bf16.msra.mxu0 0
    %1786 = vmatprep.subr.bf16.mxu0 0
    %1787 = vmatpush1.bf16.msra.mxu0 %v1768
    %1788 = vmatprep.subr.bf16.mxu0 0
    %1789 = vmatpush1.bf16.msra.mxu0 %v1767
    %1790 = vmatprep.subr.bf16.mxu0 0
    %1791 = vmatpush2.bf16.msra.mxu0 0
    %1792 = vmatprep.subr.bf16.mxu0 0
    %1793 = vmatpush2.bf16.msra.mxu0 0
    %1794 = vmatprep.subr.bf16.mxu0 0
    %1795 = vmatpush2.bf16.msra.mxu0 0
    %1796 = vmatprep.subr.bf16.mxu0 0
    %1797 = vmatpush2.bf16.msra.mxu0 0
    %1798 = vmatprep.subr.bf16.mxu0 0
    %1799 = vmatpush2.bf16.msra.mxu0 0
    %1800 = vmatprep.subr.bf16.mxu0 0
    %1801 = vmatpush2.bf16.msra.mxu0 0
    %1802 = vmatprep.subr.bf16.mxu0 0
    %1803 = vmatpush2.bf16.msra.mxu0 0
    %1804 = vmatprep.subr.bf16.mxu0 0
    %1805 = vmatpush2.bf16.msra.mxu0 0
    %1806 = vmatprep.mubr.bf16.mxu0 0
    %1807 = vmatmul.mubr.bf16.gmra.mxu0 %v1772
    %v1808 = vpop.f32.mrf.mxu0
    %v1809 = vadd.f32 %v1757, %v1808
    %v1810 = vpop.f32.mrf.mxu0
    %v1811 = vpop.f32.mrf.mxu0
    %v1812 = vadd.f32 %v1757, %v1811
    %v1813 = vpop.f32.mrf.mxu0
    %1814 = vdwg.mxu0
    %s1815 = scalar_lea.vmem %s6, 32
    %v1816 = vld [vmem:[%s1815] sm:$0xff]
    %v1817 = vld [vmem:[%s1815 + $0x8] sm:$0xff]
    %v1818 = vld [vmem:[%s1815 + $0x10] sm:$0xff]
    %v1819 = vld [vmem:[%s1815 + $0x18] sm:$0xff]
    %v1820 = vpack.c.bf16 %v1812, %v1809
    %v1822 = vunpack.c.l.b16 %v1820
    %v1823 = vunpack.c.h.b16 %v1820
    %v1824 = vpack.c.b16 %v1822, %v1822
    %v1825 = vpack.c.b16 %v1823, %v1823
    %1826 = vrot.lane.b32.xlu0 %v1824, 96
    %v1827 = vpop.permute.xlu0 %1826
    %v1829 = vsel %vm381, %v1824, 0
    %v1832 = vsel %vm381, %v1827, 0
    %1834 = vmatprep.subr.bf16.mxu0 0
    %1835 = vmatpush1.bf16.xpose.msra.mxu0 0
    %1836 = vmatprep.subr.bf16.mxu0 0
    %1837 = vmatpush1.bf16.xpose.msra.mxu0 0
    %1838 = vmatprep.subr.bf16.mxu0 0
    %1839 = vmatpush1.bf16.xpose.msra.mxu0 0
    %1840 = vmatprep.subr.bf16.mxu0 0
    %1841 = vmatpush1.bf16.xpose.msra.mxu0 0
    %1842 = vmatprep.subr.bf16.mxu0 0
    %1843 = vmatpush1.bf16.xpose.msra.mxu0 0
    %1844 = vmatprep.subr.bf16.mxu0 0
    %1845 = vmatpush1.bf16.xpose.msra.mxu0 0
    %1846 = vmatprep.subr.bf16.mxu0 0
    %1847 = vmatpush1.bf16.xpose.msra.mxu0 0
    %1848 = vmatprep.subr.bf16.mxu0 0
    %1849 = vmatpush1.bf16.xpose.msra.mxu0 %v1832
    %1850 = vmatprep.subr.bf16.mxu0 0
    %1851 = vmatpush2.bf16.xpose.msra.mxu0 0
    %1852 = vmatprep.subr.bf16.mxu0 0
    %1853 = vmatpush2.bf16.xpose.msra.mxu0 0
    %1854 = vmatprep.subr.bf16.mxu0 0
    %1855 = vmatpush2.bf16.xpose.msra.mxu0 0
    %1856 = vmatprep.subr.bf16.mxu0 0
    %1857 = vmatpush2.bf16.xpose.msra.mxu0 0
    %1858 = vmatprep.subr.bf16.mxu0 0
    %1859 = vmatpush2.bf16.xpose.msra.mxu0 0
    %1860 = vmatprep.subr.bf16.mxu0 0
    %1861 = vmatpush2.bf16.xpose.msra.mxu0 0
    %1862 = vmatprep.subr.bf16.mxu0 0
    %1863 = vmatpush2.bf16.xpose.msra.mxu0 0
    %1864 = vmatprep.subr.bf16.mxu0 0
    %1865 = vmatpush2.bf16.xpose.msra.mxu0 0
    %1866 = vmatprep.mubr.bf16.mxu0 0
    %1867 = vmatmul.mubr.bf16.gmra.mxu0 %v1829
    %v1868 = vpop.f32.mrf.mxu0
    %v1869 = vadd.f32 0.0, %v1868
    %v1870 = vpop.f32.mrf.mxu0
    %v1871 = vpop.f32.mrf.mxu0
    %v1872 = vpop.f32.mrf.mxu0
    %1873 = vdwg.mxu0
    %1874 = vrot.lane.b32.xlu0 %v1825, 96
    %v1875 = vpop.permute.xlu0 %1874
    %v1877 = vsel %vm381, %v1825, 0
    %v1880 = vsel %vm381, %v1875, 0
    %1882 = vmatprep.subr.bf16.mxu0 0
    %1883 = vmatpush1.bf16.xpose.msra.mxu0 0
    %1884 = vmatprep.subr.bf16.mxu0 0
    %1885 = vmatpush1.bf16.xpose.msra.mxu0 0
    %1886 = vmatprep.subr.bf16.mxu0 0
    %1887 = vmatpush1.bf16.xpose.msra.mxu0 0
    %1888 = vmatprep.subr.bf16.mxu0 0
    %1889 = vmatpush1.bf16.xpose.msra.mxu0 0
    %1890 = vmatprep.subr.bf16.mxu0 0
    %1891 = vmatpush1.bf16.xpose.msra.mxu0 0
    %1892 = vmatprep.subr.bf16.mxu0 0
    %1893 = vmatpush1.bf16.xpose.msra.mxu0 0
    %1894 = vmatprep.subr.bf16.mxu0 0
    %1895 = vmatpush1.bf16.xpose.msra.mxu0 0
    %1896 = vmatprep.subr.bf16.mxu0 0
    %1897 = vmatpush1.bf16.xpose.msra.mxu0 %v1880
    %1898 = vmatprep.subr.bf16.mxu0 0
    %1899 = vmatpush2.bf16.xpose.msra.mxu0 0
    %1900 = vmatprep.subr.bf16.mxu0 0
    %1901 = vmatpush2.bf16.xpose.msra.mxu0 0
    %1902 = vmatprep.subr.bf16.mxu0 0
    %1903 = vmatpush2.bf16.xpose.msra.mxu0 0
    %1904 = vmatprep.subr.bf16.mxu0 0
    %1905 = vmatpush2.bf16.xpose.msra.mxu0 0
    %1906 = vmatprep.subr.bf16.mxu0 0
    %1907 = vmatpush2.bf16.xpose.msra.mxu0 0
    %1908 = vmatprep.subr.bf16.mxu0 0
    %1909 = vmatpush2.bf16.xpose.msra.mxu0 0
    %1910 = vmatprep.subr.bf16.mxu0 0
    %1911 = vmatpush2.bf16.xpose.msra.mxu0 0
    %1912 = vmatprep.subr.bf16.mxu0 0
    %1913 = vmatpush2.bf16.xpose.msra.mxu0 0
    %1914 = vmatprep.mubr.bf16.mxu0 0
    %1915 = vmatmul.mubr.bf16.gmra.mxu0 %v1877
    %v1916 = vpop.f32.mrf.mxu0
    %v1917 = vadd.f32 0.0, %v1916
    %v1918 = vpop.f32.mrf.mxu0
    %v1919 = vpop.f32.mrf.mxu0
    %v1920 = vpop.f32.mrf.mxu0
    %1921 = vdwg.mxu0
    %v1922 = vmul.f32 %v1869, 0.35355338
    %v1923 = vmul.f32 %v1917, 0.35355338
    %v1924 = vadd.f32 %v1922, %v251
    %v1925 = vadd.f32 %v1923, %v252
    %v1926 = vsel %vm381, %v1924, -inf
    %1927 = vmax.xlane.f32.xlu0 %v1926
    %v1928 = vpop.xlane.xlu0 %1927
    %v1929 = vsel %vm381, %v1925, -inf
    %1930 = vmax.xlane.f32.xlu0 %v1929
    %v1931 = vpop.xlane.xlu0 %1930
    %v1932 = vsub.f32 %v1924, %v1928
    %v1933 = vsub.f32 %v1925, %v1931
    %v1934 = vmul.f32 %v1932, 1.442695
    %v1935 = vpow.pop %v1934
    %v1936 = vmul.f32 %v1933, 1.442695
    %v1937 = vpow.pop %v1936
    %v1938 = vsel %vm381, %v1935, 0.0
    %1939 = vadd.xlane.f32.xlu0 %v1938
    %v1940 = vpop.xlane.xlu0 %1939
    %v1941 = vsel %vm381, %v1937, 0.0
    %1942 = vadd.xlane.f32.xlu0 %v1941
    %v1943 = vpop.xlane.xlu0 %1942
    %v1944 = vrcp.pop %v1940
    %v1945 = vrcp.pop %v1943
    %v1946 = vmul.f32 %v1935, %v1944
    %v1947 = vmul.f32 %v1937, %v1945
    %v1948 = vpack.c.bf16 %v1946, %v1946
    %v1949 = vpack.c.bf16 %v1947, %v1947
    %1950 = vrot.lane.b32.xlu0 %v1824, 64
    %v1951 = vpop.permute.xlu0 %1950
    %v1953 = vsel %vm381, %v1948, 0
    %v1956 = vsel %vm509, %v1951, 0
    %1958 = vmatprep.subr.bf16.mxu0 0
    %1959 = vmatpush1.bf16.msra.mxu0 0
    %1960 = vmatprep.subr.bf16.mxu0 0
    %1961 = vmatpush1.bf16.msra.mxu0 0
    %1962 = vmatprep.subr.bf16.mxu0 0
    %1963 = vmatpush1.bf16.msra.mxu0 0
    %1964 = vmatprep.subr.bf16.mxu0 0
    %1965 = vmatpush1.bf16.msra.mxu0 0
    %1966 = vmatprep.subr.bf16.mxu0 0
    %1967 = vmatpush1.bf16.msra.mxu0 0
    %1968 = vmatprep.subr.bf16.mxu0 0
    %1969 = vmatpush1.bf16.msra.mxu0 0
    %1970 = vmatprep.subr.bf16.mxu0 0
    %1971 = vmatpush1.bf16.msra.mxu0 0
    %1972 = vmatprep.subr.bf16.mxu0 0
    %1973 = vmatpush1.bf16.msra.mxu0 %v1956
    %1974 = vmatprep.subr.bf16.mxu0 0
    %1975 = vmatpush2.bf16.msra.mxu0 0
    %1976 = vmatprep.subr.bf16.mxu0 0
    %1977 = vmatpush2.bf16.msra.mxu0 0
    %1978 = vmatprep.subr.bf16.mxu0 0
    %1979 = vmatpush2.bf16.msra.mxu0 0
    %1980 = vmatprep.subr.bf16.mxu0 0
    %1981 = vmatpush2.bf16.msra.mxu0 0
    %1982 = vmatprep.subr.bf16.mxu0 0
    %1983 = vmatpush2.bf16.msra.mxu0 0
    %1984 = vmatprep.subr.bf16.mxu0 0
    %1985 = vmatpush2.bf16.msra.mxu0 0
    %1986 = vmatprep.subr.bf16.mxu0 0
    %1987 = vmatpush2.bf16.msra.mxu0 0
    %1988 = vmatprep.subr.bf16.mxu0 0
    %1989 = vmatpush2.bf16.msra.mxu0 0
    %1990 = vmatprep.mubr.bf16.mxu0 0
    %1991 = vmatmul.mubr.bf16.gmra.mxu0 %v1953
    %v1992 = vpop.f32.mrf.mxu0
    %v1993 = vadd.f32 0.0, %v1992
    %v1994 = vpop.f32.mrf.mxu0
    %v1995 = vpop.f32.mrf.mxu0
    %v1996 = vpop.f32.mrf.mxu0
    %1997 = vdwg.mxu0
    %1998 = vrot.lane.b32.xlu0 %v1825, 64
    %v1999 = vpop.permute.xlu0 %1998
    %v2001 = vsel %vm381, %v1949, 0
    %v2004 = vsel %vm509, %v1999, 0
    %2006 = vmatprep.subr.bf16.mxu0 0
    %2007 = vmatpush1.bf16.msra.mxu0 0
    %2008 = vmatprep.subr.bf16.mxu0 0
    %2009 = vmatpush1.bf16.msra.mxu0 0
    %2010 = vmatprep.subr.bf16.mxu0 0
    %2011 = vmatpush1.bf16.msra.mxu0 0
    %2012 = vmatprep.subr.bf16.mxu0 0
    %2013 = vmatpush1.bf16.msra.mxu0 0
    %2014 = vmatprep.subr.bf16.mxu0 0
    %2015 = vmatpush1.bf16.msra.mxu0 0
    %2016 = vmatprep.subr.bf16.mxu0 0
    %2017 = vmatpush1.bf16.msra.mxu0 0
    %2018 = vmatprep.subr.bf16.mxu0 0
    %2019 = vmatpush1.bf16.msra.mxu0 0
    %2020 = vmatprep.subr.bf16.mxu0 0
    %2021 = vmatpush1.bf16.msra.mxu0 %v2004
    %2022 = vmatprep.subr.bf16.mxu0 0
    %2023 = vmatpush2.bf16.msra.mxu0 0
    %2024 = vmatprep.subr.bf16.mxu0 0
    %2025 = vmatpush2.bf16.msra.mxu0 0
    %2026 = vmatprep.subr.bf16.mxu0 0
    %2027 = vmatpush2.bf16.msra.mxu0 0
    %2028 = vmatprep.subr.bf16.mxu0 0
    %2029 = vmatpush2.bf16.msra.mxu0 0
    %2030 = vmatprep.subr.bf16.mxu0 0
    %2031 = vmatpush2.bf16.msra.mxu0 0
    %2032 = vmatprep.subr.bf16.mxu0 0
    %2033 = vmatpush2.bf16.msra.mxu0 0
    %2034 = vmatprep.subr.bf16.mxu0 0
    %2035 = vmatpush2.bf16.msra.mxu0 0
    %2036 = vmatprep.subr.bf16.mxu0 0
    %2037 = vmatpush2.bf16.msra.mxu0 0
    %2038 = vmatprep.mubr.bf16.mxu0 0
    %2039 = vmatmul.mubr.bf16.gmra.mxu0 %v2001
    %v2040 = vpop.f32.mrf.mxu0
    %v2041 = vadd.f32 0.0, %v2040
    %v2042 = vpop.f32.mrf.mxu0
    %v2043 = vpop.f32.mrf.mxu0
    %v2044 = vpop.f32.mrf.mxu0
    %2045 = vdwg.mxu0
    %v2046 = vpack.c.bf16 %v2041, %v1993
    %v2047 = vpack.c.bf16 %v1816, %v1816
    %2048 = vrot.lane.b32.xlu0 %v1824, 120
    %v2049 = vpop.permute.xlu0 %2048
    %2050 = vrot.lane.b32.xlu0 %v1824, 88
    %v2051 = vpop.permute.xlu0 %2050
    %v2053 = vsel %vm381, %v2049, 0
    %v2056 = vsel %vm381, %v2051, 0
    %2058 = vmatprep.subr.bf16.mxu0 0
    %2059 = vmatpush1.bf16.xpose.msra.mxu0 0
    %2060 = vmatprep.subr.bf16.mxu0 0
    %2061 = vmatpush1.bf16.xpose.msra.mxu0 0
    %2062 = vmatprep.subr.bf16.mxu0 0
    %2063 = vmatpush1.bf16.xpose.msra.mxu0 0
    %2064 = vmatprep.subr.bf16.mxu0 0
    %2065 = vmatpush1.bf16.xpose.msra.mxu0 0
    %2066 = vmatprep.subr.bf16.mxu0 0
    %2067 = vmatpush1.bf16.xpose.msra.mxu0 0
    %2068 = vmatprep.subr.bf16.mxu0 0
    %2069 = vmatpush1.bf16.xpose.msra.mxu0 0
    %2070 = vmatprep.subr.bf16.mxu0 0
    %2071 = vmatpush1.bf16.xpose.msra.mxu0 0
    %2072 = vmatprep.subr.bf16.mxu0 0
    %2073 = vmatpush1.bf16.xpose.msra.mxu0 %v2056
    %2074 = vmatprep.subr.bf16.mxu0 0
    %2075 = vmatpush2.bf16.xpose.msra.mxu0 0
    %2076 = vmatprep.subr.bf16.mxu0 0
    %2077 = vmatpush2.bf16.xpose.msra.mxu0 0
    %2078 = vmatprep.subr.bf16.mxu0 0
    %2079 = vmatpush2.bf16.xpose.msra.mxu0 0
    %2080 = vmatprep.subr.bf16.mxu0 0
    %2081 = vmatpush2.bf16.xpose.msra.mxu0 0
    %2082 = vmatprep.subr.bf16.mxu0 0
    %2083 = vmatpush2.bf16.xpose.msra.mxu0 0
    %2084 = vmatprep.subr.bf16.mxu0 0
    %2085 = vmatpush2.bf16.xpose.msra.mxu0 0
    %2086 = vmatprep.subr.bf16.mxu0 0
    %2087 = vmatpush2.bf16.xpose.msra.mxu0 0
    %2088 = vmatprep.subr.bf16.mxu0 0
    %2089 = vmatpush2.bf16.xpose.msra.mxu0 0
    %2090 = vmatprep.mubr.bf16.mxu0 0
    %2091 = vmatmul.mubr.bf16.gmra.mxu0 %v2053
    %v2092 = vpop.f32.mrf.mxu0
    %v2093 = vadd.f32 0.0, %v2092
    %v2094 = vpop.f32.mrf.mxu0
    %v2095 = vpop.f32.mrf.mxu0
    %v2096 = vpop.f32.mrf.mxu0
    %2097 = vdwg.mxu0
    %2098 = vrot.lane.b32.xlu0 %v1825, 120
    %v2099 = vpop.permute.xlu0 %2098
    %2100 = vrot.lane.b32.xlu0 %v1825, 88
    %v2101 = vpop.permute.xlu0 %2100
    %v2103 = vsel %vm381, %v2099, 0
    %v2106 = vsel %vm381, %v2101, 0
    %2108 = vmatprep.subr.bf16.mxu0 0
    %2109 = vmatpush1.bf16.xpose.msra.mxu0 0
    %2110 = vmatprep.subr.bf16.mxu0 0
    %2111 = vmatpush1.bf16.xpose.msra.mxu0 0
    %2112 = vmatprep.subr.bf16.mxu0 0
    %2113 = vmatpush1.bf16.xpose.msra.mxu0 0
    %2114 = vmatprep.subr.bf16.mxu0 0
    %2115 = vmatpush1.bf16.xpose.msra.mxu0 0
    %2116 = vmatprep.subr.bf16.mxu0 0
    %2117 = vmatpush1.bf16.xpose.msra.mxu0 0
    %2118 = vmatprep.subr.bf16.mxu0 0
    %2119 = vmatpush1.bf16.xpose.msra.mxu0 0
    %2120 = vmatprep.subr.bf16.mxu0 0
    %2121 = vmatpush1.bf16.xpose.msra.mxu0 0
    %2122 = vmatprep.subr.bf16.mxu0 0
    %2123 = vmatpush1.bf16.xpose.msra.mxu0 %v2106
    %2124 = vmatprep.subr.bf16.mxu0 0
    %2125 = vmatpush2.bf16.xpose.msra.mxu0 0
    %2126 = vmatprep.subr.bf16.mxu0 0
    %2127 = vmatpush2.bf16.xpose.msra.mxu0 0
    %2128 = vmatprep.subr.bf16.mxu0 0
    %2129 = vmatpush2.bf16.xpose.msra.mxu0 0
    %2130 = vmatprep.subr.bf16.mxu0 0
    %2131 = vmatpush2.bf16.xpose.msra.mxu0 0
    %2132 = vmatprep.subr.bf16.mxu0 0
    %2133 = vmatpush2.bf16.xpose.msra.mxu0 0
    %2134 = vmatprep.subr.bf16.mxu0 0
    %2135 = vmatpush2.bf16.xpose.msra.mxu0 0
    %2136 = vmatprep.subr.bf16.mxu0 0
    %2137 = vmatpush2.bf16.xpose.msra.mxu0 0
    %2138 = vmatprep.subr.bf16.mxu0 0
    %2139 = vmatpush2.bf16.xpose.msra.mxu0 0
    %2140 = vmatprep.mubr.bf16.mxu0 0
    %2141 = vmatmul.mubr.bf16.gmra.mxu0 %v2103
    %v2142 = vpop.f32.mrf.mxu0
    %v2143 = vadd.f32 0.0, %v2142
    %v2144 = vpop.f32.mrf.mxu0
    %v2145 = vpop.f32.mrf.mxu0
    %v2146 = vpop.f32.mrf.mxu0
    %2147 = vdwg.mxu0
    %v2148 = vmul.f32 %v2093, 0.35355338
    %v2149 = vmul.f32 %v2143, 0.35355338
    %v2150 = vadd.f32 %v2148, %v251
    %v2151 = vadd.f32 %v2149, %v252
    %v2152 = vsel %vm381, %v2150, -inf
    %2153 = vmax.xlane.f32.xlu0 %v2152
    %v2154 = vpop.xlane.xlu0 %2153
    %v2155 = vsel %vm381, %v2151, -inf
    %2156 = vmax.xlane.f32.xlu0 %v2155
    %v2157 = vpop.xlane.xlu0 %2156
    %v2158 = vsub.f32 %v2150, %v2154
    %v2159 = vsub.f32 %v2151, %v2157
    %v2160 = vmul.f32 %v2158, 1.442695
    %v2161 = vpow.pop %v2160
    %v2162 = vmul.f32 %v2159, 1.442695
    %v2163 = vpow.pop %v2162
    %v2164 = vsel %vm381, %v2161, 0.0
    %2165 = vadd.xlane.f32.xlu0 %v2164
    %v2166 = vpop.xlane.xlu0 %2165
    %v2167 = vsel %vm381, %v2163, 0.0
    %2168 = vadd.xlane.f32.xlu0 %v2167
    %v2169 = vpop.xlane.xlu0 %2168
    %v2170 = vrcp.pop %v2166
    %v2171 = vrcp.pop %v2169
    %v2172 = vmul.f32 %v2161, %v2170
    %v2173 = vmul.f32 %v2163, %v2171
    %v2174 = vpack.c.bf16 %v2172, %v2172
    %v2175 = vpack.c.bf16 %v2173, %v2173
    %2176 = vrot.lane.b32.xlu0 %v1824, 56
    %v2177 = vpop.permute.xlu0 %2176
    %v2179 = vsel %vm381, %v2174, 0
    %v2182 = vsel %vm509, %v2177, 0
    %2184 = vmatprep.subr.bf16.mxu0 0
    %2185 = vmatpush1.bf16.msra.mxu0 0
    %2186 = vmatprep.subr.bf16.mxu0 0
    %2187 = vmatpush1.bf16.msra.mxu0 0
    %2188 = vmatprep.subr.bf16.mxu0 0
    %2189 = vmatpush1.bf16.msra.mxu0 0
    %2190 = vmatprep.subr.bf16.mxu0 0
    %2191 = vmatpush1.bf16.msra.mxu0 0
    %2192 = vmatprep.subr.bf16.mxu0 0
    %2193 = vmatpush1.bf16.msra.mxu0 0
    %2194 = vmatprep.subr.bf16.mxu0 0
    %2195 = vmatpush1.bf16.msra.mxu0 0
    %2196 = vmatprep.subr.bf16.mxu0 0
    %2197 = vmatpush1.bf16.msra.mxu0 0
    %2198 = vmatprep.subr.bf16.mxu0 0
    %2199 = vmatpush1.bf16.msra.mxu0 %v2182
    %2200 = vmatprep.subr.bf16.mxu0 0
    %2201 = vmatpush2.bf16.msra.mxu0 0
    %2202 = vmatprep.subr.bf16.mxu0 0
    %2203 = vmatpush2.bf16.msra.mxu0 0
    %2204 = vmatprep.subr.bf16.mxu0 0
    %2205 = vmatpush2.bf16.msra.mxu0 0
    %2206 = vmatprep.subr.bf16.mxu0 0
    %2207 = vmatpush2.bf16.msra.mxu0 0
    %2208 = vmatprep.subr.bf16.mxu0 0
    %2209 = vmatpush2.bf16.msra.mxu0 0
    %2210 = vmatprep.subr.bf16.mxu0 0
    %2211 = vmatpush2.bf16.msra.mxu0 0
    %2212 = vmatprep.subr.bf16.mxu0 0
    %2213 = vmatpush2.bf16.msra.mxu0 0
    %2214 = vmatprep.subr.bf16.mxu0 0
    %2215 = vmatpush2.bf16.msra.mxu0 0
    %2216 = vmatprep.mubr.bf16.mxu0 0
    %2217 = vmatmul.mubr.bf16.gmra.mxu0 %v2179
    %v2218 = vpop.f32.mrf.mxu0
    %v2219 = vadd.f32 0.0, %v2218
    %v2220 = vpop.f32.mrf.mxu0
    %v2221 = vpop.f32.mrf.mxu0
    %v2222 = vpop.f32.mrf.mxu0
    %2223 = vdwg.mxu0
    %2224 = vrot.lane.b32.xlu0 %v1825, 56
    %v2225 = vpop.permute.xlu0 %2224
    %v2227 = vsel %vm381, %v2175, 0
    %v2230 = vsel %vm509, %v2225, 0
    %2232 = vmatprep.subr.bf16.mxu0 0
    %2233 = vmatpush1.bf16.msra.mxu0 0
    %2234 = vmatprep.subr.bf16.mxu0 0
    %2235 = vmatpush1.bf16.msra.mxu0 0
    %2236 = vmatprep.subr.bf16.mxu0 0
    %2237 = vmatpush1.bf16.msra.mxu0 0
    %2238 = vmatprep.subr.bf16.mxu0 0
    %2239 = vmatpush1.bf16.msra.mxu0 0
    %2240 = vmatprep.subr.bf16.mxu0 0
    %2241 = vmatpush1.bf16.msra.mxu0 0
    %2242 = vmatprep.subr.bf16.mxu0 0
    %2243 = vmatpush1.bf16.msra.mxu0 0
    %2244 = vmatprep.subr.bf16.mxu0 0
    %2245 = vmatpush1.bf16.msra.mxu0 0
    %2246 = vmatprep.subr.bf16.mxu0 0
    %2247 = vmatpush1.bf16.msra.mxu0 %v2230
    %2248 = vmatprep.subr.bf16.mxu0 0
    %2249 = vmatpush2.bf16.msra.mxu0 0
    %2250 = vmatprep.subr.bf16.mxu0 0
    %2251 = vmatpush2.bf16.msra.mxu0 0
    %2252 = vmatprep.subr.bf16.mxu0 0
    %2253 = vmatpush2.bf16.msra.mxu0 0
    %2254 = vmatprep.subr.bf16.mxu0 0
    %2255 = vmatpush2.bf16.msra.mxu0 0
    %2256 = vmatprep.subr.bf16.mxu0 0
    %2257 = vmatpush2.bf16.msra.mxu0 0
    %2258 = vmatprep.subr.bf16.mxu0 0
    %2259 = vmatpush2.bf16.msra.mxu0 0
    %2260 = vmatprep.subr.bf16.mxu0 0
    %2261 = vmatpush2.bf16.msra.mxu0 0
    %2262 = vmatprep.subr.bf16.mxu0 0
    %2263 = vmatpush2.bf16.msra.mxu0 0
    %2264 = vmatprep.mubr.bf16.mxu0 0
    %2265 = vmatmul.mubr.bf16.gmra.mxu0 %v2227
    %v2266 = vpop.f32.mrf.mxu0
    %v2267 = vadd.f32 0.0, %v2266
    %v2268 = vpop.f32.mrf.mxu0
    %v2269 = vpop.f32.mrf.mxu0
    %v2270 = vpop.f32.mrf.mxu0
    %2271 = vdwg.mxu0
    %v2272 = vpack.c.bf16 %v2267, %v2219
    %v2273 = vpack.c.bf16 %v1817, %v1817
    %v2275 = vsel %vm381, %v2272, 0
    %v2278 = vsel %vm509, %v2273, 0
    %2280 = vmatprep.subr.bf16.mxu0 0
    %2281 = vmatpush1.bf16.msra.mxu0 0
    %2282 = vmatprep.subr.bf16.mxu0 0
    %2283 = vmatpush1.bf16.msra.mxu0 0
    %2284 = vmatprep.subr.bf16.mxu0 0
    %2285 = vmatpush1.bf16.msra.mxu0 0
    %2286 = vmatprep.subr.bf16.mxu0 0
    %2287 = vmatpush1.bf16.msra.mxu0 0
    %2288 = vmatprep.subr.bf16.mxu0 0
    %2289 = vmatpush1.bf16.msra.mxu0 0
    %2290 = vmatprep.subr.bf16.mxu0 0
    %2291 = vmatpush1.bf16.msra.mxu0 0
    %2292 = vmatprep.subr.bf16.mxu0 0
    %2293 = vmatpush1.bf16.msra.mxu0 0
    %2294 = vmatprep.subr.bf16.mxu0 0
    %2295 = vmatpush1.bf16.msra.mxu0 %v2278
    %2296 = vmatprep.subr.bf16.mxu0 0
    %2297 = vmatpush2.bf16.msra.mxu0 0
    %2298 = vmatprep.subr.bf16.mxu0 0
    %2299 = vmatpush2.bf16.msra.mxu0 0
    %2300 = vmatprep.subr.bf16.mxu0 0
    %2301 = vmatpush2.bf16.msra.mxu0 0
    %2302 = vmatprep.subr.bf16.mxu0 0
    %2303 = vmatpush2.bf16.msra.mxu0 0
    %2304 = vmatprep.subr.bf16.mxu0 0
    %2305 = vmatpush2.bf16.msra.mxu0 0
    %2306 = vmatprep.subr.bf16.mxu0 0
    %2307 = vmatpush2.bf16.msra.mxu0 0
    %2308 = vmatprep.subr.bf16.mxu0 0
    %2309 = vmatpush2.bf16.msra.mxu0 0
    %2310 = vmatprep.subr.bf16.mxu0 0
    %2311 = vmatpush2.bf16.msra.mxu0 0
    %2312 = vmatprep.mubr.bf16.mxu0 0
    %2313 = vmatmul.mubr.bf16.gmra.mxu0 %v2275
    %v2314 = vpop.f32.mrf.mxu0
    %v2315 = vadd.f32 0.0, %v2314
    %v2316 = vpop.f32.mrf.mxu0
    %v2317 = vpop.f32.mrf.mxu0
    %v2318 = vadd.f32 0.0, %v2317
    %v2319 = vpop.f32.mrf.mxu0
    %2320 = vdwg.mxu0
    %v2322 = vsel %vm381, %v2046, 0
    %v2325 = vsel %vm509, %v2047, 0
    %2327 = vmatprep.subr.bf16.mxu0 0
    %2328 = vmatpush1.bf16.msra.mxu0 0
    %2329 = vmatprep.subr.bf16.mxu0 0
    %2330 = vmatpush1.bf16.msra.mxu0 0
    %2331 = vmatprep.subr.bf16.mxu0 0
    %2332 = vmatpush1.bf16.msra.mxu0 0
    %2333 = vmatprep.subr.bf16.mxu0 0
    %2334 = vmatpush1.bf16.msra.mxu0 0
    %2335 = vmatprep.subr.bf16.mxu0 0
    %2336 = vmatpush1.bf16.msra.mxu0 0
    %2337 = vmatprep.subr.bf16.mxu0 0
    %2338 = vmatpush1.bf16.msra.mxu0 0
    %2339 = vmatprep.subr.bf16.mxu0 0
    %2340 = vmatpush1.bf16.msra.mxu0 0
    %2341 = vmatprep.subr.bf16.mxu0 0
    %2342 = vmatpush1.bf16.msra.mxu0 %v2325
    %2343 = vmatprep.subr.bf16.mxu0 0
    %2344 = vmatpush2.bf16.msra.mxu0 0
    %2345 = vmatprep.subr.bf16.mxu0 0
    %2346 = vmatpush2.bf16.msra.mxu0 0
    %2347 = vmatprep.subr.bf16.mxu0 0
    %2348 = vmatpush2.bf16.msra.mxu0 0
    %2349 = vmatprep.subr.bf16.mxu0 0
    %2350 = vmatpush2.bf16.msra.mxu0 0
    %2351 = vmatprep.subr.bf16.mxu0 0
    %2352 = vmatpush2.bf16.msra.mxu0 0
    %2353 = vmatprep.subr.bf16.mxu0 0
    %2354 = vmatpush2.bf16.msra.mxu0 0
    %2355 = vmatprep.subr.bf16.mxu0 0
    %2356 = vmatpush2.bf16.msra.mxu0 0
    %2357 = vmatprep.subr.bf16.mxu0 0
    %2358 = vmatpush2.bf16.msra.mxu0 0
    %2359 = vmatprep.mubr.bf16.mxu0 0
    %2360 = vmatmul.mubr.bf16.gmra.mxu0 %v2322
    %v2361 = vpop.f32.mrf.mxu0
    %v2362 = vadd.f32 %v2315, %v2361
    %v2363 = vpop.f32.mrf.mxu0
    %v2364 = vpop.f32.mrf.mxu0
    %v2365 = vadd.f32 %v2318, %v2364
    %v2366 = vpop.f32.mrf.mxu0
    %2367 = vdwg.mxu0
    %2368 = vrot.lane.b32.xlu0 %v1824, 112
    %v2369 = vpop.permute.xlu0 %2368
    %2370 = vrot.lane.b32.xlu0 %v1824, 80
    %v2371 = vpop.permute.xlu0 %2370
    %v2373 = vsel %vm381, %v2369, 0
    %v2376 = vsel %vm381, %v2371, 0
    %2378 = vmatprep.subr.bf16.mxu0 0
    %2379 = vmatpush1.bf16.xpose.msra.mxu0 0
    %2380 = vmatprep.subr.bf16.mxu0 0
    %2381 = vmatpush1.bf16.xpose.msra.mxu0 0
    %2382 = vmatprep.subr.bf16.mxu0 0
    %2383 = vmatpush1.bf16.xpose.msra.mxu0 0
    %2384 = vmatprep.subr.bf16.mxu0 0
    %2385 = vmatpush1.bf16.xpose.msra.mxu0 0
    %2386 = vmatprep.subr.bf16.mxu0 0
    %2387 = vmatpush1.bf16.xpose.msra.mxu0 0
    %2388 = vmatprep.subr.bf16.mxu0 0
    %2389 = vmatpush1.bf16.xpose.msra.mxu0 0
    %2390 = vmatprep.subr.bf16.mxu0 0
    %2391 = vmatpush1.bf16.xpose.msra.mxu0 0
    %2392 = vmatprep.subr.bf16.mxu0 0
    %2393 = vmatpush1.bf16.xpose.msra.mxu0 %v2376
    %2394 = vmatprep.subr.bf16.mxu0 0
    %2395 = vmatpush2.bf16.xpose.msra.mxu0 0
    %2396 = vmatprep.subr.bf16.mxu0 0
    %2397 = vmatpush2.bf16.xpose.msra.mxu0 0
    %2398 = vmatprep.subr.bf16.mxu0 0
    %2399 = vmatpush2.bf16.xpose.msra.mxu0 0
    %2400 = vmatprep.subr.bf16.mxu0 0
    %2401 = vmatpush2.bf16.xpose.msra.mxu0 0
    %2402 = vmatprep.subr.bf16.mxu0 0
    %2403 = vmatpush2.bf16.xpose.msra.mxu0 0
    %2404 = vmatprep.subr.bf16.mxu0 0
    %2405 = vmatpush2.bf16.xpose.msra.mxu0 0
    %2406 = vmatprep.subr.bf16.mxu0 0
    %2407 = vmatpush2.bf16.xpose.msra.mxu0 0
    %2408 = vmatprep.subr.bf16.mxu0 0
    %2409 = vmatpush2.bf16.xpose.msra.mxu0 0
    %2410 = vmatprep.mubr.bf16.mxu0 0
    %2411 = vmatmul.mubr.bf16.gmra.mxu0 %v2373
    %v2412 = vpop.f32.mrf.mxu0
    %v2413 = vadd.f32 0.0, %v2412
    %v2414 = vpop.f32.mrf.mxu0
    %v2415 = vpop.f32.mrf.mxu0
    %v2416 = vpop.f32.mrf.mxu0
    %2417 = vdwg.mxu0
    %2418 = vrot.lane.b32.xlu0 %v1825, 112
    %v2419 = vpop.permute.xlu0 %2418
    %2420 = vrot.lane.b32.xlu0 %v1825, 80
    %v2421 = vpop.permute.xlu0 %2420
    %v2423 = vsel %vm381, %v2419, 0
    %v2426 = vsel %vm381, %v2421, 0
    %2428 = vmatprep.subr.bf16.mxu0 0
    %2429 = vmatpush1.bf16.xpose.msra.mxu0 0
    %2430 = vmatprep.subr.bf16.mxu0 0
    %2431 = vmatpush1.bf16.xpose.msra.mxu0 0
    %2432 = vmatprep.subr.bf16.mxu0 0
    %2433 = vmatpush1.bf16.xpose.msra.mxu0 0
    %2434 = vmatprep.subr.bf16.mxu0 0
    %2435 = vmatpush1.bf16.xpose.msra.mxu0 0
    %2436 = vmatprep.subr.bf16.mxu0 0
    %2437 = vmatpush1.bf16.xpose.msra.mxu0 0
    %2438 = vmatprep.subr.bf16.mxu0 0
    %2439 = vmatpush1.bf16.xpose.msra.mxu0 0
    %2440 = vmatprep.subr.bf16.mxu0 0
    %2441 = vmatpush1.bf16.xpose.msra.mxu0 0
    %2442 = vmatprep.subr.bf16.mxu0 0
    %2443 = vmatpush1.bf16.xpose.msra.mxu0 %v2426
    %2444 = vmatprep.subr.bf16.mxu0 0
    %2445 = vmatpush2.bf16.xpose.msra.mxu0 0
    %2446 = vmatprep.subr.bf16.mxu0 0
    %2447 = vmatpush2.bf16.xpose.msra.mxu0 0
    %2448 = vmatprep.subr.bf16.mxu0 0
    %2449 = vmatpush2.bf16.xpose.msra.mxu0 0
    %2450 = vmatprep.subr.bf16.mxu0 0
    %2451 = vmatpush2.bf16.xpose.msra.mxu0 0
    %2452 = vmatprep.subr.bf16.mxu0 0
    %2453 = vmatpush2.bf16.xpose.msra.mxu0 0
    %2454 = vmatprep.subr.bf16.mxu0 0
    %2455 = vmatpush2.bf16.xpose.msra.mxu0 0
    %2456 = vmatprep.subr.bf16.mxu0 0
    %2457 = vmatpush2.bf16.xpose.msra.mxu0 0
    %2458 = vmatprep.subr.bf16.mxu0 0
    %2459 = vmatpush2.bf16.xpose.msra.mxu0 0
    %2460 = vmatprep.mubr.bf16.mxu0 0
    %2461 = vmatmul.mubr.bf16.gmra.mxu0 %v2423
    %v2462 = vpop.f32.mrf.mxu0
    %v2463 = vadd.f32 0.0, %v2462
    %v2464 = vpop.f32.mrf.mxu0
    %v2465 = vpop.f32.mrf.mxu0
    %v2466 = vpop.f32.mrf.mxu0
    %2467 = vdwg.mxu0
    %v2468 = vmul.f32 %v2413, 0.35355338
    %v2469 = vmul.f32 %v2463, 0.35355338
    %v2470 = vadd.f32 %v2468, %v251
    %v2471 = vadd.f32 %v2469, %v252
    %v2472 = vsel %vm381, %v2470, -inf
    %2473 = vmax.xlane.f32.xlu0 %v2472
    %v2474 = vpop.xlane.xlu0 %2473
    %v2475 = vsel %vm381, %v2471, -inf
    %2476 = vmax.xlane.f32.xlu0 %v2475
    %v2477 = vpop.xlane.xlu0 %2476
    %v2478 = vsub.f32 %v2470, %v2474
    %v2479 = vsub.f32 %v2471, %v2477
    %v2480 = vmul.f32 %v2478, 1.442695
    %v2481 = vpow.pop %v2480
    %v2482 = vmul.f32 %v2479, 1.442695
    %v2483 = vpow.pop %v2482
    %v2484 = vsel %vm381, %v2481, 0.0
    %2485 = vadd.xlane.f32.xlu0 %v2484
    %v2486 = vpop.xlane.xlu0 %2485
    %v2487 = vsel %vm381, %v2483, 0.0
    %2488 = vadd.xlane.f32.xlu0 %v2487
    %v2489 = vpop.xlane.xlu0 %2488
    %v2490 = vrcp.pop %v2486
    %v2491 = vrcp.pop %v2489
    %v2492 = vmul.f32 %v2481, %v2490
    %v2493 = vmul.f32 %v2483, %v2491
    %v2494 = vpack.c.bf16 %v2492, %v2492
    %v2495 = vpack.c.bf16 %v2493, %v2493
    %2496 = vrot.lane.b32.xlu0 %v1824, 48
    %v2497 = vpop.permute.xlu0 %2496
    %v2499 = vsel %vm381, %v2494, 0
    %v2502 = vsel %vm509, %v2497, 0
    %2504 = vmatprep.subr.bf16.mxu0 0
    %2505 = vmatpush1.bf16.msra.mxu0 0
    %2506 = vmatprep.subr.bf16.mxu0 0
    %2507 = vmatpush1.bf16.msra.mxu0 0
    %2508 = vmatprep.subr.bf16.mxu0 0
    %2509 = vmatpush1.bf16.msra.mxu0 0
    %2510 = vmatprep.subr.bf16.mxu0 0
    %2511 = vmatpush1.bf16.msra.mxu0 0
    %2512 = vmatprep.subr.bf16.mxu0 0
    %2513 = vmatpush1.bf16.msra.mxu0 0
    %2514 = vmatprep.subr.bf16.mxu0 0
    %2515 = vmatpush1.bf16.msra.mxu0 0
    %2516 = vmatprep.subr.bf16.mxu0 0
    %2517 = vmatpush1.bf16.msra.mxu0 0
    %2518 = vmatprep.subr.bf16.mxu0 0
    %2519 = vmatpush1.bf16.msra.mxu0 %v2502
    %2520 = vmatprep.subr.bf16.mxu0 0
    %2521 = vmatpush2.bf16.msra.mxu0 0
    %2522 = vmatprep.subr.bf16.mxu0 0
    %2523 = vmatpush2.bf16.msra.mxu0 0
    %2524 = vmatprep.subr.bf16.mxu0 0
    %2525 = vmatpush2.bf16.msra.mxu0 0
    %2526 = vmatprep.subr.bf16.mxu0 0
    %2527 = vmatpush2.bf16.msra.mxu0 0
    %2528 = vmatprep.subr.bf16.mxu0 0
    %2529 = vmatpush2.bf16.msra.mxu0 0
    %2530 = vmatprep.subr.bf16.mxu0 0
    %2531 = vmatpush2.bf16.msra.mxu0 0
    %2532 = vmatprep.subr.bf16.mxu0 0
    %2533 = vmatpush2.bf16.msra.mxu0 0
    %2534 = vmatprep.subr.bf16.mxu0 0
    %2535 = vmatpush2.bf16.msra.mxu0 0
    %2536 = vmatprep.mubr.bf16.mxu0 0
    %2537 = vmatmul.mubr.bf16.gmra.mxu0 %v2499
    %v2538 = vpop.f32.mrf.mxu0
    %v2539 = vadd.f32 0.0, %v2538
    %v2540 = vpop.f32.mrf.mxu0
    %v2541 = vpop.f32.mrf.mxu0
    %v2542 = vpop.f32.mrf.mxu0
    %2543 = vdwg.mxu0
    %2544 = vrot.lane.b32.xlu0 %v1825, 48
    %v2545 = vpop.permute.xlu0 %2544
    %v2547 = vsel %vm381, %v2495, 0
    %v2550 = vsel %vm509, %v2545, 0
    %2552 = vmatprep.subr.bf16.mxu0 0
    %2553 = vmatpush1.bf16.msra.mxu0 0
    %2554 = vmatprep.subr.bf16.mxu0 0
    %2555 = vmatpush1.bf16.msra.mxu0 0
    %2556 = vmatprep.subr.bf16.mxu0 0
    %2557 = vmatpush1.bf16.msra.mxu0 0
    %2558 = vmatprep.subr.bf16.mxu0 0
    %2559 = vmatpush1.bf16.msra.mxu0 0
    %2560 = vmatprep.subr.bf16.mxu0 0
    %2561 = vmatpush1.bf16.msra.mxu0 0
    %2562 = vmatprep.subr.bf16.mxu0 0
    %2563 = vmatpush1.bf16.msra.mxu0 0
    %2564 = vmatprep.subr.bf16.mxu0 0
    %2565 = vmatpush1.bf16.msra.mxu0 0
    %2566 = vmatprep.subr.bf16.mxu0 0
    %2567 = vmatpush1.bf16.msra.mxu0 %v2550
    %2568 = vmatprep.subr.bf16.mxu0 0
    %2569 = vmatpush2.bf16.msra.mxu0 0
    %2570 = vmatprep.subr.bf16.mxu0 0
    %2571 = vmatpush2.bf16.msra.mxu0 0
    %2572 = vmatprep.subr.bf16.mxu0 0
    %2573 = vmatpush2.bf16.msra.mxu0 0
    %2574 = vmatprep.subr.bf16.mxu0 0
    %2575 = vmatpush2.bf16.msra.mxu0 0
    %2576 = vmatprep.subr.bf16.mxu0 0
    %2577 = vmatpush2.bf16.msra.mxu0 0
    %2578 = vmatprep.subr.bf16.mxu0 0
    %2579 = vmatpush2.bf16.msra.mxu0 0
    %2580 = vmatprep.subr.bf16.mxu0 0
    %2581 = vmatpush2.bf16.msra.mxu0 0
    %2582 = vmatprep.subr.bf16.mxu0 0
    %2583 = vmatpush2.bf16.msra.mxu0 0
    %2584 = vmatprep.mubr.bf16.mxu0 0
    %2585 = vmatmul.mubr.bf16.gmra.mxu0 %v2547
    %v2586 = vpop.f32.mrf.mxu0
    %v2587 = vadd.f32 0.0, %v2586
    %v2588 = vpop.f32.mrf.mxu0
    %v2589 = vpop.f32.mrf.mxu0
    %v2590 = vpop.f32.mrf.mxu0
    %2591 = vdwg.mxu0
    %v2592 = vpack.c.bf16 %v2587, %v2539
    %v2593 = vpack.c.bf16 %v1818, %v1818
    %v2595 = vsel %vm381, %v2592, 0
    %v2598 = vsel %vm509, %v2593, 0
    %2600 = vmatprep.subr.bf16.mxu0 0
    %2601 = vmatpush1.bf16.msra.mxu0 0
    %2602 = vmatprep.subr.bf16.mxu0 0
    %2603 = vmatpush1.bf16.msra.mxu0 0
    %2604 = vmatprep.subr.bf16.mxu0 0
    %2605 = vmatpush1.bf16.msra.mxu0 0
    %2606 = vmatprep.subr.bf16.mxu0 0
    %2607 = vmatpush1.bf16.msra.mxu0 0
    %2608 = vmatprep.subr.bf16.mxu0 0
    %2609 = vmatpush1.bf16.msra.mxu0 0
    %2610 = vmatprep.subr.bf16.mxu0 0
    %2611 = vmatpush1.bf16.msra.mxu0 0
    %2612 = vmatprep.subr.bf16.mxu0 0
    %2613 = vmatpush1.bf16.msra.mxu0 0
    %2614 = vmatprep.subr.bf16.mxu0 0
    %2615 = vmatpush1.bf16.msra.mxu0 %v2598
    %2616 = vmatprep.subr.bf16.mxu0 0
    %2617 = vmatpush2.bf16.msra.mxu0 0
    %2618 = vmatprep.subr.bf16.mxu0 0
    %2619 = vmatpush2.bf16.msra.mxu0 0
    %2620 = vmatprep.subr.bf16.mxu0 0
    %2621 = vmatpush2.bf16.msra.mxu0 0
    %2622 = vmatprep.subr.bf16.mxu0 0
    %2623 = vmatpush2.bf16.msra.mxu0 0
    %2624 = vmatprep.subr.bf16.mxu0 0
    %2625 = vmatpush2.bf16.msra.mxu0 0
    %2626 = vmatprep.subr.bf16.mxu0 0
    %2627 = vmatpush2.bf16.msra.mxu0 0
    %2628 = vmatprep.subr.bf16.mxu0 0
    %2629 = vmatpush2.bf16.msra.mxu0 0
    %2630 = vmatprep.subr.bf16.mxu0 0
    %2631 = vmatpush2.bf16.msra.mxu0 0
    %2632 = vmatprep.mubr.bf16.mxu0 0
    %2633 = vmatmul.mubr.bf16.gmra.mxu0 %v2595
    %v2634 = vpop.f32.mrf.mxu0
    %v2635 = vadd.f32 0.0, %v2634
    %v2636 = vpop.f32.mrf.mxu0
    %v2637 = vpop.f32.mrf.mxu0
    %v2638 = vadd.f32 0.0, %v2637
    %v2639 = vpop.f32.mrf.mxu0
    %2640 = vdwg.mxu0
    %v2641 = vadd.f32 %v2362, %v2635
    %v2642 = vadd.f32 %v2365, %v2638
    %2643 = vrot.lane.b32.xlu0 %v1824, 104
    %v2644 = vpop.permute.xlu0 %2643
    %2645 = vrot.lane.b32.xlu0 %v1824, 72
    %v2646 = vpop.permute.xlu0 %2645
    %v2648 = vsel %vm381, %v2644, 0
    %v2651 = vsel %vm381, %v2646, 0
    %2653 = vmatprep.subr.bf16.mxu0 0
    %2654 = vmatpush1.bf16.xpose.msra.mxu0 0
    %2655 = vmatprep.subr.bf16.mxu0 0
    %2656 = vmatpush1.bf16.xpose.msra.mxu0 0
    %2657 = vmatprep.subr.bf16.mxu0 0
    %2658 = vmatpush1.bf16.xpose.msra.mxu0 0
    %2659 = vmatprep.subr.bf16.mxu0 0
    %2660 = vmatpush1.bf16.xpose.msra.mxu0 0
    %2661 = vmatprep.subr.bf16.mxu0 0
    %2662 = vmatpush1.bf16.xpose.msra.mxu0 0
    %2663 = vmatprep.subr.bf16.mxu0 0
    %2664 = vmatpush1.bf16.xpose.msra.mxu0 0
    %2665 = vmatprep.subr.bf16.mxu0 0
    %2666 = vmatpush1.bf16.xpose.msra.mxu0 0
    %2667 = vmatprep.subr.bf16.mxu0 0
    %2668 = vmatpush1.bf16.xpose.msra.mxu0 %v2651
    %2669 = vmatprep.subr.bf16.mxu0 0
    %2670 = vmatpush2.bf16.xpose.msra.mxu0 0
    %2671 = vmatprep.subr.bf16.mxu0 0
    %2672 = vmatpush2.bf16.xpose.msra.mxu0 0
    %2673 = vmatprep.subr.bf16.mxu0 0
    %2674 = vmatpush2.bf16.xpose.msra.mxu0 0
    %2675 = vmatprep.subr.bf16.mxu0 0
    %2676 = vmatpush2.bf16.xpose.msra.mxu0 0
    %2677 = vmatprep.subr.bf16.mxu0 0
    %2678 = vmatpush2.bf16.xpose.msra.mxu0 0
    %2679 = vmatprep.subr.bf16.mxu0 0
    %2680 = vmatpush2.bf16.xpose.msra.mxu0 0
    %2681 = vmatprep.subr.bf16.mxu0 0
    %2682 = vmatpush2.bf16.xpose.msra.mxu0 0
    %2683 = vmatprep.subr.bf16.mxu0 0
    %2684 = vmatpush2.bf16.xpose.msra.mxu0 0
    %2685 = vmatprep.mubr.bf16.mxu0 0
    %2686 = vmatmul.mubr.bf16.gmra.mxu0 %v2648
    %v2687 = vpop.f32.mrf.mxu0
    %v2688 = vadd.f32 0.0, %v2687
    %v2689 = vpop.f32.mrf.mxu0
    %v2690 = vpop.f32.mrf.mxu0
    %v2691 = vpop.f32.mrf.mxu0
    %2692 = vdwg.mxu0
    %2693 = vrot.lane.b32.xlu0 %v1825, 104
    %v2694 = vpop.permute.xlu0 %2693
    %2695 = vrot.lane.b32.xlu0 %v1825, 72
    %v2696 = vpop.permute.xlu0 %2695
    %v2698 = vsel %vm381, %v2694, 0
    %v2701 = vsel %vm381, %v2696, 0
    %2703 = vmatprep.subr.bf16.mxu0 0
    %2704 = vmatpush1.bf16.xpose.msra.mxu0 0
    %2705 = vmatprep.subr.bf16.mxu0 0
    %2706 = vmatpush1.bf16.xpose.msra.mxu0 0
    %2707 = vmatprep.subr.bf16.mxu0 0
    %2708 = vmatpush1.bf16.xpose.msra.mxu0 0
    %2709 = vmatprep.subr.bf16.mxu0 0
    %2710 = vmatpush1.bf16.xpose.msra.mxu0 0
    %2711 = vmatprep.subr.bf16.mxu0 0
    %2712 = vmatpush1.bf16.xpose.msra.mxu0 0
    %2713 = vmatprep.subr.bf16.mxu0 0
    %2714 = vmatpush1.bf16.xpose.msra.mxu0 0
    %2715 = vmatprep.subr.bf16.mxu0 0
    %2716 = vmatpush1.bf16.xpose.msra.mxu0 0
    %2717 = vmatprep.subr.bf16.mxu0 0
    %2718 = vmatpush1.bf16.xpose.msra.mxu0 %v2701
    %2719 = vmatprep.subr.bf16.mxu0 0
    %2720 = vmatpush2.bf16.xpose.msra.mxu0 0
    %2721 = vmatprep.subr.bf16.mxu0 0
    %2722 = vmatpush2.bf16.xpose.msra.mxu0 0
    %2723 = vmatprep.subr.bf16.mxu0 0
    %2724 = vmatpush2.bf16.xpose.msra.mxu0 0
    %2725 = vmatprep.subr.bf16.mxu0 0
    %2726 = vmatpush2.bf16.xpose.msra.mxu0 0
    %2727 = vmatprep.subr.bf16.mxu0 0
    %2728 = vmatpush2.bf16.xpose.msra.mxu0 0
    %2729 = vmatprep.subr.bf16.mxu0 0
    %2730 = vmatpush2.bf16.xpose.msra.mxu0 0
    %2731 = vmatprep.subr.bf16.mxu0 0
    %2732 = vmatpush2.bf16.xpose.msra.mxu0 0
    %2733 = vmatprep.subr.bf16.mxu0 0
    %2734 = vmatpush2.bf16.xpose.msra.mxu0 0
    %2735 = vmatprep.mubr.bf16.mxu0 0
    %2736 = vmatmul.mubr.bf16.gmra.mxu0 %v2698
    %v2737 = vpop.f32.mrf.mxu0
    %v2738 = vadd.f32 0.0, %v2737
    %v2739 = vpop.f32.mrf.mxu0
    %v2740 = vpop.f32.mrf.mxu0
    %v2741 = vpop.f32.mrf.mxu0
    %2742 = vdwg.mxu0
    %v2743 = vmul.f32 %v2688, 0.35355338
    %v2744 = vmul.f32 %v2738, 0.35355338
    %v2745 = vadd.f32 %v2743, %v251
    %v2746 = vadd.f32 %v2744, %v252
    %v2747 = vsel %vm381, %v2745, -inf
    %2748 = vmax.xlane.f32.xlu0 %v2747
    %v2749 = vpop.xlane.xlu0 %2748
    %v2750 = vsel %vm381, %v2746, -inf
    %2751 = vmax.xlane.f32.xlu0 %v2750
    %v2752 = vpop.xlane.xlu0 %2751
    %v2753 = vsub.f32 %v2745, %v2749
    %v2754 = vsub.f32 %v2746, %v2752
    %v2755 = vmul.f32 %v2753, 1.442695
    %v2756 = vpow.pop %v2755
    %v2757 = vmul.f32 %v2754, 1.442695
    %v2758 = vpow.pop %v2757
    %v2759 = vsel %vm381, %v2756, 0.0
    %2760 = vadd.xlane.f32.xlu0 %v2759
    %v2761 = vpop.xlane.xlu0 %2760
    %v2762 = vsel %vm381, %v2758, 0.0
    %2763 = vadd.xlane.f32.xlu0 %v2762
    %v2764 = vpop.xlane.xlu0 %2763
    %v2765 = vrcp.pop %v2761
    %v2766 = vrcp.pop %v2764
    %v2767 = vmul.f32 %v2756, %v2765
    %v2768 = vmul.f32 %v2758, %v2766
    %v2769 = vpack.c.bf16 %v2767, %v2767
    %v2770 = vpack.c.bf16 %v2768, %v2768
    %2771 = vrot.lane.b32.xlu0 %v1824, 40
    %v2772 = vpop.permute.xlu0 %2771
    %v2774 = vsel %vm381, %v2769, 0
    %v2777 = vsel %vm509, %v2772, 0
    %2779 = vmatprep.subr.bf16.mxu0 0
    %2780 = vmatpush1.bf16.msra.mxu0 0
    %2781 = vmatprep.subr.bf16.mxu0 0
    %2782 = vmatpush1.bf16.msra.mxu0 0
    %2783 = vmatprep.subr.bf16.mxu0 0
    %2784 = vmatpush1.bf16.msra.mxu0 0
    %2785 = vmatprep.subr.bf16.mxu0 0
    %2786 = vmatpush1.bf16.msra.mxu0 0
    %2787 = vmatprep.subr.bf16.mxu0 0
    %2788 = vmatpush1.bf16.msra.mxu0 0
    %2789 = vmatprep.subr.bf16.mxu0 0
    %2790 = vmatpush1.bf16.msra.mxu0 0
    %2791 = vmatprep.subr.bf16.mxu0 0
    %2792 = vmatpush1.bf16.msra.mxu0 0
    %2793 = vmatprep.subr.bf16.mxu0 0
    %2794 = vmatpush1.bf16.msra.mxu0 %v2777
    %2795 = vmatprep.subr.bf16.mxu0 0
    %2796 = vmatpush2.bf16.msra.mxu0 0
    %2797 = vmatprep.subr.bf16.mxu0 0
    %2798 = vmatpush2.bf16.msra.mxu0 0
    %2799 = vmatprep.subr.bf16.mxu0 0
    %2800 = vmatpush2.bf16.msra.mxu0 0
    %2801 = vmatprep.subr.bf16.mxu0 0
    %2802 = vmatpush2.bf16.msra.mxu0 0
    %2803 = vmatprep.subr.bf16.mxu0 0
    %2804 = vmatpush2.bf16.msra.mxu0 0
    %2805 = vmatprep.subr.bf16.mxu0 0
    %2806 = vmatpush2.bf16.msra.mxu0 0
    %2807 = vmatprep.subr.bf16.mxu0 0
    %2808 = vmatpush2.bf16.msra.mxu0 0
    %2809 = vmatprep.subr.bf16.mxu0 0
    %2810 = vmatpush2.bf16.msra.mxu0 0
    %2811 = vmatprep.mubr.bf16.mxu0 0
    %2812 = vmatmul.mubr.bf16.gmra.mxu0 %v2774
    %v2813 = vpop.f32.mrf.mxu0
    %v2814 = vadd.f32 0.0, %v2813
    %v2815 = vpop.f32.mrf.mxu0
    %v2816 = vpop.f32.mrf.mxu0
    %v2817 = vpop.f32.mrf.mxu0
    %2818 = vdwg.mxu0
    %2819 = vrot.lane.b32.xlu0 %v1825, 40
    %v2820 = vpop.permute.xlu0 %2819
    %v2822 = vsel %vm381, %v2770, 0
    %v2825 = vsel %vm509, %v2820, 0
    %2827 = vmatprep.subr.bf16.mxu0 0
    %2828 = vmatpush1.bf16.msra.mxu0 0
    %2829 = vmatprep.subr.bf16.mxu0 0
    %2830 = vmatpush1.bf16.msra.mxu0 0
    %2831 = vmatprep.subr.bf16.mxu0 0
    %2832 = vmatpush1.bf16.msra.mxu0 0
    %2833 = vmatprep.subr.bf16.mxu0 0
    %2834 = vmatpush1.bf16.msra.mxu0 0
    %2835 = vmatprep.subr.bf16.mxu0 0
    %2836 = vmatpush1.bf16.msra.mxu0 0
    %2837 = vmatprep.subr.bf16.mxu0 0
    %2838 = vmatpush1.bf16.msra.mxu0 0
    %2839 = vmatprep.subr.bf16.mxu0 0
    %2840 = vmatpush1.bf16.msra.mxu0 0
    %2841 = vmatprep.subr.bf16.mxu0 0
    %2842 = vmatpush1.bf16.msra.mxu0 %v2825
    %2843 = vmatprep.subr.bf16.mxu0 0
    %2844 = vmatpush2.bf16.msra.mxu0 0
    %2845 = vmatprep.subr.bf16.mxu0 0
    %2846 = vmatpush2.bf16.msra.mxu0 0
    %2847 = vmatprep.subr.bf16.mxu0 0
    %2848 = vmatpush2.bf16.msra.mxu0 0
    %2849 = vmatprep.subr.bf16.mxu0 0
    %2850 = vmatpush2.bf16.msra.mxu0 0
    %2851 = vmatprep.subr.bf16.mxu0 0
    %2852 = vmatpush2.bf16.msra.mxu0 0
    %2853 = vmatprep.subr.bf16.mxu0 0
    %2854 = vmatpush2.bf16.msra.mxu0 0
    %2855 = vmatprep.subr.bf16.mxu0 0
    %2856 = vmatpush2.bf16.msra.mxu0 0
    %2857 = vmatprep.subr.bf16.mxu0 0
    %2858 = vmatpush2.bf16.msra.mxu0 0
    %2859 = vmatprep.mubr.bf16.mxu0 0
    %2860 = vmatmul.mubr.bf16.gmra.mxu0 %v2822
    %v2861 = vpop.f32.mrf.mxu0
    %v2862 = vadd.f32 0.0, %v2861
    %v2863 = vpop.f32.mrf.mxu0
    %v2864 = vpop.f32.mrf.mxu0
    %v2865 = vpop.f32.mrf.mxu0
    %2866 = vdwg.mxu0
    %v2867 = vpack.c.bf16 %v2862, %v2814
    %v2868 = vpack.c.bf16 %v1819, %v1819
    %v2870 = vsel %vm381, %v2867, 0
    %v2873 = vsel %vm509, %v2868, 0
    %2875 = vmatprep.subr.bf16.mxu0 0
    %2876 = vmatpush1.bf16.msra.mxu0 0
    %2877 = vmatprep.subr.bf16.mxu0 0
    %2878 = vmatpush1.bf16.msra.mxu0 0
    %2879 = vmatprep.subr.bf16.mxu0 0
    %2880 = vmatpush1.bf16.msra.mxu0 0
    %2881 = vmatprep.subr.bf16.mxu0 0
    %2882 = vmatpush1.bf16.msra.mxu0 0
    %2883 = vmatprep.subr.bf16.mxu0 0
    %2884 = vmatpush1.bf16.msra.mxu0 0
    %2885 = vmatprep.subr.bf16.mxu0 0
    %2886 = vmatpush1.bf16.msra.mxu0 0
    %2887 = vmatprep.subr.bf16.mxu0 0
    %2888 = vmatpush1.bf16.msra.mxu0 0
    %2889 = vmatprep.subr.bf16.mxu0 0
    %2890 = vmatpush1.bf16.msra.mxu0 %v2873
    %2891 = vmatprep.subr.bf16.mxu0 0
    %2892 = vmatpush2.bf16.msra.mxu0 0
    %2893 = vmatprep.subr.bf16.mxu0 0
    %2894 = vmatpush2.bf16.msra.mxu0 0
    %2895 = vmatprep.subr.bf16.mxu0 0
    %2896 = vmatpush2.bf16.msra.mxu0 0
    %2897 = vmatprep.subr.bf16.mxu0 0
    %2898 = vmatpush2.bf16.msra.mxu0 0
    %2899 = vmatprep.subr.bf16.mxu0 0
    %2900 = vmatpush2.bf16.msra.mxu0 0
    %2901 = vmatprep.subr.bf16.mxu0 0
    %2902 = vmatpush2.bf16.msra.mxu0 0
    %2903 = vmatprep.subr.bf16.mxu0 0
    %2904 = vmatpush2.bf16.msra.mxu0 0
    %2905 = vmatprep.subr.bf16.mxu0 0
    %2906 = vmatpush2.bf16.msra.mxu0 0
    %2907 = vmatprep.mubr.bf16.mxu0 0
    %2908 = vmatmul.mubr.bf16.gmra.mxu0 %v2870
    %v2909 = vpop.f32.mrf.mxu0
    %v2910 = vadd.f32 0.0, %v2909
    %v2911 = vpop.f32.mrf.mxu0
    %v2912 = vpop.f32.mrf.mxu0
    %v2913 = vadd.f32 0.0, %v2912
    %v2914 = vpop.f32.mrf.mxu0
    %2915 = vdwg.mxu0
    %v2916 = vadd.f32 %v2641, %v2910
    %v2917 = vadd.f32 %v2642, %v2913
    %s2918 = scalar_lea.vmem [#allocation11], 1
    %v2919 = vld [vmem:[%s2918] sm:$0x1]
    %v2921 = vlaneseq
    %v2922 = vshrl.u32 %v2921, 7
    %v2923 = vsub.s32 0, %v2922
    %v2924 = vrot.slane %v2919, %v2923
    %v2926 = vadd.f32 %v2916, %v2924
    %v2927 = vadd.f32 %v2917, %v2924
    %v2928 = vadd.f32 %v1743, %v2926
    %v2929 = vadd.f32 %v1744, %v2927
    %s2930 = scalar_lea.vmem [#allocation13], 1
    %v2931 = vld [vmem:[%s2930] sm:$0x1]
    %s2932 = scalar_lea.vmem [#allocation14], 1
    %v2933 = vld [vmem:[%s2932] sm:$0x1]
    %v2934 = vsel %vm257, %v2928, 0.0
    %2935 = vadd.xlane.f32.xlu0 %v2934
    %v2936 = vpop.xlane.xlu0 %2935
    %v2937 = vsel %vm257, %v2929, 0.0
    %2938 = vadd.xlane.f32.xlu0 %v2937
    %v2939 = vpop.xlane.xlu0 %2938
    %v2940 = vmul.f32 %v2936, %v264
    %v2941 = vmul.f32 %v2939, %v264
    %v2942 = vsub.f32 %v2928, %v2940
    %v2943 = vsub.f32 %v2929, %v2941
    %v2944 = vmul.f32 %v2942, %v2942
    %v2945 = vmul.f32 %v2943, %v2943
    %v2946 = vsel %vm257, %v2944, 0.0
    %2947 = vadd.xlane.f32.xlu0 %v2946
    %v2948 = vpop.xlane.xlu0 %2947
    %v2949 = vsel %vm257, %v2945, 0.0
    %2950 = vadd.xlane.f32.xlu0 %v2949
    %v2951 = vpop.xlane.xlu0 %2950
    %v2952 = vmul.f32 %v2948, %v264
    %v2953 = vmul.f32 %v2951, %v264
    %v2954 = vadd.f32 %v2952, 1e-12
    %v2955 = vadd.f32 %v2953, 1e-12
    %v2956 = vrsqrt.pop %v2954
    %v2957 = vrsqrt.pop %v2955
    %v2958 = vmul.f32 %v2942, %v2956
    %v2959 = vmul.f32 %v2943, %v2957
    %v2961 = vlaneseq
    %v2962 = vshrl.u32 %v2961, 7
    %v2963 = vsub.s32 0, %v2962
    %v2964 = vrot.slane %v2931, %v2963
    %v2966 = vmul.f32 %v2958, %v2964
    %v2967 = vmul.f32 %v2959, %v2964
    %v2969 = vlaneseq
    %v2970 = vshrl.u32 %v2969, 7
    %v2971 = vsub.s32 0, %v2970
    %v2972 = vrot.slane %v2933, %v2971
    %v2974 = vadd.f32 %v2966, %v2972
    %v2975 = vadd.f32 %v2967, %v2972
    %v2976 = vpack.c.bf16 %v2975, %v2974
    %s2977 = scalar_lea.vmem [#allocation16], 16
    %v2978 = vld [vmem:[%s2977] sm:$0xf]
    %v2979 = vld [vmem:[%s2977 + $0x4] sm:$0xf]
    %v2980 = vld [vmem:[%s2977 + $0x8] sm:$0xf]
    %v2981 = vld [vmem:[%s2977 + $0xc] sm:$0xf]
    %s2982 = scalar_lea.vmem [#allocation17], 1
    %v2983 = vld [vmem:[%s2982] sm:$0x1]
    %v2985 = vlaneseq
    %v2986 = vshrl.u32 %v2985, 7
    %v2987 = vsub.s32 0, %v2986
    %v2988 = vrot.slane %v2983, %v2987
    %v2994 = vunpack.c.l.b16 %v2978
    %v2995 = vunpack.c.l.b16 %v2979
    %v2996 = vunpack.c.l.b16 %v2980
    %v2997 = vunpack.c.l.b16 %v2981
    %v2998 = vpack.c.b16 %v2995, %v2994
    %v2999 = vpack.c.b16 %v2997, %v2996
    %v3003 = vsel %vm257, %v2976, 0
    %3005 = vmatprep.subr.bf16.mxu0 0
    %3006 = vmatpush1.bf16.msra.mxu0 0
    %3007 = vmatprep.subr.bf16.mxu0 0
    %3008 = vmatpush1.bf16.msra.mxu0 0
    %3009 = vmatprep.subr.bf16.mxu0 0
    %3010 = vmatpush1.bf16.msra.mxu0 0
    %3011 = vmatprep.subr.bf16.mxu0 0
    %3012 = vmatpush1.bf16.msra.mxu0 0
    %3013 = vmatprep.subr.bf16.mxu0 0
    %3014 = vmatpush1.bf16.msra.mxu0 0
    %3015 = vmatprep.subr.bf16.mxu0 0
    %3016 = vmatpush1.bf16.msra.mxu0 0
    %3017 = vmatprep.subr.bf16.mxu0 0
    %3018 = vmatpush1.bf16.msra.mxu0 %v2999
    %3019 = vmatprep.subr.bf16.mxu0 0
    %3020 = vmatpush1.bf16.msra.mxu0 %v2998
    %3021 = vmatprep.subr.bf16.mxu0 0
    %3022 = vmatpush2.bf16.msra.mxu0 0
    %3023 = vmatprep.subr.bf16.mxu0 0
    %3024 = vmatpush2.bf16.msra.mxu0 0
    %3025 = vmatprep.subr.bf16.mxu0 0
    %3026 = vmatpush2.bf16.msra.mxu0 0
    %3027 = vmatprep.subr.bf16.mxu0 0
    %3028 = vmatpush2.bf16.msra.mxu0 0
    %3029 = vmatprep.subr.bf16.mxu0 0
    %3030 = vmatpush2.bf16.msra.mxu0 0
    %3031 = vmatprep.subr.bf16.mxu0 0
    %3032 = vmatpush2.bf16.msra.mxu0 0
    %3033 = vmatprep.subr.bf16.mxu0 0
    %3034 = vmatpush2.bf16.msra.mxu0 0
    %3035 = vmatprep.subr.bf16.mxu0 0
    %3036 = vmatpush2.bf16.msra.mxu0 0
    %3037 = vmatprep.mubr.bf16.mxu0 0
    %3038 = vmatmul.mubr.bf16.gmra.mxu0 %v3003
    %v3039 = vpop.f32.mrf.mxu0
    %v3040 = vadd.f32 %v2988, %v3039
    %v3041 = vpop.f32.mrf.mxu0
    %v3042 = vpop.f32.mrf.mxu0
    %v3043 = vadd.f32 %v2988, %v3042
    %v3044 = vpop.f32.mrf.mxu0
    %3045 = vdwg.mxu0
    %v3046 = vmul.f32 %v3040, 0.5
    %v3047 = vmul.f32 %v3043, 0.5
    %v3048 = vmul.f32 %v3040, 0.044715
    %v3049 = vmul.f32 %v3043, 0.044715
    %v3050 = vmul.f32 %v3048, %v3040
    %v3051 = vmul.f32 %v3049, %v3043
    %v3052 = vmul.f32 %v3050, %v3040
    %v3053 = vmul.f32 %v3051, %v3043
    %v3054 = vadd.f32 %v3040, %v3052
    %v3055 = vadd.f32 %v3043, %v3053
    %v3056 = vmul.f32 %v3054, 0.7978846
    %v3057 = vmul.f32 %v3055, 0.7978846
    %v3058 = vtanh.pop %v3056
    %v3059 = vtanh.pop %v3057
    %v3060 = vadd.f32 %v3058, 1.0
    %v3061 = vadd.f32 %v3059, 1.0
    %v3062 = vmul.f32 %v3046, %v3060
    %v3063 = vmul.f32 %v3047, %v3061
    %v3064 = vpack.c.bf16 %v3063, %v3062
    %s3065 = scalar_lea.vmem %s12, 32
    %v3066 = vld [vmem:[%s3065] sm:$0xf]
    %v3067 = vld [vmem:[%s3065 + $0x4] sm:$0xf]
    %v3068 = vld [vmem:[%s3065 + $0x8] sm:$0xf]
    %v3069 = vld [vmem:[%s3065 + $0xc] sm:$0xf]
    %v3070 = vld [vmem:[%s3065 + $0x10] sm:$0xf]
    %v3071 = vld [vmem:[%s3065 + $0x14] sm:$0xf]
    %v3072 = vld [vmem:[%s3065 + $0x18] sm:$0xf]
    %v3073 = vld [vmem:[%s3065 + $0x1c] sm:$0xf]
    %s3074 = scalar_lea.vmem [#allocation19], 1
    %v3075 = vld [vmem:[%s3074] sm:$0x1]
    %v3077 = vlaneseq
    %v3078 = vshrl.u32 %v3077, 7
    %v3079 = vsub.s32 0, %v3078
    %v3080 = vrot.slane %v3075, %v3079
    %v3090 = vunpack.c.l.b16 %v3066
    %v3091 = vunpack.c.l.b16 %v3067
    %v3092 = vunpack.c.l.b16 %v3068
    %v3093 = vunpack.c.l.b16 %v3069
    %v3094 = vunpack.c.l.b16 %v3070
    %v3095 = vunpack.c.l.b16 %v3071
    %v3096 = vunpack.c.l.b16 %v3072
    %v3097 = vunpack.c.l.b16 %v3073
    %v3098 = vpack.c.b16 %v3091, %v3090
    %v3099 = vpack.c.b16 %v3093, %v3092
    %v3100 = vpack.c.b16 %v3095, %v3094
    %v3101 = vpack.c.b16 %v3097, %v3096
    %v3107 = vsel %vm1654, %v3064, 0
    %3109 = vmatprep.subr.bf16.mxu0 0
    %3110 = vmatpush1.bf16.msra.mxu0 0
    %3111 = vmatprep.subr.bf16.mxu0 0
    %3112 = vmatpush1.bf16.msra.mxu0 0
    %3113 = vmatprep.subr.bf16.mxu0 0
    %3114 = vmatpush1.bf16.msra.mxu0 0
    %3115 = vmatprep.subr.bf16.mxu0 0
    %3116 = vmatpush1.bf16.msra.mxu0 0
    %3117 = vmatprep.subr.bf16.mxu0 0
    %3118 = vmatpush1.bf16.msra.mxu0 %v3101
    %3119 = vmatprep.subr.bf16.mxu0 0
    %3120 = vmatpush1.bf16.msra.mxu0 %v3100
    %3121 = vmatprep.subr.bf16.mxu0 0
    %3122 = vmatpush1.bf16.msra.mxu0 %v3099
    %3123 = vmatprep.subr.bf16.mxu0 0
    %3124 = vmatpush1.bf16.msra.mxu0 %v3098
    %3125 = vmatprep.subr.bf16.mxu0 0
    %3126 = vmatpush2.bf16.msra.mxu0 0
    %3127 = vmatprep.subr.bf16.mxu0 0
    %3128 = vmatpush2.bf16.msra.mxu0 0
    %3129 = vmatprep.subr.bf16.mxu0 0
    %3130 = vmatpush2.bf16.msra.mxu0 0
    %3131 = vmatprep.subr.bf16.mxu0 0
    %3132 = vmatpush2.bf16.msra.mxu0 0
    %3133 = vmatprep.subr.bf16.mxu0 0
    %3134 = vmatpush2.bf16.msra.mxu0 0
    %3135 = vmatprep.subr.bf16.mxu0 0
    %3136 = vmatpush2.bf16.msra.mxu0 0
    %3137 = vmatprep.subr.bf16.mxu0 0
    %3138 = vmatpush2.bf16.msra.mxu0 0
    %3139 = vmatprep.subr.bf16.mxu0 0
    %3140 = vmatpush2.bf16.msra.mxu0 0
    %3141 = vmatprep.mubr.bf16.mxu0 0
    %3142 = vmatmul.mubr.bf16.gmra.mxu0 %v3107
    %v3143 = vpop.f32.mrf.mxu0
    %v3144 = vadd.f32 %v3080, %v3143
    %v3145 = vpop.f32.mrf.mxu0
    %v3146 = vpop.f32.mrf.mxu0
    %v3147 = vadd.f32 %v3080, %v3146
    %v3148 = vpop.f32.mrf.mxu0
    %3149 = vdwg.mxu0
    %v3150 = vadd.f32 %v2974, %v3144
    %v3151 = vadd.f32 %v2975, %v3147
    %s3152 = scalar_lea.vmem [#allocation20], 1
    %v3153 = vld [vmem:[%s3152] sm:$0x1]
    %s3154 = scalar_lea.vmem [#allocation22], 1
    %v3155 = vld [vmem:[%s3154] sm:$0x1]
    %v3156 = vsel %vm257, %v3150, 0.0
    %3157 = vadd.xlane.f32.xlu0 %v3156
    %v3158 = vpop.xlane.xlu0 %3157
    %v3159 = vsel %vm257, %v3151, 0.0
    %3160 = vadd.xlane.f32.xlu0 %v3159
    %v3161 = vpop.xlane.xlu0 %3160
    %v3162 = vmul.f32 %v3158, %v264
    %v3163 = vmul.f32 %v3161, %v264
    %v3164 = vsub.f32 %v3150, %v3162
    %v3165 = vsub.f32 %v3151, %v3163
    %v3166 = vmul.f32 %v3164, %v3164
    %v3167 = vmul.f32 %v3165, %v3165
    %v3168 = vsel %vm257, %v3166, 0.0
    %3169 = vadd.xlane.f32.xlu0 %v3168
    %v3170 = vpop.xlane.xlu0 %3169
    %v3171 = vsel %vm257, %v3167, 0.0
    %3172 = vadd.xlane.f32.xlu0 %v3171
    %v3173 = vpop.xlane.xlu0 %3172
    %v3174 = vmul.f32 %v3170, %v264
    %v3175 = vmul.f32 %v3173, %v264
    %v3176 = vadd.f32 %v3174, 1e-12
    %v3177 = vadd.f32 %v3175, 1e-12
    %v3178 = vrsqrt.pop %v3176
    %v3179 = vrsqrt.pop %v3177
    %v3180 = vmul.f32 %v3164, %v3178
    %v3181 = vmul.f32 %v3165, %v3179
    %v3183 = vlaneseq
    %v3184 = vshrl.u32 %v3183, 7
    %v3185 = vsub.s32 0, %v3184
    %v3186 = vrot.slane %v3153, %v3185
    %v3188 = vmul.f32 %v3180, %v3186
    %v3189 = vmul.f32 %v3181, %v3186
    %v3191 = vlaneseq
    %v3192 = vshrl.u32 %v3191, 7
    %v3193 = vsub.s32 0, %v3192
    %v3194 = vrot.slane %v3155, %v3193
    %v3196 = vadd.f32 %v3188, %v3194
    %v3197 = vadd.f32 %v3189, %v3194
    %v3198 = vpack.c.bf16 %v3197, %v3196
    %v3199 = vld [vmem:[%s16] sm:$0xf]
    %v3200 = vld [vmem:[%s16 + $0x4] sm:$0xf]
    %v3201 = vld [vmem:[%s16 + $0x8] sm:$0xf]
    %v3202 = vld [vmem:[%s16 + $0xc] sm:$0xf]
    %v3203 = vld [vmem:[#allocation23] sm:$0x1]
    %v3205 = vlaneseq
    %v3206 = vshrl.u32 %v3205, 7
    %v3207 = vsub.s32 0, %v3206
    %v3208 = vrot.slane %v3203, %v3207
    %v3214 = vunpack.c.l.b16 %v3199
    %v3215 = vunpack.c.l.b16 %v3200
    %v3216 = vunpack.c.l.b16 %v3201
    %v3217 = vunpack.c.l.b16 %v3202
    %v3218 = vpack.c.b16 %v3215, %v3214
    %v3219 = vpack.c.b16 %v3217, %v3216
    %v3223 = vsel %vm257, %v3198, 0
    %3225 = vmatprep.subr.bf16.mxu0 0
    %3226 = vmatpush1.bf16.msra.mxu0 0
    %3227 = vmatprep.subr.bf16.mxu0 0
    %3228 = vmatpush1.bf16.msra.mxu0 0
    %3229 = vmatprep.subr.bf16.mxu0 0
    %3230 = vmatpush1.bf16.msra.mxu0 0
    %3231 = vmatprep.subr.bf16.mxu0 0
    %3232 = vmatpush1.bf16.msra.mxu0 0
    %3233 = vmatprep.subr.bf16.mxu0 0
    %3234 = vmatpush1.bf16.msra.mxu0 0
    %3235 = vmatprep.subr.bf16.mxu0 0
    %3236 = vmatpush1.bf16.msra.mxu0 0
    %3237 = vmatprep.subr.bf16.mxu0 0
    %3238 = vmatpush1.bf16.msra.mxu0 %v3219
    %3239 = vmatprep.subr.bf16.mxu0 0
    %3240 = vmatpush1.bf16.msra.mxu0 %v3218
    %3241 = vmatprep.subr.bf16.mxu0 0
    %3242 = vmatpush2.bf16.msra.mxu0 0
    %3243 = vmatprep.subr.bf16.mxu0 0
    %3244 = vmatpush2.bf16.msra.mxu0 0
    %3245 = vmatprep.subr.bf16.mxu0 0
    %3246 = vmatpush2.bf16.msra.mxu0 0
    %3247 = vmatprep.subr.bf16.mxu0 0
    %3248 = vmatpush2.bf16.msra.mxu0 0
    %3249 = vmatprep.subr.bf16.mxu0 0
    %3250 = vmatpush2.bf16.msra.mxu0 0
    %3251 = vmatprep.subr.bf16.mxu0 0
    %3252 = vmatpush2.bf16.msra.mxu0 0
    %3253 = vmatprep.subr.bf16.mxu0 0
    %3254 = vmatpush2.bf16.msra.mxu0 0
    %3255 = vmatprep.subr.bf16.mxu0 0
    %3256 = vmatpush2.bf16.msra.mxu0 0
    %3257 = vmatprep.mubr.bf16.mxu0 0
    %3258 = vmatmul.mubr.bf16.gmra.mxu0 %v3223
    %v3259 = vpop.f32.mrf.mxu0
    %v3260 = vadd.f32 %v3208, %v3259
    %v3261 = vpop.f32.mrf.mxu0
    %v3262 = vpop.f32.mrf.mxu0
    %v3263 = vadd.f32 %v3208, %v3262
    %v3264 = vpop.f32.mrf.mxu0
    %3265 = vdwg.mxu0
    %v3266 = vtanh.pop %v3260
    %v3267 = vtanh.pop %v3263
    %v3268 = vpack.c.bf16 %v3267, %v3266
    %v3269 = vld [vmem:[%s18] sm:$0xf]
    %v3270 = vld [vmem:[%s18 + $0x4] sm:$0xf]
    %v3271 = vld [vmem:[%s18 + $0x8] sm:$0xf]
    %v3272 = vld [vmem:[%s18 + $0xc] sm:$0xf]
    %v3273 = vld [vmem:[%s19] sm:$0x1]
    %v3275 = vlaneseq
    %v3276 = vshrl.u32 %v3275, 7
    %v3277 = vsub.s32 0, %v3276
    %v3278 = vrot.slane %v3273, %v3277
    %v3284 = vunpack.c.l.b16 %v3269
    %v3285 = vunpack.c.l.b16 %v3270
    %v3286 = vunpack.c.l.b16 %v3271
    %v3287 = vunpack.c.l.b16 %v3272
    %v3288 = vpack.c.b16 %v3285, %v3284
    %v3289 = vpack.c.b16 %v3287, %v3286
    %v3293 = vsel %vm257, %v3268, 0
    %3295 = vmatprep.subr.bf16.mxu0 0
    %3296 = vmatpush1.bf16.msra.mxu0 0
    %3297 = vmatprep.subr.bf16.mxu0 0
    %3298 = vmatpush1.bf16.msra.mxu0 0
    %3299 = vmatprep.subr.bf16.mxu0 0
    %3300 = vmatpush1.bf16.msra.mxu0 0
    %3301 = vmatprep.subr.bf16.mxu0 0
    %3302 = vmatpush1.bf16.msra.mxu0 0
    %3303 = vmatprep.subr.bf16.mxu0 0
    %3304 = vmatpush1.bf16.msra.mxu0 0
    %3305 = vmatprep.subr.bf16.mxu0 0
    %3306 = vmatpush1.bf16.msra.mxu0 0
    %3307 = vmatprep.subr.bf16.mxu0 0
    %3308 = vmatpush1.bf16.msra.mxu0 %v3289
    %3309 = vmatprep.subr.bf16.mxu0 0
    %3310 = vmatpush1.bf16.msra.mxu0 %v3288
    %3311 = vmatprep.subr.bf16.mxu0 0
    %3312 = vmatpush2.bf16.msra.mxu0 0
    %3313 = vmatprep.subr.bf16.mxu0 0
    %3314 = vmatpush2.bf16.msra.mxu0 0
    %3315 = vmatprep.subr.bf16.mxu0 0
    %3316 = vmatpush2.bf16.msra.mxu0 0
    %3317 = vmatprep.subr.bf16.mxu0 0
    %3318 = vmatpush2.bf16.msra.mxu0 0
    %3319 = vmatprep.subr.bf16.mxu0 0
    %3320 = vmatpush2.bf16.msra.mxu0 0
    %3321 = vmatprep.subr.bf16.mxu0 0
    %3322 = vmatpush2.bf16.msra.mxu0 0
    %3323 = vmatprep.subr.bf16.mxu0 0
    %3324 = vmatpush2.bf16.msra.mxu0 0
    %3325 = vmatprep.subr.bf16.mxu0 0
    %3326 = vmatpush2.bf16.msra.mxu0 0
    %3327 = vmatprep.mubr.bf16.mxu0 0
    %3328 = vmatmul.mubr.bf16.gmra.mxu0 %v3293
    %v3329 = vpop.f32.mrf.mxu0
    %v3330 = vadd.f32 %v3278, %v3329
    %v3331 = vpop.f32.mrf.mxu0
    %v3332 = vpop.f32.mrf.mxu0
    %v3333 = vadd.f32 %v3278, %v3332
    %v3334 = vpop.f32.mrf.mxu0
    %3335 = vdwg.mxu0
    %3336 = vst [vmem:[#allocation25] sm:$0xff] %v3330
    %3337 = vst [vmem:[#allocation25 + $0x8] sm:$0xff] %v3333
    // Predicated region
    $region138: #{tpu_custom_call.1} parent=1 // pred_check
      _
    $region139: #{tpu_custom_call.1} parent=1 // pred_check_branch
      %3339 = sbr.rel (0) target = $region141
    $region140: #{tpu_custom_call.1} parent=1 // pred_region
      %s3341 = ssub.s32 256, 256
      %3342 = vsyncadd [#allocation4], %s3341
      %s3343 = sshll.u32 [#allocation25], 4
      %s3344 = int_to_ptr.vmem [resolvable:$true] %s3343
      %3349 = dma.vmem_to_hbm [thread:$0]  %s3344, 256, %s20, [#allocation4], 128, 128, 8
    $region141: #{tpu_custom_call.1} parent=1 // pred_fallthru
      _
    // Predicated region
    $region142: #{tpu_custom_call.1} parent=1 // pred_check
      _
    $region143: #{tpu_custom_call.1} parent=1 // pred_check_branch
      %3351 = sbr.rel (0) target = $region145
    $region144: #{tpu_custom_call.1} parent=1 // pred_region
      %3352 = dma.done [#allocation4], 256
    $region145: #{tpu_custom_call.1} parent=1 // pred_fallthru
      _
    %3353 = vsyncpa [#allocation3], 1
    %3354 = vsyncpa [#allocation6], 1
    %3355 = vsyncpa [#allocation9], 1
    %3356 = vsyncpa [#allocation12], 1
    %3357 = vsyncpa [#allocation15], 1
    %3358 = vsyncpa [#allocation18], 1
    %3359 = vsyncpa [#allocation21], 1
    %3360 = vsyncpa [#allocation24], 1
    %3361 = vsyncpa [#allocation4], 1

</llo_original>
